<compile_context>
chip_gen: v5e
topology: v5e:2x2
jax: 0.10.0
libtpu: 0.0.40
codegen_flags: <defaults>
</compile_context>

<pallas_src>
import functools

import jax
import jax.numpy as jnp
import numpy as np
from jax.experimental import pallas as pl
from jax.experimental.pallas import tpu as pltpu

_EPS = 1e-5
_PRECISE_MATMUL = True   # True: bf16x3 (~f32 accurate). False: single bf16 pass (fastest).


# ---------------------------------- kernel ------------------------------------ #

def _resblock_kernel(x_ref, t1a_ref, t1b_ref, t2a_ref, t2b_ref, o_ref, *, Bb, H):
    M = Bb * H                                    # fused matmul M dimension

    def shift_down(t):
        # out[h] = t[h-1] within each sample; zero at each sample's first row.
        rows = jax.lax.broadcasted_iota(jnp.int32, t.shape, 0)
        return jnp.where(rows % H == 0, 0.0, pltpu.roll(t, 1, axis=0))

    def shift_up(t):
        # out[h] = t[h+1] within each sample; zero at each sample's last row.
        rows = jax.lax.broadcasted_iota(jnp.int32, t.shape, 0)
        return jnp.where(rows % H == H - 1, 0.0, pltpu.roll(t, M - 1, axis=0))

    def conv3x3(t, w_ref):
        # t: (M, W*Cin) f32.  w_ref: (6, W*Cin, W*Cout) bf16 halo-stripped Toeplitz
        # taps (rows 0..2 = hi parts, rows 3..5 = lo parts of the f32 weights).
        t_hi = t.astype(jnp.bfloat16)
        t_lo = ((t - t_hi.astype(jnp.float32)).astype(jnp.bfloat16)
                if _PRECISE_MATMUL else None)

        def tap(dh):
            w_hi = w_ref[dh]
            y = jnp.dot(t_hi, w_hi, preferred_element_type=jnp.float32)
            if _PRECISE_MATMUL:               # bf16x3 == Precision.HIGH, f32 accumulate
                y += jnp.dot(t_hi, w_ref[3 + dh], preferred_element_type=jnp.float32)
                y += jnp.dot(t_lo, w_hi, preferred_element_type=jnp.float32)
            return y

        # out[h] = tap0[h-1] + tap1[h] + tap2[h+1]  (vertical taps via XLU rolls)
        return shift_down(tap(0)) + tap(1) + shift_up(tap(2))

    def groupnorm(t):
        # GroupNorm(num_groups=1, affine=False); statistics per fused sample.
        # One-pass statistics: var = E[x^2] - E[x]^2 (halves the reductions).
        inv_n = 1.0 / (H * t.shape[-1])
        parts = []
        for b in range(Bb):                   # static unroll, Bb is small
            tb = t[b * H:(b + 1) * H, :]
            mean = jnp.sum(tb) * inv_n
            var = jnp.sum(tb * tb) * inv_n - mean * mean
            parts.append((tb - mean) * jax.lax.rsqrt(var + _EPS))
        return jnp.concatenate(parts, axis=0) if Bb > 1 else parts[0]

    x = x_ref[...].astype(jnp.float32).reshape(M, -1)            # (M, W*C)

    for ta_ref, tb_ref in ((t1a_ref, t1b_ref), (t2a_ref, t2b_ref)):
        h = conv3x3(x, ta_ref)                                   # (M, W*4C)
        h = groupnorm(h)
        h = h * jax.nn.sigmoid(h)                                # SiLU, f32 on VPU/EUP
        h = conv3x3(h, tb_ref)                                   # (M, W*C)
        x = groupnorm(x + h)                                     # residual + GroupNorm

    o_ref[...] = x.reshape(o_ref.shape).astype(o_ref.dtype)


# --------------------------------- host glue ----------------------------------- #

def _toeplitz_weights(wt, W):
    """3x3 conv weights (3, 3, Cin, Cout) -> halo-stripped Toeplitz tap matrices.

    Returns (6, W*Cin, W*Cout) bf16: rows 0..2 are the bf16 'hi' parts of the three
    vertical taps, rows 3..5 the 'lo' residuals (hi + lo ~= f32 weight). The zero
    width-padding columns are stripped from K (they only ever multiply zeros), so the
    kernel matmuls un-padded activations directly (valid for zero padding only).
    """
    wt = np.asarray(wt, np.float32)
    Cin, Cout = wt.shape[2], wt.shape[3]
    t = np.zeros((3, W * Cin, W * Cout), np.float32)
    for dh in range(3):
        for w in range(W):
            for dw in range(3):
                wi = w + dw - 1
                if 0 <= wi < W:                        # zero-padding column -> dropped
                    t[dh, wi * Cin:(wi + 1) * Cin, w * Cout:(w + 1) * Cout] = wt[dh, dw]
    tj = jnp.asarray(t)
    hi = tj.astype(jnp.bfloat16)
    lo = (tj - hi.astype(jnp.float32)).astype(jnp.bfloat16)
    return jnp.concatenate([hi, lo], axis=0)           # (6, W*Cin, W*Cout) bf16


def _choose_batch_block(B, H, target_rows=256):
    """Fuse batch elements into the matmul M dim (aim for ~one MXU pass of rows)."""
    bb = max(1, min(B, max(1, target_rows // max(H, 1))))
    while B % bb:
        bb -= 1
    return bb


def resblock_forward(x_nchw, weights):
    """x_nchw: (B, C, H, W) float32; weights: 4 arrays (3, 3, Cin, Cout) (HWIO)."""
    B, C, H, W = x_nchw.shape
    w1a, w1b, w2a, w2b = weights
    t1a = _toeplitz_weights(w1a, W)     # (6, W*C,  W*4C)
    t1b = _toeplitz_weights(w1b, W)     # (6, W*4C, W*C)
    t2a = _toeplitz_weights(w2a, W)
    t2b = _toeplitz_weights(w2b, W)

    # NCHW -> NHWC -> (B, H, W*C): lanes hold W*C, sublanes hold H (fused with batch).
    x = jnp.transpose(x_nchw, (0, 2, 3, 1)).reshape(B, H, W * C)

    Bb = _choose_batch_block(B, H)
    grid = (B // Bb,)
    kernel = functools.partial(_resblock_kernel, Bb=Bb, H=H)

    out = pl.pallas_call(
        kernel,
        out_shape=jax.ShapeDtypeStruct((B, H, W * C), x.dtype),
        grid_spec=pltpu.PrefetchScalarGridSpec(
            num_scalar_prefetch=0,
            grid=grid,
            in_specs=[
                pl.BlockSpec((Bb, H, W * C), lambda b: (b, 0, 0)),
                pl.BlockSpec(t1a.shape, lambda b: (0, 0, 0)),   # grid-invariant weights
                pl.BlockSpec(t1b.shape, lambda b: (0, 0, 0)),
                pl.BlockSpec(t2a.shape, lambda b: (0, 0, 0)),
                pl.BlockSpec(t2b.shape, lambda b: (0, 0, 0)),
            ],
            out_specs=pl.BlockSpec((Bb, H, W * C), lambda b: (b, 0, 0)),
        ),
        compiler_params=pltpu.CompilerParams(
            dimension_semantics=("parallel",),
            vmem_limit_bytes=32 * 1024 * 1024),
    )(x, t1a, t1b, t2a, t2b)

    # (B, H, W*C) -> NHWC -> NCHW
    return out.reshape(B, H, W, C).transpose(0, 3, 1, 2)


# ------------------------------- JAX reference ---------------------------------- #

def _ref_forward(x_nchw, weights):
    def conv(x, w):
        return jax.lax.conv_general_dilated(
            x, w, (1, 1), ((1, 1), (1, 1)),
            dimension_numbers=("NCHW", "HWIO", "NCHW"),
            precision=jax.lax.Precision.HIGHEST)

    def gn(t, eps=_EPS):
        mean = jnp.mean(t, axis=(1, 2, 3), keepdims=True)
        var = jnp.mean((t - mean) ** 2, axis=(1, 2, 3), keepdims=True)
        return (t - mean) / jnp.sqrt(var + eps)

    x = x_nchw
    w1a, w1b, w2a, w2b = weights
    for wa, wb in ((w1a, w1b), (w2a, w2b)):
        h = conv(x, wa)
        h = gn(h)
        h = h * jax.nn.sigmoid(h)
        h = conv(h, wb)
        x = gn(x + h)
    return x


# ------------------------------------ main -------------------------------------- #

if __name__ == "__main__":
    B, C, H, W = 2, 4, 16, 16
    C4 = 4 * C

    key = jax.random.PRNGKey(0)
    kx, k1, k2, k3, k4 = jax.random.split(key, 5)
    x = jax.random.normal(kx, (B, C, H, W), jnp.float32)

    # Conv weights in (kh, kw, Cin, Cout) layout, bias=False (matches the module:
    # Conv2d(..., bias=False), GroupNorm(1, ..., affine=False)).
    def init_w(k, cin, cout):
        scale = 1.0 / np.sqrt(9 * cin)
        return scale * jax.random.normal(k, (3, 3, cin, cout), jnp.float32)

    weights = (
        init_w(k1, C, C4),    # block 0, conv1
        init_w(k2, C4, C),    # block 0, conv2
        init_w(k3, C, C4),    # block 1, conv1
        init_w(k4, C4, C),    # block 1, conv2
    )

    out = jax.block_until_ready(resblock_forward(x, weights))
    ref = jax.block_until_ready(_ref_forward(x, weights))

    tol = 1e-3 if _PRECISE_MATMUL else 2e-2   # bf16x3 vs single-pass bf16 MXU error
    np.testing.assert_allclose(np.asarray(out), np.asarray(ref), rtol=tol, atol=tol)

    print("KERNEL_OK")
</pallas_src>

<mosaic_0001>
module attributes {stable_mosaic.version = 11 : i64} {
  func.func @_resblock_kernel(%arg0: i32, %arg1: memref<2x16x64xf32, #tpu.memory_space<vmem>>, %arg2: memref<6x64x256xbf16, #tpu.memory_space<vmem>>, %arg3: memref<6x256x64xbf16, #tpu.memory_space<vmem>>, %arg4: memref<6x64x256xbf16, #tpu.memory_space<vmem>>, %arg5: memref<6x256x64xbf16, #tpu.memory_space<vmem>>, %arg6: memref<2x16x64xf32, #tpu.memory_space<vmem>>) attributes {dimension_semantics = [#tpu.dimension_semantics<parallel>], iteration_bounds = array<i64: 1>, scalar_prefetch = 0 : i64, scratch_operands = 0 : i64, tpu.core_type = #tpu.core_type<tc>, window_params = [{transform_indices = @transform_0, window_bounds = array<i64: 2, 16, 64>}, {pipeline_mode = #tpu.pipeline_mode<synchronous>, transform_indices = @transform_1, window_bounds = array<i64: 6, 64, 256>}, {pipeline_mode = #tpu.pipeline_mode<synchronous>, transform_indices = @transform_2, window_bounds = array<i64: 6, 256, 64>}, {pipeline_mode = #tpu.pipeline_mode<synchronous>, transform_indices = @transform_3, window_bounds = array<i64: 6, 64, 256>}, {pipeline_mode = #tpu.pipeline_mode<synchronous>, transform_indices = @transform_4, window_bounds = array<i64: 6, 256, 64>}, {transform_indices = @transform_5, window_bounds = array<i64: 2, 16, 64>}]} {
    %c0 = arith.constant 0 : index
    %c0_0 = arith.constant 0 : index
    %c0_1 = arith.constant 0 : index
    %0 = vector.load %arg1[%c0, %c0_0, %c0_1] : memref<2x16x64xf32, #tpu.memory_space<vmem>>, vector<2x16x64xf32>
    %1 = vector.shape_cast %0 : vector<2x16x64xf32> to vector<32x64xf32>
    %2 = arith.truncf %1 : vector<32x64xf32> to vector<32x64xbf16>
    %3 = arith.extf %2 : vector<32x64xbf16> to vector<32x64xf32>
    %4 = arith.subf %1, %3 : vector<32x64xf32>
    %5 = arith.truncf %4 : vector<32x64xf32> to vector<32x64xbf16>
    %c0_2 = arith.constant 0 : index
    %c0_3 = arith.constant 0 : index
    %c0_4 = arith.constant 0 : index
    %6 = vector.load %arg2[%c0_2, %c0_3, %c0_4] : memref<6x64x256xbf16, #tpu.memory_space<vmem>>, vector<1x64x256xbf16>
    %7 = vector.shape_cast %6 : vector<1x64x256xbf16> to vector<64x256xbf16>
    %cst = arith.constant dense<0.000000e+00> : vector<32x256xf32>
    %8 = tpu.matmul %2, %7, %cst {dimension_numbers = #tpu.dot_dimension_numbers<[1], [0], [0], [1], [0, 0, 1, 1], [], []>} : vector<32x64xbf16>, vector<64x256xbf16>, vector<32x256xf32> -> vector<32x256xf32>
    %c3 = arith.constant 3 : index
    %c0_5 = arith.constant 0 : index
    %c0_6 = arith.constant 0 : index
    %9 = vector.load %arg2[%c3, %c0_5, %c0_6] : memref<6x64x256xbf16, #tpu.memory_space<vmem>>, vector<1x64x256xbf16>
    %10 = vector.shape_cast %9 : vector<1x64x256xbf16> to vector<64x256xbf16>
    %cst_7 = arith.constant dense<0.000000e+00> : vector<32x256xf32>
    %11 = tpu.matmul %2, %10, %cst_7 {dimension_numbers = #tpu.dot_dimension_numbers<[1], [0], [0], [1], [0, 0, 1, 1], [], []>} : vector<32x64xbf16>, vector<64x256xbf16>, vector<32x256xf32> -> vector<32x256xf32>
    %12 = arith.addf %8, %11 : vector<32x256xf32>
    %cst_8 = arith.constant dense<0.000000e+00> : vector<32x256xf32>
    %13 = tpu.matmul %5, %7, %cst_8 {dimension_numbers = #tpu.dot_dimension_numbers<[1], [0], [0], [1], [0, 0, 1, 1], [], []>} : vector<32x64xbf16>, vector<64x256xbf16>, vector<32x256xf32> -> vector<32x256xf32>
    %14 = arith.addf %12, %13 : vector<32x256xf32>
    %15 = tpu.iota {dimensions = array<i32: 0>} : vector<32x256xi32>
    %c16_i32 = arith.constant 16 : i32
    %c0_i32 = arith.constant 0 : i32
    %16 = arith.cmpi eq, %c16_i32, %c0_i32 : i32
    %c1_i32 = arith.constant 1 : i32
    %17 = arith.select %16, %c1_i32, %c16_i32 : i32
    %18 = vector.broadcast %17 : i32 to vector<32x256xi32>
    %19 = arith.remsi %15, %18 : vector<32x256xi32>
    %c0_i32_9 = arith.constant 0 : i32
    %20 = vector.broadcast %c0_i32_9 : i32 to vector<32x256xi32>
    %21 = arith.cmpi ne, %19, %20 : vector<32x256xi32>
    %c0_i32_10 = arith.constant 0 : i32
    %22 = vector.broadcast %c0_i32_10 : i32 to vector<32x256xi32>
    %23 = arith.cmpi slt, %19, %22 : vector<32x256xi32>
    %c0_i32_11 = arith.constant 0 : i32
    %24 = arith.cmpi slt, %17, %c0_i32_11 : i32
    %25 = vector.broadcast %24 : i1 to vector<32x256xi1>
    %26 = vector.broadcast %25 : vector<32x256xi1> to vector<32x256xi1>
    %27 = arith.xori %23, %26 : vector<32x256xi1>
    %28 = arith.andi %27, %21 : vector<32x256xi1>
    %29 = vector.broadcast %17 : i32 to vector<32x256xi32>
    %30 = arith.addi %19, %29 : vector<32x256xi32>
    %31 = arith.select %28, %30, %19 : vector<32x256xi1>, vector<32x256xi32>
    %c0_i32_12 = arith.constant 0 : i32
    %32 = vector.broadcast %c0_i32_12 : i32 to vector<32x256xi32>
    %33 = arith.cmpi eq, %31, %32 : vector<32x256xi32>
    %c1_i32_13 = arith.constant 1 : i32
    %34 = tpu.dynamic_rotate %14 by %c1_i32_13 dim 0 : vector<32x256xf32>, i32 -> vector<32x256xf32>
    %cst_14 = arith.constant 0.000000e+00 : f32
    %35 = vector.broadcast %cst_14 : f32 to vector<32x256xf32>
    %36 = arith.select %33, %35, %34 : vector<32x256xi1>, vector<32x256xf32>
    %c1 = arith.constant 1 : index
    %c0_15 = arith.constant 0 : index
    %c0_16 = arith.constant 0 : index
    %37 = vector.load %arg2[%c1, %c0_15, %c0_16] : memref<6x64x256xbf16, #tpu.memory_space<vmem>>, vector<1x64x256xbf16>
    %38 = vector.shape_cast %37 : vector<1x64x256xbf16> to vector<64x256xbf16>
    %cst_17 = arith.constant dense<0.000000e+00> : vector<32x256xf32>
    %39 = tpu.matmul %2, %38, %cst_17 {dimension_numbers = #tpu.dot_dimension_numbers<[1], [0], [0], [1], [0, 0, 1, 1], [], []>} : vector<32x64xbf16>, vector<64x256xbf16>, vector<32x256xf32> -> vector<32x256xf32>
    %c4 = arith.constant 4 : index
    %c0_18 = arith.constant 0 : index
    %c0_19 = arith.constant 0 : index
    %40 = vector.load %arg2[%c4, %c0_18, %c0_19] : memref<6x64x256xbf16, #tpu.memory_space<vmem>>, vector<1x64x256xbf16>
    %41 = vector.shape_cast %40 : vector<1x64x256xbf16> to vector<64x256xbf16>
    %cst_20 = arith.constant dense<0.000000e+00> : vector<32x256xf32>
    %42 = tpu.matmul %2, %41, %cst_20 {dimension_numbers = #tpu.dot_dimension_numbers<[1], [0], [0], [1], [0, 0, 1, 1], [], []>} : vector<32x64xbf16>, vector<64x256xbf16>, vector<32x256xf32> -> vector<32x256xf32>
    %43 = arith.addf %39, %42 : vector<32x256xf32>
    %cst_21 = arith.constant dense<0.000000e+00> : vector<32x256xf32>
    %44 = tpu.matmul %5, %38, %cst_21 {dimension_numbers = #tpu.dot_dimension_numbers<[1], [0], [0], [1], [0, 0, 1, 1], [], []>} : vector<32x64xbf16>, vector<64x256xbf16>, vector<32x256xf32> -> vector<32x256xf32>
    %45 = arith.addf %43, %44 : vector<32x256xf32>
    %46 = arith.addf %36, %45 : vector<32x256xf32>
    %c2 = arith.constant 2 : index
    %c0_22 = arith.constant 0 : index
    %c0_23 = arith.constant 0 : index
    %47 = vector.load %arg2[%c2, %c0_22, %c0_23] : memref<6x64x256xbf16, #tpu.memory_space<vmem>>, vector<1x64x256xbf16>
    %48 = vector.shape_cast %47 : vector<1x64x256xbf16> to vector<64x256xbf16>
    %cst_24 = arith.constant dense<0.000000e+00> : vector<32x256xf32>
    %49 = tpu.matmul %2, %48, %cst_24 {dimension_numbers = #tpu.dot_dimension_numbers<[1], [0], [0], [1], [0, 0, 1, 1], [], []>} : vector<32x64xbf16>, vector<64x256xbf16>, vector<32x256xf32> -> vector<32x256xf32>
    %c5 = arith.constant 5 : index
    %c0_25 = arith.constant 0 : index
    %c0_26 = arith.constant 0 : index
    %50 = vector.load %arg2[%c5, %c0_25, %c0_26] : memref<6x64x256xbf16, #tpu.memory_space<vmem>>, vector<1x64x256xbf16>
    %51 = vector.shape_cast %50 : vector<1x64x256xbf16> to vector<64x256xbf16>
    %cst_27 = arith.constant dense<0.000000e+00> : vector<32x256xf32>
    %52 = tpu.matmul %2, %51, %cst_27 {dimension_numbers = #tpu.dot_dimension_numbers<[1], [0], [0], [1], [0, 0, 1, 1], [], []>} : vector<32x64xbf16>, vector<64x256xbf16>, vector<32x256xf32> -> vector<32x256xf32>
    %53 = arith.addf %49, %52 : vector<32x256xf32>
    %cst_28 = arith.constant dense<0.000000e+00> : vector<32x256xf32>
    %54 = tpu.matmul %5, %48, %cst_28 {dimension_numbers = #tpu.dot_dimension_numbers<[1], [0], [0], [1], [0, 0, 1, 1], [], []>} : vector<32x64xbf16>, vector<64x256xbf16>, vector<32x256xf32> -> vector<32x256xf32>
    %55 = arith.addf %53, %54 : vector<32x256xf32>
    %56 = tpu.iota {dimensions = array<i32: 0>} : vector<32x256xi32>
    %c16_i32_29 = arith.constant 16 : i32
    %c0_i32_30 = arith.constant 0 : i32
    %57 = arith.cmpi eq, %c16_i32_29, %c0_i32_30 : i32
    %c1_i32_31 = arith.constant 1 : i32
    %58 = arith.select %57, %c1_i32_31, %c16_i32_29 : i32
    %59 = vector.broadcast %58 : i32 to vector<32x256xi32>
    %60 = arith.remsi %56, %59 : vector<32x256xi32>
    %c0_i32_32 = arith.constant 0 : i32
    %61 = vector.broadcast %c0_i32_32 : i32 to vector<32x256xi32>
    %62 = arith.cmpi ne, %60, %61 : vector<32x256xi32>
    %c0_i32_33 = arith.constant 0 : i32
    %63 = vector.broadcast %c0_i32_33 : i32 to vector<32x256xi32>
    %64 = arith.cmpi slt, %60, %63 : vector<32x256xi32>
    %c0_i32_34 = arith.constant 0 : i32
    %65 = arith.cmpi slt, %58, %c0_i32_34 : i32
    %66 = vector.broadcast %65 : i1 to vector<32x256xi1>
    %67 = vector.broadcast %66 : vector<32x256xi1> to vector<32x256xi1>
    %68 = arith.xori %64, %67 : vector<32x256xi1>
    %69 = arith.andi %68, %62 : vector<32x256xi1>
    %70 = vector.broadcast %58 : i32 to vector<32x256xi32>
    %71 = arith.addi %60, %70 : vector<32x256xi32>
    %72 = arith.select %69, %71, %60 : vector<32x256xi1>, vector<32x256xi32>
    %c15_i32 = arith.constant 15 : i32
    %73 = vector.broadcast %c15_i32 : i32 to vector<32x256xi32>
    %74 = arith.cmpi eq, %72, %73 : vector<32x256xi32>
    %c31_i32 = arith.constant 31 : i32
    %75 = tpu.dynamic_rotate %55 by %c31_i32 dim 0 : vector<32x256xf32>, i32 -> vector<32x256xf32>
    %cst_35 = arith.constant 0.000000e+00 : f32
    %76 = vector.broadcast %cst_35 : f32 to vector<32x256xf32>
    %77 = arith.select %74, %76, %75 : vector<32x256xi1>, vector<32x256xf32>
    %78 = arith.addf %46, %77 : vector<32x256xf32>
    %79 = vector.extract_strided_slice %78 {offsets = [0, 0], sizes = [16, 256], strides = [1, 1]} : vector<32x256xf32> to vector<16x256xf32>
    %80 = vector.shape_cast %79 : vector<16x256xf32> to vector<1x16x256xf32>
    %cst_36 = arith.constant dense<0.000000e+00> : vector<1xf32>
    %81 = vector.multi_reduction <add>, %80, %cst_36 [1, 2] : vector<1x16x256xf32> to vector<1xf32>
    %82 = vector.shape_cast %81 : vector<1xf32> to vector<1x1x1xf32>
    %83 = vector.extract %82[0, 0, 0] : f32 from vector<1x1x1xf32>
    %cst_37 = arith.constant 2.44140625E-4 : f32
    %84 = arith.mulf %83, %cst_37 : f32
    %85 = arith.mulf %79, %79 : vector<16x256xf32>
    %86 = vector.shape_cast %85 : vector<16x256xf32> to vector<1x16x256xf32>
    %cst_38 = arith.constant dense<0.000000e+00> : vector<1xf32>
    %87 = vector.multi_reduction <add>, %86, %cst_38 [1, 2] : vector<1x16x256xf32> to vector<1xf32>
    %88 = vector.shape_cast %87 : vector<1xf32> to vector<1x1x1xf32>
    %89 = vector.extract %88[0, 0, 0] : f32 from vector<1x1x1xf32>
    %cst_39 = arith.constant 2.44140625E-4 : f32
    %90 = arith.mulf %89, %cst_39 : f32
    %91 = arith.mulf %84, %84 : f32
    %92 = arith.subf %90, %91 : f32
    %93 = vector.broadcast %84 : f32 to vector<16x256xf32>
    %94 = arith.subf %79, %93 : vector<16x256xf32>
    %cst_40 = arith.constant 9.99999974E-6 : f32
    %95 = arith.addf %92, %cst_40 : f32
    %96 = math.rsqrt %95 : f32
    %97 = vector.broadcast %96 : f32 to vector<16x256xf32>
    %98 = arith.mulf %94, %97 : vector<16x256xf32>
    %99 = vector.extract_strided_slice %78 {offsets = [16, 0], sizes = [16, 256], strides = [1, 1]} : vector<32x256xf32> to vector<16x256xf32>
    %100 = vector.shape_cast %99 : vector<16x256xf32> to vector<1x16x256xf32>
    %cst_41 = arith.constant dense<0.000000e+00> : vector<1xf32>
    %101 = vector.multi_reduction <add>, %100, %cst_41 [1, 2] : vector<1x16x256xf32> to vector<1xf32>
    %102 = vector.shape_cast %101 : vector<1xf32> to vector<1x1x1xf32>
    %103 = vector.extract %102[0, 0, 0] : f32 from vector<1x1x1xf32>
    %cst_42 = arith.constant 2.44140625E-4 : f32
    %104 = arith.mulf %103, %cst_42 : f32
    %105 = arith.mulf %99, %99 : vector<16x256xf32>
    %106 = vector.shape_cast %105 : vector<16x256xf32> to vector<1x16x256xf32>
    %cst_43 = arith.constant dense<0.000000e+00> : vector<1xf32>
    %107 = vector.multi_reduction <add>, %106, %cst_43 [1, 2] : vector<1x16x256xf32> to vector<1xf32>
    %108 = vector.shape_cast %107 : vector<1xf32> to vector<1x1x1xf32>
    %109 = vector.extract %108[0, 0, 0] : f32 from vector<1x1x1xf32>
    %cst_44 = arith.constant 2.44140625E-4 : f32
    %110 = arith.mulf %109, %cst_44 : f32
    %111 = arith.mulf %104, %104 : f32
    %112 = arith.subf %110, %111 : f32
    %113 = vector.broadcast %104 : f32 to vector<16x256xf32>
    %114 = arith.subf %99, %113 : vector<16x256xf32>
    %cst_45 = arith.constant 9.99999974E-6 : f32
    %115 = arith.addf %112, %cst_45 : f32
    %116 = math.rsqrt %115 : f32
    %117 = vector.broadcast %116 : f32 to vector<16x256xf32>
    %118 = arith.mulf %114, %117 : vector<16x256xf32>
    %119 = tpu.concatenate %98, %118 in 0 : vector<16x256xf32>, vector<16x256xf32> -> vector<32x256xf32>
    %120 = arith.negf %119 : vector<32x256xf32>
    %121 = math.exp %120 : vector<32x256xf32>
    %cst_46 = arith.constant 1.000000e+00 : f32
    %122 = vector.broadcast %cst_46 : f32 to vector<32x256xf32>
    %123 = arith.addf %122, %121 : vector<32x256xf32>
    %124 = arith.divf %122, %123 : vector<32x256xf32>
    %125 = arith.mulf %119, %124 : vector<32x256xf32>
    %126 = arith.truncf %125 : vector<32x256xf32> to vector<32x256xbf16>
    %127 = arith.extf %126 : vector<32x256xbf16> to vector<32x256xf32>
    %128 = arith.subf %125, %127 : vector<32x256xf32>
    %129 = arith.truncf %128 : vector<32x256xf32> to vector<32x256xbf16>
    %c0_47 = arith.constant 0 : index
    %c0_48 = arith.constant 0 : index
    %c0_49 = arith.constant 0 : index
    %130 = vector.load %arg3[%c0_47, %c0_48, %c0_49] : memref<6x256x64xbf16, #tpu.memory_space<vmem>>, vector<1x256x64xbf16>
    %131 = vector.shape_cast %130 : vector<1x256x64xbf16> to vector<256x64xbf16>
    %cst_50 = arith.constant dense<0.000000e+00> : vector<32x64xf32>
    %132 = tpu.matmul %126, %131, %cst_50 {dimension_numbers = #tpu.dot_dimension_numbers<[1], [0], [0], [1], [0, 0, 1, 1], [], []>} : vector<32x256xbf16>, vector<256x64xbf16>, vector<32x64xf32> -> vector<32x64xf32>
    %c3_51 = arith.constant 3 : index
    %c0_52 = arith.constant 0 : index
    %c0_53 = arith.constant 0 : index
    %133 = vector.load %arg3[%c3_51, %c0_52, %c0_53] : memref<6x256x64xbf16, #tpu.memory_space<vmem>>, vector<1x256x64xbf16>
    %134 = vector.shape_cast %133 : vector<1x256x64xbf16> to vector<256x64xbf16>
    %cst_54 = arith.constant dense<0.000000e+00> : vector<32x64xf32>
    %135 = tpu.matmul %126, %134, %cst_54 {dimension_numbers = #tpu.dot_dimension_numbers<[1], [0], [0], [1], [0, 0, 1, 1], [], []>} : vector<32x256xbf16>, vector<256x64xbf16>, vector<32x64xf32> -> vector<32x64xf32>
    %136 = arith.addf %132, %135 : vector<32x64xf32>
    %cst_55 = arith.constant dense<0.000000e+00> : vector<32x64xf32>
    %137 = tpu.matmul %129, %131, %cst_55 {dimension_numbers = #tpu.dot_dimension_numbers<[1], [0], [0], [1], [0, 0, 1, 1], [], []>} : vector<32x256xbf16>, vector<256x64xbf16>, vector<32x64xf32> -> vector<32x64xf32>
    %138 = arith.addf %136, %137 : vector<32x64xf32>
    %139 = tpu.iota {dimensions = array<i32: 0>} : vector<32x64xi32>
    %c16_i32_56 = arith.constant 16 : i32
    %c0_i32_57 = arith.constant 0 : i32
    %140 = arith.cmpi eq, %c16_i32_56, %c0_i32_57 : i32
    %c1_i32_58 = arith.constant 1 : i32
    %141 = arith.select %140, %c1_i32_58, %c16_i32_56 : i32
    %142 = vector.broadcast %141 : i32 to vector<32x64xi32>
    %143 = arith.remsi %139, %142 : vector<32x64xi32>
    %c0_i32_59 = arith.constant 0 : i32
    %144 = vector.broadcast %c0_i32_59 : i32 to vector<32x64xi32>
    %145 = arith.cmpi ne, %143, %144 : vector<32x64xi32>
    %c0_i32_60 = arith.constant 0 : i32
    %146 = vector.broadcast %c0_i32_60 : i32 to vector<32x64xi32>
    %147 = arith.cmpi slt, %143, %146 : vector<32x64xi32>
    %c0_i32_61 = arith.constant 0 : i32
    %148 = arith.cmpi slt, %141, %c0_i32_61 : i32
    %149 = vector.broadcast %148 : i1 to vector<32x64xi1>
    %150 = vector.broadcast %149 : vector<32x64xi1> to vector<32x64xi1>
    %151 = arith.xori %147, %150 : vector<32x64xi1>
    %152 = arith.andi %151, %145 : vector<32x64xi1>
    %153 = vector.broadcast %141 : i32 to vector<32x64xi32>
    %154 = arith.addi %143, %153 : vector<32x64xi32>
    %155 = arith.select %152, %154, %143 : vector<32x64xi1>, vector<32x64xi32>
    %c0_i32_62 = arith.constant 0 : i32
    %156 = vector.broadcast %c0_i32_62 : i32 to vector<32x64xi32>
    %157 = arith.cmpi eq, %155, %156 : vector<32x64xi32>
    %c1_i32_63 = arith.constant 1 : i32
    %158 = tpu.dynamic_rotate %138 by %c1_i32_63 dim 0 : vector<32x64xf32>, i32 -> vector<32x64xf32>
    %cst_64 = arith.constant 0.000000e+00 : f32
    %159 = vector.broadcast %cst_64 : f32 to vector<32x64xf32>
    %160 = arith.select %157, %159, %158 : vector<32x64xi1>, vector<32x64xf32>
    %c1_65 = arith.constant 1 : index
    %c0_66 = arith.constant 0 : index
    %c0_67 = arith.constant 0 : index
    %161 = vector.load %arg3[%c1_65, %c0_66, %c0_67] : memref<6x256x64xbf16, #tpu.memory_space<vmem>>, vector<1x256x64xbf16>
    %162 = vector.shape_cast %161 : vector<1x256x64xbf16> to vector<256x64xbf16>
    %cst_68 = arith.constant dense<0.000000e+00> : vector<32x64xf32>
    %163 = tpu.matmul %126, %162, %cst_68 {dimension_numbers = #tpu.dot_dimension_numbers<[1], [0], [0], [1], [0, 0, 1, 1], [], []>} : vector<32x256xbf16>, vector<256x64xbf16>, vector<32x64xf32> -> vector<32x64xf32>
    %c4_69 = arith.constant 4 : index
    %c0_70 = arith.constant 0 : index
    %c0_71 = arith.constant 0 : index
    %164 = vector.load %arg3[%c4_69, %c0_70, %c0_71] : memref<6x256x64xbf16, #tpu.memory_space<vmem>>, vector<1x256x64xbf16>
    %165 = vector.shape_cast %164 : vector<1x256x64xbf16> to vector<256x64xbf16>
    %cst_72 = arith.constant dense<0.000000e+00> : vector<32x64xf32>
    %166 = tpu.matmul %126, %165, %cst_72 {dimension_numbers = #tpu.dot_dimension_numbers<[1], [0], [0], [1], [0, 0, 1, 1], [], []>} : vector<32x256xbf16>, vector<256x64xbf16>, vector<32x64xf32> -> vector<32x64xf32>
    %167 = arith.addf %163, %166 : vector<32x64xf32>
    %cst_73 = arith.constant dense<0.000000e+00> : vector<32x64xf32>
    %168 = tpu.matmul %129, %162, %cst_73 {dimension_numbers = #tpu.dot_dimension_numbers<[1], [0], [0], [1], [0, 0, 1, 1], [], []>} : vector<32x256xbf16>, vector<256x64xbf16>, vector<32x64xf32> -> vector<32x64xf32>
    %169 = arith.addf %167, %168 : vector<32x64xf32>
    %170 = arith.addf %160, %169 : vector<32x64xf32>
    %c2_74 = arith.constant 2 : index
    %c0_75 = arith.constant 0 : index
    %c0_76 = arith.constant 0 : index
    %171 = vector.load %arg3[%c2_74, %c0_75, %c0_76] : memref<6x256x64xbf16, #tpu.memory_space<vmem>>, vector<1x256x64xbf16>
    %172 = vector.shape_cast %171 : vector<1x256x64xbf16> to vector<256x64xbf16>
    %cst_77 = arith.constant dense<0.000000e+00> : vector<32x64xf32>
    %173 = tpu.matmul %126, %172, %cst_77 {dimension_numbers = #tpu.dot_dimension_numbers<[1], [0], [0], [1], [0, 0, 1, 1], [], []>} : vector<32x256xbf16>, vector<256x64xbf16>, vector<32x64xf32> -> vector<32x64xf32>
    %c5_78 = arith.constant 5 : index
    %c0_79 = arith.constant 0 : index
    %c0_80 = arith.constant 0 : index
    %174 = vector.load %arg3[%c5_78, %c0_79, %c0_80] : memref<6x256x64xbf16, #tpu.memory_space<vmem>>, vector<1x256x64xbf16>
    %175 = vector.shape_cast %174 : vector<1x256x64xbf16> to vector<256x64xbf16>
    %cst_81 = arith.constant dense<0.000000e+00> : vector<32x64xf32>
    %176 = tpu.matmul %126, %175, %cst_81 {dimension_numbers = #tpu.dot_dimension_numbers<[1], [0], [0], [1], [0, 0, 1, 1], [], []>} : vector<32x256xbf16>, vector<256x64xbf16>, vector<32x64xf32> -> vector<32x64xf32>
    %177 = arith.addf %173, %176 : vector<32x64xf32>
    %cst_82 = arith.constant dense<0.000000e+00> : vector<32x64xf32>
    %178 = tpu.matmul %129, %172, %cst_82 {dimension_numbers = #tpu.dot_dimension_numbers<[1], [0], [0], [1], [0, 0, 1, 1], [], []>} : vector<32x256xbf16>, vector<256x64xbf16>, vector<32x64xf32> -> vector<32x64xf32>
    %179 = arith.addf %177, %178 : vector<32x64xf32>
    %180 = tpu.iota {dimensions = array<i32: 0>} : vector<32x64xi32>
    %c16_i32_83 = arith.constant 16 : i32
    %c0_i32_84 = arith.constant 0 : i32
    %181 = arith.cmpi eq, %c16_i32_83, %c0_i32_84 : i32
    %c1_i32_85 = arith.constant 1 : i32
    %182 = arith.select %181, %c1_i32_85, %c16_i32_83 : i32
    %183 = vector.broadcast %182 : i32 to vector<32x64xi32>
    %184 = arith.remsi %180, %183 : vector<32x64xi32>
    %c0_i32_86 = arith.constant 0 : i32
    %185 = vector.broadcast %c0_i32_86 : i32 to vector<32x64xi32>
    %186 = arith.cmpi ne, %184, %185 : vector<32x64xi32>
    %c0_i32_87 = arith.constant 0 : i32
    %187 = vector.broadcast %c0_i32_87 : i32 to vector<32x64xi32>
    %188 = arith.cmpi slt, %184, %187 : vector<32x64xi32>
    %c0_i32_88 = arith.constant 0 : i32
    %189 = arith.cmpi slt, %182, %c0_i32_88 : i32
    %190 = vector.broadcast %189 : i1 to vector<32x64xi1>
    %191 = vector.broadcast %190 : vector<32x64xi1> to vector<32x64xi1>
    %192 = arith.xori %188, %191 : vector<32x64xi1>
    %193 = arith.andi %192, %186 : vector<32x64xi1>
    %194 = vector.broadcast %182 : i32 to vector<32x64xi32>
    %195 = arith.addi %184, %194 : vector<32x64xi32>
    %196 = arith.select %193, %195, %184 : vector<32x64xi1>, vector<32x64xi32>
    %c15_i32_89 = arith.constant 15 : i32
    %197 = vector.broadcast %c15_i32_89 : i32 to vector<32x64xi32>
    %198 = arith.cmpi eq, %196, %197 : vector<32x64xi32>
    %c31_i32_90 = arith.constant 31 : i32
    %199 = tpu.dynamic_rotate %179 by %c31_i32_90 dim 0 : vector<32x64xf32>, i32 -> vector<32x64xf32>
    %cst_91 = arith.constant 0.000000e+00 : f32
    %200 = vector.broadcast %cst_91 : f32 to vector<32x64xf32>
    %201 = arith.select %198, %200, %199 : vector<32x64xi1>, vector<32x64xf32>
    %202 = arith.addf %170, %201 : vector<32x64xf32>
    %203 = arith.addf %1, %202 : vector<32x64xf32>
    %204 = vector.extract_strided_slice %203 {offsets = [0, 0], sizes = [16, 64], strides = [1, 1]} : vector<32x64xf32> to vector<16x64xf32>
    %205 = vector.shape_cast %204 : vector<16x64xf32> to vector<1x16x64xf32>
    %cst_92 = arith.constant dense<0.000000e+00> : vector<1xf32>
    %206 = vector.multi_reduction <add>, %205, %cst_92 [1, 2] : vector<1x16x64xf32> to vector<1xf32>
    %207 = vector.shape_cast %206 : vector<1xf32> to vector<1x1x1xf32>
    %208 = vector.extract %207[0, 0, 0] : f32 from vector<1x1x1xf32>
    %cst_93 = arith.constant 9.765625E-4 : f32
    %209 = arith.mulf %208, %cst_93 : f32
    %210 = arith.mulf %204, %204 : vector<16x64xf32>
    %211 = vector.shape_cast %210 : vector<16x64xf32> to vector<1x16x64xf32>
    %cst_94 = arith.constant dense<0.000000e+00> : vector<1xf32>
    %212 = vector.multi_reduction <add>, %211, %cst_94 [1, 2] : vector<1x16x64xf32> to vector<1xf32>
    %213 = vector.shape_cast %212 : vector<1xf32> to vector<1x1x1xf32>
    %214 = vector.extract %213[0, 0, 0] : f32 from vector<1x1x1xf32>
    %cst_95 = arith.constant 9.765625E-4 : f32
    %215 = arith.mulf %214, %cst_95 : f32
    %216 = arith.mulf %209, %209 : f32
    %217 = arith.subf %215, %216 : f32
    %218 = vector.broadcast %209 : f32 to vector<16x64xf32>
    %219 = arith.subf %204, %218 : vector<16x64xf32>
    %cst_96 = arith.constant 9.99999974E-6 : f32
    %220 = arith.addf %217, %cst_96 : f32
    %221 = math.rsqrt %220 : f32
    %222 = vector.broadcast %221 : f32 to vector<16x64xf32>
    %223 = arith.mulf %219, %222 : vector<16x64xf32>
    %224 = vector.extract_strided_slice %203 {offsets = [16, 0], sizes = [16, 64], strides = [1, 1]} : vector<32x64xf32> to vector<16x64xf32>
    %225 = vector.shape_cast %224 : vector<16x64xf32> to vector<1x16x64xf32>
    %cst_97 = arith.constant dense<0.000000e+00> : vector<1xf32>
    %226 = vector.multi_reduction <add>, %225, %cst_97 [1, 2] : vector<1x16x64xf32> to vector<1xf32>
    %227 = vector.shape_cast %226 : vector<1xf32> to vector<1x1x1xf32>
    %228 = vector.extract %227[0, 0, 0] : f32 from vector<1x1x1xf32>
    %cst_98 = arith.constant 9.765625E-4 : f32
    %229 = arith.mulf %228, %cst_98 : f32
    %230 = arith.mulf %224, %224 : vector<16x64xf32>
    %231 = vector.shape_cast %230 : vector<16x64xf32> to vector<1x16x64xf32>
    %cst_99 = arith.constant dense<0.000000e+00> : vector<1xf32>
    %232 = vector.multi_reduction <add>, %231, %cst_99 [1, 2] : vector<1x16x64xf32> to vector<1xf32>
    %233 = vector.shape_cast %232 : vector<1xf32> to vector<1x1x1xf32>
    %234 = vector.extract %233[0, 0, 0] : f32 from vector<1x1x1xf32>
    %cst_100 = arith.constant 9.765625E-4 : f32
    %235 = arith.mulf %234, %cst_100 : f32
    %236 = arith.mulf %229, %229 : f32
    %237 = arith.subf %235, %236 : f32
    %238 = vector.broadcast %229 : f32 to vector<16x64xf32>
    %239 = arith.subf %224, %238 : vector<16x64xf32>
    %cst_101 = arith.constant 9.99999974E-6 : f32
    %240 = arith.addf %237, %cst_101 : f32
    %241 = math.rsqrt %240 : f32
    %242 = vector.broadcast %241 : f32 to vector<16x64xf32>
    %243 = arith.mulf %239, %242 : vector<16x64xf32>
    %244 = tpu.concatenate %223, %243 in 0 : vector<16x64xf32>, vector<16x64xf32> -> vector<32x64xf32>
    %245 = arith.truncf %244 : vector<32x64xf32> to vector<32x64xbf16>
    %246 = arith.extf %245 : vector<32x64xbf16> to vector<32x64xf32>
    %247 = arith.subf %244, %246 : vector<32x64xf32>
    %248 = arith.truncf %247 : vector<32x64xf32> to vector<32x64xbf16>
    %c0_102 = arith.constant 0 : index
    %c0_103 = arith.constant 0 : index
    %c0_104 = arith.constant 0 : index
    %249 = vector.load %arg4[%c0_102, %c0_103, %c0_104] : memref<6x64x256xbf16, #tpu.memory_space<vmem>>, vector<1x64x256xbf16>
    %250 = vector.shape_cast %249 : vector<1x64x256xbf16> to vector<64x256xbf16>
    %cst_105 = arith.constant dense<0.000000e+00> : vector<32x256xf32>
    %251 = tpu.matmul %245, %250, %cst_105 {dimension_numbers = #tpu.dot_dimension_numbers<[1], [0], [0], [1], [0, 0, 1, 1], [], []>} : vector<32x64xbf16>, vector<64x256xbf16>, vector<32x256xf32> -> vector<32x256xf32>
    %c3_106 = arith.constant 3 : index
    %c0_107 = arith.constant 0 : index
    %c0_108 = arith.constant 0 : index
    %252 = vector.load %arg4[%c3_106, %c0_107, %c0_108] : memref<6x64x256xbf16, #tpu.memory_space<vmem>>, vector<1x64x256xbf16>
    %253 = vector.shape_cast %252 : vector<1x64x256xbf16> to vector<64x256xbf16>
    %cst_109 = arith.constant dense<0.000000e+00> : vector<32x256xf32>
    %254 = tpu.matmul %245, %253, %cst_109 {dimension_numbers = #tpu.dot_dimension_numbers<[1], [0], [0], [1], [0, 0, 1, 1], [], []>} : vector<32x64xbf16>, vector<64x256xbf16>, vector<32x256xf32> -> vector<32x256xf32>
    %255 = arith.addf %251, %254 : vector<32x256xf32>
    %cst_110 = arith.constant dense<0.000000e+00> : vector<32x256xf32>
    %256 = tpu.matmul %248, %250, %cst_110 {dimension_numbers = #tpu.dot_dimension_numbers<[1], [0], [0], [1], [0, 0, 1, 1], [], []>} : vector<32x64xbf16>, vector<64x256xbf16>, vector<32x256xf32> -> vector<32x256xf32>
    %257 = arith.addf %255, %256 : vector<32x256xf32>
    %258 = tpu.iota {dimensions = array<i32: 0>} : vector<32x256xi32>
    %c16_i32_111 = arith.constant 16 : i32
    %c0_i32_112 = arith.constant 0 : i32
    %259 = arith.cmpi eq, %c16_i32_111, %c0_i32_112 : i32
    %c1_i32_113 = arith.constant 1 : i32
    %260 = arith.select %259, %c1_i32_113, %c16_i32_111 : i32
    %261 = vector.broadcast %260 : i32 to vector<32x256xi32>
    %262 = arith.remsi %258, %261 : vector<32x256xi32>
    %c0_i32_114 = arith.constant 0 : i32
    %263 = vector.broadcast %c0_i32_114 : i32 to vector<32x256xi32>
    %264 = arith.cmpi ne, %262, %263 : vector<32x256xi32>
    %c0_i32_115 = arith.constant 0 : i32
    %265 = vector.broadcast %c0_i32_115 : i32 to vector<32x256xi32>
    %266 = arith.cmpi slt, %262, %265 : vector<32x256xi32>
    %c0_i32_116 = arith.constant 0 : i32
    %267 = arith.cmpi slt, %260, %c0_i32_116 : i32
    %268 = vector.broadcast %267 : i1 to vector<32x256xi1>
    %269 = vector.broadcast %268 : vector<32x256xi1> to vector<32x256xi1>
    %270 = arith.xori %266, %269 : vector<32x256xi1>
    %271 = arith.andi %270, %264 : vector<32x256xi1>
    %272 = vector.broadcast %260 : i32 to vector<32x256xi32>
    %273 = arith.addi %262, %272 : vector<32x256xi32>
    %274 = arith.select %271, %273, %262 : vector<32x256xi1>, vector<32x256xi32>
    %c0_i32_117 = arith.constant 0 : i32
    %275 = vector.broadcast %c0_i32_117 : i32 to vector<32x256xi32>
    %276 = arith.cmpi eq, %274, %275 : vector<32x256xi32>
    %c1_i32_118 = arith.constant 1 : i32
    %277 = tpu.dynamic_rotate %257 by %c1_i32_118 dim 0 : vector<32x256xf32>, i32 -> vector<32x256xf32>
    %cst_119 = arith.constant 0.000000e+00 : f32
    %278 = vector.broadcast %cst_119 : f32 to vector<32x256xf32>
    %279 = arith.select %276, %278, %277 : vector<32x256xi1>, vector<32x256xf32>
    %c1_120 = arith.constant 1 : index
    %c0_121 = arith.constant 0 : index
    %c0_122 = arith.constant 0 : index
    %280 = vector.load %arg4[%c1_120, %c0_121, %c0_122] : memref<6x64x256xbf16, #tpu.memory_space<vmem>>, vector<1x64x256xbf16>
    %281 = vector.shape_cast %280 : vector<1x64x256xbf16> to vector<64x256xbf16>
    %cst_123 = arith.constant dense<0.000000e+00> : vector<32x256xf32>
    %282 = tpu.matmul %245, %281, %cst_123 {dimension_numbers = #tpu.dot_dimension_numbers<[1], [0], [0], [1], [0, 0, 1, 1], [], []>} : vector<32x64xbf16>, vector<64x256xbf16>, vector<32x256xf32> -> vector<32x256xf32>
    %c4_124 = arith.constant 4 : index
    %c0_125 = arith.constant 0 : index
    %c0_126 = arith.constant 0 : index
    %283 = vector.load %arg4[%c4_124, %c0_125, %c0_126] : memref<6x64x256xbf16, #tpu.memory_space<vmem>>, vector<1x64x256xbf16>
    %284 = vector.shape_cast %283 : vector<1x64x256xbf16> to vector<64x256xbf16>
    %cst_127 = arith.constant dense<0.000000e+00> : vector<32x256xf32>
    %285 = tpu.matmul %245, %284, %cst_127 {dimension_numbers = #tpu.dot_dimension_numbers<[1], [0], [0], [1], [0, 0, 1, 1], [], []>} : vector<32x64xbf16>, vector<64x256xbf16>, vector<32x256xf32> -> vector<32x256xf32>
    %286 = arith.addf %282, %285 : vector<32x256xf32>
    %cst_128 = arith.constant dense<0.000000e+00> : vector<32x256xf32>
    %287 = tpu.matmul %248, %281, %cst_128 {dimension_numbers = #tpu.dot_dimension_numbers<[1], [0], [0], [1], [0, 0, 1, 1], [], []>} : vector<32x64xbf16>, vector<64x256xbf16>, vector<32x256xf32> -> vector<32x256xf32>
    %288 = arith.addf %286, %287 : vector<32x256xf32>
    %289 = arith.addf %279, %288 : vector<32x256xf32>
    %c2_129 = arith.constant 2 : index
    %c0_130 = arith.constant 0 : index
    %c0_131 = arith.constant 0 : index
    %290 = vector.load %arg4[%c2_129, %c0_130, %c0_131] : memref<6x64x256xbf16, #tpu.memory_space<vmem>>, vector<1x64x256xbf16>
    %291 = vector.shape_cast %290 : vector<1x64x256xbf16> to vector<64x256xbf16>
    %cst_132 = arith.constant dense<0.000000e+00> : vector<32x256xf32>
    %292 = tpu.matmul %245, %291, %cst_132 {dimension_numbers = #tpu.dot_dimension_numbers<[1], [0], [0], [1], [0, 0, 1, 1], [], []>} : vector<32x64xbf16>, vector<64x256xbf16>, vector<32x256xf32> -> vector<32x256xf32>
    %c5_133 = arith.constant 5 : index
    %c0_134 = arith.constant 0 : index
    %c0_135 = arith.constant 0 : index
    %293 = vector.load %arg4[%c5_133, %c0_134, %c0_135] : memref<6x64x256xbf16, #tpu.memory_space<vmem>>, vector<1x64x256xbf16>
    %294 = vector.shape_cast %293 : vector<1x64x256xbf16> to vector<64x256xbf16>
    %cst_136 = arith.constant dense<0.000000e+00> : vector<32x256xf32>
    %295 = tpu.matmul %245, %294, %cst_136 {dimension_numbers = #tpu.dot_dimension_numbers<[1], [0], [0], [1], [0, 0, 1, 1], [], []>} : vector<32x64xbf16>, vector<64x256xbf16>, vector<32x256xf32> -> vector<32x256xf32>
    %296 = arith.addf %292, %295 : vector<32x256xf32>
    %cst_137 = arith.constant dense<0.000000e+00> : vector<32x256xf32>
    %297 = tpu.matmul %248, %291, %cst_137 {dimension_numbers = #tpu.dot_dimension_numbers<[1], [0], [0], [1], [0, 0, 1, 1], [], []>} : vector<32x64xbf16>, vector<64x256xbf16>, vector<32x256xf32> -> vector<32x256xf32>
    %298 = arith.addf %296, %297 : vector<32x256xf32>
    %299 = tpu.iota {dimensions = array<i32: 0>} : vector<32x256xi32>
    %c16_i32_138 = arith.constant 16 : i32
    %c0_i32_139 = arith.constant 0 : i32
    %300 = arith.cmpi eq, %c16_i32_138, %c0_i32_139 : i32
    %c1_i32_140 = arith.constant 1 : i32
    %301 = arith.select %300, %c1_i32_140, %c16_i32_138 : i32
    %302 = vector.broadcast %301 : i32 to vector<32x256xi32>
    %303 = arith.remsi %299, %302 : vector<32x256xi32>
    %c0_i32_141 = arith.constant 0 : i32
    %304 = vector.broadcast %c0_i32_141 : i32 to vector<32x256xi32>
    %305 = arith.cmpi ne, %303, %304 : vector<32x256xi32>
    %c0_i32_142 = arith.constant 0 : i32
    %306 = vector.broadcast %c0_i32_142 : i32 to vector<32x256xi32>
    %307 = arith.cmpi slt, %303, %306 : vector<32x256xi32>
    %c0_i32_143 = arith.constant 0 : i32
    %308 = arith.cmpi slt, %301, %c0_i32_143 : i32
    %309 = vector.broadcast %308 : i1 to vector<32x256xi1>
    %310 = vector.broadcast %309 : vector<32x256xi1> to vector<32x256xi1>
    %311 = arith.xori %307, %310 : vector<32x256xi1>
    %312 = arith.andi %311, %305 : vector<32x256xi1>
    %313 = vector.broadcast %301 : i32 to vector<32x256xi32>
    %314 = arith.addi %303, %313 : vector<32x256xi32>
    %315 = arith.select %312, %314, %303 : vector<32x256xi1>, vector<32x256xi32>
    %c15_i32_144 = arith.constant 15 : i32
    %316 = vector.broadcast %c15_i32_144 : i32 to vector<32x256xi32>
    %317 = arith.cmpi eq, %315, %316 : vector<32x256xi32>
    %c31_i32_145 = arith.constant 31 : i32
    %318 = tpu.dynamic_rotate %298 by %c31_i32_145 dim 0 : vector<32x256xf32>, i32 -> vector<32x256xf32>
    %cst_146 = arith.constant 0.000000e+00 : f32
    %319 = vector.broadcast %cst_146 : f32 to vector<32x256xf32>
    %320 = arith.select %317, %319, %318 : vector<32x256xi1>, vector<32x256xf32>
    %321 = arith.addf %289, %320 : vector<32x256xf32>
    %322 = vector.extract_strided_slice %321 {offsets = [0, 0], sizes = [16, 256], strides = [1, 1]} : vector<32x256xf32> to vector<16x256xf32>
    %323 = vector.shape_cast %322 : vector<16x256xf32> to vector<1x16x256xf32>
    %cst_147 = arith.constant dense<0.000000e+00> : vector<1xf32>
    %324 = vector.multi_reduction <add>, %323, %cst_147 [1, 2] : vector<1x16x256xf32> to vector<1xf32>
    %325 = vector.shape_cast %324 : vector<1xf32> to vector<1x1x1xf32>
    %326 = vector.extract %325[0, 0, 0] : f32 from vector<1x1x1xf32>
    %cst_148 = arith.constant 2.44140625E-4 : f32
    %327 = arith.mulf %326, %cst_148 : f32
    %328 = arith.mulf %322, %322 : vector<16x256xf32>
    %329 = vector.shape_cast %328 : vector<16x256xf32> to vector<1x16x256xf32>
    %cst_149 = arith.constant dense<0.000000e+00> : vector<1xf32>
    %330 = vector.multi_reduction <add>, %329, %cst_149 [1, 2] : vector<1x16x256xf32> to vector<1xf32>
    %331 = vector.shape_cast %330 : vector<1xf32> to vector<1x1x1xf32>
    %332 = vector.extract %331[0, 0, 0] : f32 from vector<1x1x1xf32>
    %cst_150 = arith.constant 2.44140625E-4 : f32
    %333 = arith.mulf %332, %cst_150 : f32
    %334 = arith.mulf %327, %327 : f32
    %335 = arith.subf %333, %334 : f32
    %336 = vector.broadcast %327 : f32 to vector<16x256xf32>
    %337 = arith.subf %322, %336 : vector<16x256xf32>
    %cst_151 = arith.constant 9.99999974E-6 : f32
    %338 = arith.addf %335, %cst_151 : f32
    %339 = math.rsqrt %338 : f32
    %340 = vector.broadcast %339 : f32 to vector<16x256xf32>
    %341 = arith.mulf %337, %340 : vector<16x256xf32>
    %342 = vector.extract_strided_slice %321 {offsets = [16, 0], sizes = [16, 256], strides = [1, 1]} : vector<32x256xf32> to vector<16x256xf32>
    %343 = vector.shape_cast %342 : vector<16x256xf32> to vector<1x16x256xf32>
    %cst_152 = arith.constant dense<0.000000e+00> : vector<1xf32>
    %344 = vector.multi_reduction <add>, %343, %cst_152 [1, 2] : vector<1x16x256xf32> to vector<1xf32>
    %345 = vector.shape_cast %344 : vector<1xf32> to vector<1x1x1xf32>
    %346 = vector.extract %345[0, 0, 0] : f32 from vector<1x1x1xf32>
    %cst_153 = arith.constant 2.44140625E-4 : f32
    %347 = arith.mulf %346, %cst_153 : f32
    %348 = arith.mulf %342, %342 : vector<16x256xf32>
    %349 = vector.shape_cast %348 : vector<16x256xf32> to vector<1x16x256xf32>
    %cst_154 = arith.constant dense<0.000000e+00> : vector<1xf32>
    %350 = vector.multi_reduction <add>, %349, %cst_154 [1, 2] : vector<1x16x256xf32> to vector<1xf32>
    %351 = vector.shape_cast %350 : vector<1xf32> to vector<1x1x1xf32>
    %352 = vector.extract %351[0, 0, 0] : f32 from vector<1x1x1xf32>
    %cst_155 = arith.constant 2.44140625E-4 : f32
    %353 = arith.mulf %352, %cst_155 : f32
    %354 = arith.mulf %347, %347 : f32
    %355 = arith.subf %353, %354 : f32
    %356 = vector.broadcast %347 : f32 to vector<16x256xf32>
    %357 = arith.subf %342, %356 : vector<16x256xf32>
    %cst_156 = arith.constant 9.99999974E-6 : f32
    %358 = arith.addf %355, %cst_156 : f32
    %359 = math.rsqrt %358 : f32
    %360 = vector.broadcast %359 : f32 to vector<16x256xf32>
    %361 = arith.mulf %357, %360 : vector<16x256xf32>
    %362 = tpu.concatenate %341, %361 in 0 : vector<16x256xf32>, vector<16x256xf32> -> vector<32x256xf32>
    %363 = arith.negf %362 : vector<32x256xf32>
    %364 = math.exp %363 : vector<32x256xf32>
    %cst_157 = arith.constant 1.000000e+00 : f32
    %365 = vector.broadcast %cst_157 : f32 to vector<32x256xf32>
    %366 = arith.addf %365, %364 : vector<32x256xf32>
    %367 = arith.divf %365, %366 : vector<32x256xf32>
    %368 = arith.mulf %362, %367 : vector<32x256xf32>
    %369 = arith.truncf %368 : vector<32x256xf32> to vector<32x256xbf16>
    %370 = arith.extf %369 : vector<32x256xbf16> to vector<32x256xf32>
    %371 = arith.subf %368, %370 : vector<32x256xf32>
    %372 = arith.truncf %371 : vector<32x256xf32> to vector<32x256xbf16>
    %c0_158 = arith.constant 0 : index
    %c0_159 = arith.constant 0 : index
    %c0_160 = arith.constant 0 : index
    %373 = vector.load %arg5[%c0_158, %c0_159, %c0_160] : memref<6x256x64xbf16, #tpu.memory_space<vmem>>, vector<1x256x64xbf16>
    %374 = vector.shape_cast %373 : vector<1x256x64xbf16> to vector<256x64xbf16>
    %cst_161 = arith.constant dense<0.000000e+00> : vector<32x64xf32>
    %375 = tpu.matmul %369, %374, %cst_161 {dimension_numbers = #tpu.dot_dimension_numbers<[1], [0], [0], [1], [0, 0, 1, 1], [], []>} : vector<32x256xbf16>, vector<256x64xbf16>, vector<32x64xf32> -> vector<32x64xf32>
    %c3_162 = arith.constant 3 : index
    %c0_163 = arith.constant 0 : index
    %c0_164 = arith.constant 0 : index
    %376 = vector.load %arg5[%c3_162, %c0_163, %c0_164] : memref<6x256x64xbf16, #tpu.memory_space<vmem>>, vector<1x256x64xbf16>
    %377 = vector.shape_cast %376 : vector<1x256x64xbf16> to vector<256x64xbf16>
    %cst_165 = arith.constant dense<0.000000e+00> : vector<32x64xf32>
    %378 = tpu.matmul %369, %377, %cst_165 {dimension_numbers = #tpu.dot_dimension_numbers<[1], [0], [0], [1], [0, 0, 1, 1], [], []>} : vector<32x256xbf16>, vector<256x64xbf16>, vector<32x64xf32> -> vector<32x64xf32>
    %379 = arith.addf %375, %378 : vector<32x64xf32>
    %cst_166 = arith.constant dense<0.000000e+00> : vector<32x64xf32>
    %380 = tpu.matmul %372, %374, %cst_166 {dimension_numbers = #tpu.dot_dimension_numbers<[1], [0], [0], [1], [0, 0, 1, 1], [], []>} : vector<32x256xbf16>, vector<256x64xbf16>, vector<32x64xf32> -> vector<32x64xf32>
    %381 = arith.addf %379, %380 : vector<32x64xf32>
    %382 = tpu.iota {dimensions = array<i32: 0>} : vector<32x64xi32>
    %c16_i32_167 = arith.constant 16 : i32
    %c0_i32_168 = arith.constant 0 : i32
    %383 = arith.cmpi eq, %c16_i32_167, %c0_i32_168 : i32
    %c1_i32_169 = arith.constant 1 : i32
    %384 = arith.select %383, %c1_i32_169, %c16_i32_167 : i32
    %385 = vector.broadcast %384 : i32 to vector<32x64xi32>
    %386 = arith.remsi %382, %385 : vector<32x64xi32>
    %c0_i32_170 = arith.constant 0 : i32
    %387 = vector.broadcast %c0_i32_170 : i32 to vector<32x64xi32>
    %388 = arith.cmpi ne, %386, %387 : vector<32x64xi32>
    %c0_i32_171 = arith.constant 0 : i32
    %389 = vector.broadcast %c0_i32_171 : i32 to vector<32x64xi32>
    %390 = arith.cmpi slt, %386, %389 : vector<32x64xi32>
    %c0_i32_172 = arith.constant 0 : i32
    %391 = arith.cmpi slt, %384, %c0_i32_172 : i32
    %392 = vector.broadcast %391 : i1 to vector<32x64xi1>
    %393 = vector.broadcast %392 : vector<32x64xi1> to vector<32x64xi1>
    %394 = arith.xori %390, %393 : vector<32x64xi1>
    %395 = arith.andi %394, %388 : vector<32x64xi1>
    %396 = vector.broadcast %384 : i32 to vector<32x64xi32>
    %397 = arith.addi %386, %396 : vector<32x64xi32>
    %398 = arith.select %395, %397, %386 : vector<32x64xi1>, vector<32x64xi32>
    %c0_i32_173 = arith.constant 0 : i32
    %399 = vector.broadcast %c0_i32_173 : i32 to vector<32x64xi32>
    %400 = arith.cmpi eq, %398, %399 : vector<32x64xi32>
    %c1_i32_174 = arith.constant 1 : i32
    %401 = tpu.dynamic_rotate %381 by %c1_i32_174 dim 0 : vector<32x64xf32>, i32 -> vector<32x64xf32>
    %cst_175 = arith.constant 0.000000e+00 : f32
    %402 = vector.broadcast %cst_175 : f32 to vector<32x64xf32>
    %403 = arith.select %400, %402, %401 : vector<32x64xi1>, vector<32x64xf32>
    %c1_176 = arith.constant 1 : index
    %c0_177 = arith.constant 0 : index
    %c0_178 = arith.constant 0 : index
    %404 = vector.load %arg5[%c1_176, %c0_177, %c0_178] : memref<6x256x64xbf16, #tpu.memory_space<vmem>>, vector<1x256x64xbf16>
    %405 = vector.shape_cast %404 : vector<1x256x64xbf16> to vector<256x64xbf16>
    %cst_179 = arith.constant dense<0.000000e+00> : vector<32x64xf32>
    %406 = tpu.matmul %369, %405, %cst_179 {dimension_numbers = #tpu.dot_dimension_numbers<[1], [0], [0], [1], [0, 0, 1, 1], [], []>} : vector<32x256xbf16>, vector<256x64xbf16>, vector<32x64xf32> -> vector<32x64xf32>
    %c4_180 = arith.constant 4 : index
    %c0_181 = arith.constant 0 : index
    %c0_182 = arith.constant 0 : index
    %407 = vector.load %arg5[%c4_180, %c0_181, %c0_182] : memref<6x256x64xbf16, #tpu.memory_space<vmem>>, vector<1x256x64xbf16>
    %408 = vector.shape_cast %407 : vector<1x256x64xbf16> to vector<256x64xbf16>
    %cst_183 = arith.constant dense<0.000000e+00> : vector<32x64xf32>
    %409 = tpu.matmul %369, %408, %cst_183 {dimension_numbers = #tpu.dot_dimension_numbers<[1], [0], [0], [1], [0, 0, 1, 1], [], []>} : vector<32x256xbf16>, vector<256x64xbf16>, vector<32x64xf32> -> vector<32x64xf32>
    %410 = arith.addf %406, %409 : vector<32x64xf32>
    %cst_184 = arith.constant dense<0.000000e+00> : vector<32x64xf32>
    %411 = tpu.matmul %372, %405, %cst_184 {dimension_numbers = #tpu.dot_dimension_numbers<[1], [0], [0], [1], [0, 0, 1, 1], [], []>} : vector<32x256xbf16>, vector<256x64xbf16>, vector<32x64xf32> -> vector<32x64xf32>
    %412 = arith.addf %410, %411 : vector<32x64xf32>
    %413 = arith.addf %403, %412 : vector<32x64xf32>
    %c2_185 = arith.constant 2 : index
    %c0_186 = arith.constant 0 : index
    %c0_187 = arith.constant 0 : index
    %414 = vector.load %arg5[%c2_185, %c0_186, %c0_187] : memref<6x256x64xbf16, #tpu.memory_space<vmem>>, vector<1x256x64xbf16>
    %415 = vector.shape_cast %414 : vector<1x256x64xbf16> to vector<256x64xbf16>
    %cst_188 = arith.constant dense<0.000000e+00> : vector<32x64xf32>
    %416 = tpu.matmul %369, %415, %cst_188 {dimension_numbers = #tpu.dot_dimension_numbers<[1], [0], [0], [1], [0, 0, 1, 1], [], []>} : vector<32x256xbf16>, vector<256x64xbf16>, vector<32x64xf32> -> vector<32x64xf32>
    %c5_189 = arith.constant 5 : index
    %c0_190 = arith.constant 0 : index
    %c0_191 = arith.constant 0 : index
    %417 = vector.load %arg5[%c5_189, %c0_190, %c0_191] : memref<6x256x64xbf16, #tpu.memory_space<vmem>>, vector<1x256x64xbf16>
    %418 = vector.shape_cast %417 : vector<1x256x64xbf16> to vector<256x64xbf16>
    %cst_192 = arith.constant dense<0.000000e+00> : vector<32x64xf32>
    %419 = tpu.matmul %369, %418, %cst_192 {dimension_numbers = #tpu.dot_dimension_numbers<[1], [0], [0], [1], [0, 0, 1, 1], [], []>} : vector<32x256xbf16>, vector<256x64xbf16>, vector<32x64xf32> -> vector<32x64xf32>
    %420 = arith.addf %416, %419 : vector<32x64xf32>
    %cst_193 = arith.constant dense<0.000000e+00> : vector<32x64xf32>
    %421 = tpu.matmul %372, %415, %cst_193 {dimension_numbers = #tpu.dot_dimension_numbers<[1], [0], [0], [1], [0, 0, 1, 1], [], []>} : vector<32x256xbf16>, vector<256x64xbf16>, vector<32x64xf32> -> vector<32x64xf32>
    %422 = arith.addf %420, %421 : vector<32x64xf32>
    %423 = tpu.iota {dimensions = array<i32: 0>} : vector<32x64xi32>
    %c16_i32_194 = arith.constant 16 : i32
    %c0_i32_195 = arith.constant 0 : i32
    %424 = arith.cmpi eq, %c16_i32_194, %c0_i32_195 : i32
    %c1_i32_196 = arith.constant 1 : i32
    %425 = arith.select %424, %c1_i32_196, %c16_i32_194 : i32
    %426 = vector.broadcast %425 : i32 to vector<32x64xi32>
    %427 = arith.remsi %423, %426 : vector<32x64xi32>
    %c0_i32_197 = arith.constant 0 : i32
    %428 = vector.broadcast %c0_i32_197 : i32 to vector<32x64xi32>
    %429 = arith.cmpi ne, %427, %428 : vector<32x64xi32>
    %c0_i32_198 = arith.constant 0 : i32
    %430 = vector.broadcast %c0_i32_198 : i32 to vector<32x64xi32>
    %431 = arith.cmpi slt, %427, %430 : vector<32x64xi32>
    %c0_i32_199 = arith.constant 0 : i32
    %432 = arith.cmpi slt, %425, %c0_i32_199 : i32
    %433 = vector.broadcast %432 : i1 to vector<32x64xi1>
    %434 = vector.broadcast %433 : vector<32x64xi1> to vector<32x64xi1>
    %435 = arith.xori %431, %434 : vector<32x64xi1>
    %436 = arith.andi %435, %429 : vector<32x64xi1>
    %437 = vector.broadcast %425 : i32 to vector<32x64xi32>
    %438 = arith.addi %427, %437 : vector<32x64xi32>
    %439 = arith.select %436, %438, %427 : vector<32x64xi1>, vector<32x64xi32>
    %c15_i32_200 = arith.constant 15 : i32
    %440 = vector.broadcast %c15_i32_200 : i32 to vector<32x64xi32>
    %441 = arith.cmpi eq, %439, %440 : vector<32x64xi32>
    %c31_i32_201 = arith.constant 31 : i32
    %442 = tpu.dynamic_rotate %422 by %c31_i32_201 dim 0 : vector<32x64xf32>, i32 -> vector<32x64xf32>
    %cst_202 = arith.constant 0.000000e+00 : f32
    %443 = vector.broadcast %cst_202 : f32 to vector<32x64xf32>
    %444 = arith.select %441, %443, %442 : vector<32x64xi1>, vector<32x64xf32>
    %445 = arith.addf %413, %444 : vector<32x64xf32>
    %446 = arith.addf %244, %445 : vector<32x64xf32>
    %447 = vector.extract_strided_slice %446 {offsets = [0, 0], sizes = [16, 64], strides = [1, 1]} : vector<32x64xf32> to vector<16x64xf32>
    %448 = vector.shape_cast %447 : vector<16x64xf32> to vector<1x16x64xf32>
    %cst_203 = arith.constant dense<0.000000e+00> : vector<1xf32>
    %449 = vector.multi_reduction <add>, %448, %cst_203 [1, 2] : vector<1x16x64xf32> to vector<1xf32>
    %450 = vector.shape_cast %449 : vector<1xf32> to vector<1x1x1xf32>
    %451 = vector.extract %450[0, 0, 0] : f32 from vector<1x1x1xf32>
    %cst_204 = arith.constant 9.765625E-4 : f32
    %452 = arith.mulf %451, %cst_204 : f32
    %453 = arith.mulf %447, %447 : vector<16x64xf32>
    %454 = vector.shape_cast %453 : vector<16x64xf32> to vector<1x16x64xf32>
    %cst_205 = arith.constant dense<0.000000e+00> : vector<1xf32>
    %455 = vector.multi_reduction <add>, %454, %cst_205 [1, 2] : vector<1x16x64xf32> to vector<1xf32>
    %456 = vector.shape_cast %455 : vector<1xf32> to vector<1x1x1xf32>
    %457 = vector.extract %456[0, 0, 0] : f32 from vector<1x1x1xf32>
    %cst_206 = arith.constant 9.765625E-4 : f32
    %458 = arith.mulf %457, %cst_206 : f32
    %459 = arith.mulf %452, %452 : f32
    %460 = arith.subf %458, %459 : f32
    %461 = vector.broadcast %452 : f32 to vector<16x64xf32>
    %462 = arith.subf %447, %461 : vector<16x64xf32>
    %cst_207 = arith.constant 9.99999974E-6 : f32
    %463 = arith.addf %460, %cst_207 : f32
    %464 = math.rsqrt %463 : f32
    %465 = vector.broadcast %464 : f32 to vector<16x64xf32>
    %466 = arith.mulf %462, %465 : vector<16x64xf32>
    %467 = vector.extract_strided_slice %446 {offsets = [16, 0], sizes = [16, 64], strides = [1, 1]} : vector<32x64xf32> to vector<16x64xf32>
    %468 = vector.shape_cast %467 : vector<16x64xf32> to vector<1x16x64xf32>
    %cst_208 = arith.constant dense<0.000000e+00> : vector<1xf32>
    %469 = vector.multi_reduction <add>, %468, %cst_208 [1, 2] : vector<1x16x64xf32> to vector<1xf32>
    %470 = vector.shape_cast %469 : vector<1xf32> to vector<1x1x1xf32>
    %471 = vector.extract %470[0, 0, 0] : f32 from vector<1x1x1xf32>
    %cst_209 = arith.constant 9.765625E-4 : f32
    %472 = arith.mulf %471, %cst_209 : f32
    %473 = arith.mulf %467, %467 : vector<16x64xf32>
    %474 = vector.shape_cast %473 : vector<16x64xf32> to vector<1x16x64xf32>
    %cst_210 = arith.constant dense<0.000000e+00> : vector<1xf32>
    %475 = vector.multi_reduction <add>, %474, %cst_210 [1, 2] : vector<1x16x64xf32> to vector<1xf32>
    %476 = vector.shape_cast %475 : vector<1xf32> to vector<1x1x1xf32>
    %477 = vector.extract %476[0, 0, 0] : f32 from vector<1x1x1xf32>
    %cst_211 = arith.constant 9.765625E-4 : f32
    %478 = arith.mulf %477, %cst_211 : f32
    %479 = arith.mulf %472, %472 : f32
    %480 = arith.subf %478, %479 : f32
    %481 = vector.broadcast %472 : f32 to vector<16x64xf32>
    %482 = arith.subf %467, %481 : vector<16x64xf32>
    %cst_212 = arith.constant 9.99999974E-6 : f32
    %483 = arith.addf %480, %cst_212 : f32
    %484 = math.rsqrt %483 : f32
    %485 = vector.broadcast %484 : f32 to vector<16x64xf32>
    %486 = arith.mulf %482, %485 : vector<16x64xf32>
    %487 = tpu.concatenate %466, %486 in 0 : vector<16x64xf32>, vector<16x64xf32> -> vector<32x64xf32>
    %488 = vector.shape_cast %487 : vector<32x64xf32> to vector<2x16x64xf32>
    %c0_213 = arith.constant 0 : index
    %c0_214 = arith.constant 0 : index
    %c0_215 = arith.constant 0 : index
    %489 = vector.load %arg6[%c0_213, %c0_214, %c0_215] : memref<2x16x64xf32, #tpu.memory_space<vmem>>, vector<2x16x64xf32>
    tpu.vector_store %arg6[%c0_213, %c0_214, %c0_215], %488 {strides = array<i32>} : memref<2x16x64xf32, #tpu.memory_space<vmem>>, vector<2x16x64xf32>,
    return
  }
  func.func @transform_0(%arg0: i32) -> (i32, i32, i32) {
    %c0_i32 = arith.constant 0 : i32
    %c0_i32_0 = arith.constant 0 : i32
    %c0_i32_1 = arith.constant 0 : i32
    return %arg0, %c0_i32, %c0_i32_0 : i32, i32, i32
  }
  func.func @transform_1(%arg0: i32) -> (i32, i32, i32) {
    %c0_i32 = arith.constant 0 : i32
    %c0_i32_0 = arith.constant 0 : i32
    %c0_i32_1 = arith.constant 0 : i32
    %c0_i32_2 = arith.constant 0 : i32
    return %c0_i32, %c0_i32_0, %c0_i32_1 : i32, i32, i32
  }
  func.func @transform_2(%arg0: i32) -> (i32, i32, i32) {
    %c0_i32 = arith.constant 0 : i32
    %c0_i32_0 = arith.constant 0 : i32
    %c0_i32_1 = arith.constant 0 : i32
    %c0_i32_2 = arith.constant 0 : i32
    return %c0_i32, %c0_i32_0, %c0_i32_1 : i32, i32, i32
  }
  func.func @transform_3(%arg0: i32) -> (i32, i32, i32) {
    %c0_i32 = arith.constant 0 : i32
    %c0_i32_0 = arith.constant 0 : i32
    %c0_i32_1 = arith.constant 0 : i32
    %c0_i32_2 = arith.constant 0 : i32
    return %c0_i32, %c0_i32_0, %c0_i32_1 : i32, i32, i32
  }
  func.func @transform_4(%arg0: i32) -> (i32, i32, i32) {
    %c0_i32 = arith.constant 0 : i32
    %c0_i32_0 = arith.constant 0 : i32
    %c0_i32_1 = arith.constant 0 : i32
    %c0_i32_2 = arith.constant 0 : i32
    return %c0_i32, %c0_i32_0, %c0_i32_1 : i32, i32, i32
  }
  func.func @transform_5(%arg0: i32) -> (i32, i32, i32) {
    %c0_i32 = arith.constant 0 : i32
    %c0_i32_0 = arith.constant 0 : i32
    %c0_i32_1 = arith.constant 0 : i32
    return %arg0, %c0_i32, %c0_i32_0 : i32, i32, i32
  }
}

</mosaic_0001>

<llo_original>
// kernel: tpu_custom_call.1
$region0: #{tpu_custom_call.1}
  #allocation0 [shape = 'u32[]', space=smem, size = 0x4, offset = 0x4, fixed_abs, tag = 'smem constant byte address 0x4 - core index']
  #allocation1 [shape = 'u32[72,128]{1,0:T(1,128)}', space=vmem, size = 0x9000, scoped, tag = 'internal scratch']
  %s0 = inlined_call_operand.vmem [shape: f32[2,16,64], index: 0, kind: input, shape index: {}]
  %s1 = inlined_call_operand.vmem [shape: bf16[6,64,256], index: 1, kind: input, shape index: {}]
  %s2 = inlined_call_operand.vmem [shape: bf16[6,256,64], index: 2, kind: input, shape index: {}]
  %s3 = inlined_call_operand.vmem [shape: bf16[6,64,256], index: 3, kind: input, shape index: {}]
  %s4 = inlined_call_operand.vmem [shape: bf16[6,256,64], index: 4, kind: input, shape index: {}]
  %s5 = inlined_call_operand.hbm [shape: f32[2,16,64], index: 5, kind: output, shape index: {}]
  %s6 = sld [smem:[#allocation0]]
  $region30: #{tpu_custom_call.1} parent=0
    _
  %s8 = ssub.s32 1, %s6
  %s9 = scalar_select 0, %s8, %s6
  $region1: #{tpu_custom_call.1} parent=0
    #allocation2 [shape = 'u8[16384]{0}', space=vmem, size = 0x4000, scoped, tag = 'output window, operand 0, single buffered']
    #allocation3 [shape = 's32[1]{0}', space=sflag, size = 0x4, scoped, tag = 'scoped memory for tpu_custom_call.1']
    %10 = vsyncpa [#allocation3], 0
    // Predicated region
    $region2: #{tpu_custom_call.1} parent=1 // pred_check
      _
    $region3: #{tpu_custom_call.1} parent=1 // pred_check_branch
      %12 = sbr.rel (0) target = $region5
    $region4: #{tpu_custom_call.1} parent=1 // pred_region
      _
    $region5: #{tpu_custom_call.1} parent=1 // pred_fallthru
      _
    // Predicated region
    $region6: #{tpu_custom_call.1} parent=1 // pred_check
      _
    $region7: #{tpu_custom_call.1} parent=1 // pred_check_branch
      %14 = sbr.rel (0) target = $region9
    $region8: #{tpu_custom_call.1} parent=1 // pred_region
      _
    $region9: #{tpu_custom_call.1} parent=1 // pred_fallthru
      _
    // Predicated region
    $region10: #{tpu_custom_call.1} parent=1 // pred_check
      _
    $region11: #{tpu_custom_call.1} parent=1 // pred_check_branch
      %16 = sbr.rel (0) target = $region13
    $region12: #{tpu_custom_call.1} parent=1 // pred_region
      _
    $region13: #{tpu_custom_call.1} parent=1 // pred_fallthru
      _
    // Predicated region
    $region14: #{tpu_custom_call.1} parent=1 // pred_check
      _
    $region15: #{tpu_custom_call.1} parent=1 // pred_check_branch
      %18 = sbr.rel (0) target = $region17
    $region16: #{tpu_custom_call.1} parent=1 // pred_region
      _
    $region17: #{tpu_custom_call.1} parent=1 // pred_fallthru
      _
    // Predicated region
    $region18: #{tpu_custom_call.1} parent=1 // pred_check
      _
    $region19: #{tpu_custom_call.1} parent=1 // pred_check_branch
      %20 = sbr.rel (0) target = $region21
    $region20: #{tpu_custom_call.1} parent=1 // pred_region
      _
    $region21: #{tpu_custom_call.1} parent=1 // pred_fallthru
      _
    %v22 = vld [vmem:[%s0] sm:$0xff]
    %v23 = vld [vmem:[%s0 + $0x8] sm:$0xff]
    %v24 = vld [vmem:[%s0 + $0x10] sm:$0xff]
    %v25 = vld [vmem:[%s0 + $0x18] sm:$0xff]
    %v26 = vpack.c.bf16 %v22, %v22
    %v27 = vpack.c.bf16 %v23, %v23
    %v28 = vpack.c.bf16 %v24, %v24
    %v29 = vpack.c.bf16 %v25, %v25
    %v30 = vunpack.c.l.bf16 %v26
    %v31 = vunpack.c.l.bf16 %v27
    %v32 = vunpack.c.l.bf16 %v28
    %v33 = vunpack.c.l.bf16 %v29
    %v34 = vsub.f32 %v22, %v30
    %v35 = vsub.f32 %v23, %v31
    %v36 = vsub.f32 %v24, %v32
    %v37 = vsub.f32 %v25, %v33
    %v38 = vpack.c.bf16 %v35, %v34
    %v39 = vpack.c.bf16 %v37, %v36
    %v40 = vld [vmem:[%s1] sm:$0xff]
    %v41 = vld [vmem:[%s1 + $0x8] sm:$0xff]
    %v42 = vld [vmem:[%s1 + $0x10] sm:$0xff]
    %v43 = vld [vmem:[%s1 + $0x18] sm:$0xff]
    %v44 = vld [vmem:[%s1 + $0x20] sm:$0xff]
    %v45 = vld [vmem:[%s1 + $0x28] sm:$0xff]
    %v46 = vld [vmem:[%s1 + $0x30] sm:$0xff]
    %v47 = vld [vmem:[%s1 + $0x38] sm:$0xff]
    %s48 = scalar_lea.vmem %s1, 192
    %v49 = vld [vmem:[%s48] sm:$0xff]
    %v50 = vld [vmem:[%s48 + $0x8] sm:$0xff]
    %v51 = vld [vmem:[%s48 + $0x10] sm:$0xff]
    %v52 = vld [vmem:[%s48 + $0x18] sm:$0xff]
    %v53 = vld [vmem:[%s48 + $0x20] sm:$0xff]
    %v54 = vld [vmem:[%s48 + $0x28] sm:$0xff]
    %v55 = vld [vmem:[%s48 + $0x30] sm:$0xff]
    %v56 = vld [vmem:[%s48 + $0x38] sm:$0xff]
    %v61 = vunpack.c.l.b16 %v26
    %v62 = vunpack.c.l.b16 %v27
    %v63 = vunpack.c.l.b16 %v28
    %v64 = vunpack.c.l.b16 %v29
    %v65 = vpack.c.b16 %v62, %v61
    %v66 = vpack.c.b16 %v64, %v63
    %v75 = vunpack.c.l.b16 %v49
    %v76 = vunpack.c.h.b16 %v49
    %v77 = vunpack.c.l.b16 %v50
    %v78 = vunpack.c.h.b16 %v50
    %v79 = vunpack.c.l.b16 %v51
    %v80 = vunpack.c.h.b16 %v51
    %v81 = vunpack.c.l.b16 %v52
    %v82 = vunpack.c.h.b16 %v52
    %v83 = vunpack.c.l.b16 %v53
    %v84 = vunpack.c.h.b16 %v53
    %v85 = vunpack.c.l.b16 %v54
    %v86 = vunpack.c.h.b16 %v54
    %v87 = vunpack.c.l.b16 %v55
    %v88 = vunpack.c.h.b16 %v55
    %v89 = vunpack.c.l.b16 %v56
    %v90 = vunpack.c.h.b16 %v56
    %v91 = vpack.c.b16 %v77, %v75
    %v92 = vpack.c.b16 %v78, %v76
    %v93 = vpack.c.b16 %v81, %v79
    %v94 = vpack.c.b16 %v82, %v80
    %v95 = vpack.c.b16 %v85, %v83
    %v96 = vpack.c.b16 %v86, %v84
    %v97 = vpack.c.b16 %v89, %v87
    %v98 = vpack.c.b16 %v90, %v88
    %vm107 = vcmask 523264
    %v109 = vsel %vm107, %v65, 0
    %v112 = vsel %vm107, %v66, 0
    %114 = vmatpush.bf16.msra.mxu0 0
    %115 = vmatpush.bf16.msra.mxu0 0
    %116 = vmatpush.bf16.msra.mxu0 0
    %117 = vmatpush.bf16.msra.mxu0 0
    %118 = vmatpush.bf16.msra.mxu0 %v97
    %119 = vmatpush.bf16.msra.mxu0 %v95
    %120 = vmatpush.bf16.msra.mxu0 %v93
    %121 = vmatpush.bf16.msra.mxu0 %v91
    %122 = vmatmul.bf16.gmra.mxu0 %v109
    %v123 = vpop.f32.mrf.mxu0
    %v124 = vadd.f32 0.0, %v123
    %v125 = vpop.f32.mrf.mxu0
    %v126 = vadd.f32 0.0, %v125
    %127 = vmatmul.bf16.gmra.mxu0 %v112
    %v128 = vpop.f32.mrf.mxu0
    %v129 = vadd.f32 0.0, %v128
    %v130 = vpop.f32.mrf.mxu0
    %v131 = vadd.f32 0.0, %v130
    %132 = vdwg.mxu0
    %133 = vmatpush.bf16.msra.mxu0 0
    %134 = vmatpush.bf16.msra.mxu0 0
    %135 = vmatpush.bf16.msra.mxu0 0
    %136 = vmatpush.bf16.msra.mxu0 0
    %137 = vmatpush.bf16.msra.mxu0 %v98
    %138 = vmatpush.bf16.msra.mxu0 %v96
    %139 = vmatpush.bf16.msra.mxu0 %v94
    %140 = vmatpush.bf16.msra.mxu0 %v92
    %141 = vmatmul.bf16.gmra.mxu0 %v109
    %v142 = vpop.f32.mrf.mxu0
    %v143 = vadd.f32 0.0, %v142
    %v144 = vpop.f32.mrf.mxu0
    %v145 = vadd.f32 0.0, %v144
    %146 = vmatmul.bf16.gmra.mxu0 %v112
    %v147 = vpop.f32.mrf.mxu0
    %v148 = vadd.f32 0.0, %v147
    %v149 = vpop.f32.mrf.mxu0
    %v150 = vadd.f32 0.0, %v149
    %151 = vdwg.mxu0
    %v160 = vunpack.c.l.b16 %v40
    %v161 = vunpack.c.h.b16 %v40
    %v162 = vunpack.c.l.b16 %v41
    %v163 = vunpack.c.h.b16 %v41
    %v164 = vunpack.c.l.b16 %v42
    %v165 = vunpack.c.h.b16 %v42
    %v166 = vunpack.c.l.b16 %v43
    %v167 = vunpack.c.h.b16 %v43
    %v168 = vunpack.c.l.b16 %v44
    %v169 = vunpack.c.h.b16 %v44
    %v170 = vunpack.c.l.b16 %v45
    %v171 = vunpack.c.h.b16 %v45
    %v172 = vunpack.c.l.b16 %v46
    %v173 = vunpack.c.h.b16 %v46
    %v174 = vunpack.c.l.b16 %v47
    %v175 = vunpack.c.h.b16 %v47
    %v176 = vpack.c.b16 %v162, %v160
    %v177 = vpack.c.b16 %v163, %v161
    %v178 = vpack.c.b16 %v166, %v164
    %v179 = vpack.c.b16 %v167, %v165
    %v180 = vpack.c.b16 %v170, %v168
    %v181 = vpack.c.b16 %v171, %v169
    %v182 = vpack.c.b16 %v174, %v172
    %v183 = vpack.c.b16 %v175, %v173
    %192 = vmatpush.bf16.msra.mxu0 0
    %193 = vmatpush.bf16.msra.mxu0 0
    %194 = vmatpush.bf16.msra.mxu0 0
    %195 = vmatpush.bf16.msra.mxu0 0
    %196 = vmatpush.bf16.msra.mxu0 %v182
    %197 = vmatpush.bf16.msra.mxu0 %v180
    %198 = vmatpush.bf16.msra.mxu0 %v178
    %199 = vmatpush.bf16.msra.mxu0 %v176
    %200 = vmatmul.bf16.gmra.mxu0 %v109
    %v201 = vpop.f32.mrf.mxu0
    %v202 = vadd.f32 %v124, %v201
    %v203 = vpop.f32.mrf.mxu0
    %v204 = vadd.f32 %v126, %v203
    %205 = vmatmul.bf16.gmra.mxu0 %v112
    %v206 = vpop.f32.mrf.mxu0
    %v207 = vadd.f32 %v129, %v206
    %v208 = vpop.f32.mrf.mxu0
    %v209 = vadd.f32 %v131, %v208
    %210 = vdwg.mxu0
    %211 = vmatpush.bf16.msra.mxu0 0
    %212 = vmatpush.bf16.msra.mxu0 0
    %213 = vmatpush.bf16.msra.mxu0 0
    %214 = vmatpush.bf16.msra.mxu0 0
    %215 = vmatpush.bf16.msra.mxu0 %v183
    %216 = vmatpush.bf16.msra.mxu0 %v181
    %217 = vmatpush.bf16.msra.mxu0 %v179
    %218 = vmatpush.bf16.msra.mxu0 %v177
    %219 = vmatmul.bf16.gmra.mxu0 %v109
    %v220 = vpop.f32.mrf.mxu0
    %v221 = vadd.f32 %v143, %v220
    %v222 = vpop.f32.mrf.mxu0
    %v223 = vadd.f32 %v145, %v222
    %224 = vmatmul.bf16.gmra.mxu0 %v112
    %v225 = vpop.f32.mrf.mxu0
    %v226 = vadd.f32 %v148, %v225
    %v227 = vpop.f32.mrf.mxu0
    %v228 = vadd.f32 %v150, %v227
    %229 = vdwg.mxu0
    %v231 = vsel %vm107, %v38, 0
    %v234 = vsel %vm107, %v39, 0
    %236 = vmatpush.bf16.msra.mxu0 0
    %237 = vmatpush.bf16.msra.mxu0 0
    %238 = vmatpush.bf16.msra.mxu0 0
    %239 = vmatpush.bf16.msra.mxu0 0
    %240 = vmatpush.bf16.msra.mxu0 %v182
    %241 = vmatpush.bf16.msra.mxu0 %v180
    %242 = vmatpush.bf16.msra.mxu0 %v178
    %243 = vmatpush.bf16.msra.mxu0 %v176
    %244 = vmatmul.bf16.gmra.mxu0 %v231
    %v245 = vpop.f32.mrf.mxu0
    %v246 = vadd.f32 0.0, %v245
    %v247 = vpop.f32.mrf.mxu0
    %v248 = vadd.f32 0.0, %v247
    %249 = vmatmul.bf16.gmra.mxu0 %v234
    %v250 = vpop.f32.mrf.mxu0
    %v251 = vadd.f32 0.0, %v250
    %v252 = vpop.f32.mrf.mxu0
    %v253 = vadd.f32 0.0, %v252
    %254 = vdwg.mxu0
    %255 = vmatpush.bf16.msra.mxu0 0
    %256 = vmatpush.bf16.msra.mxu0 0
    %257 = vmatpush.bf16.msra.mxu0 0
    %258 = vmatpush.bf16.msra.mxu0 0
    %259 = vmatpush.bf16.msra.mxu0 %v183
    %260 = vmatpush.bf16.msra.mxu0 %v181
    %261 = vmatpush.bf16.msra.mxu0 %v179
    %262 = vmatpush.bf16.msra.mxu0 %v177
    %263 = vmatmul.bf16.gmra.mxu0 %v231
    %v264 = vpop.f32.mrf.mxu0
    %v265 = vadd.f32 0.0, %v264
    %v266 = vpop.f32.mrf.mxu0
    %v267 = vadd.f32 0.0, %v266
    %268 = vmatmul.bf16.gmra.mxu0 %v234
    %v269 = vpop.f32.mrf.mxu0
    %v270 = vadd.f32 0.0, %v269
    %v271 = vpop.f32.mrf.mxu0
    %v272 = vadd.f32 0.0, %v271
    %273 = vdwg.mxu0
    %v274 = vadd.f32 %v202, %v246
    %v275 = vadd.f32 %v221, %v265
    %v276 = vadd.f32 %v204, %v248
    %v277 = vadd.f32 %v223, %v267
    %v278 = vadd.f32 %v207, %v251
    %v279 = vadd.f32 %v226, %v270
    %v280 = vadd.f32 %v209, %v253
    %v281 = vadd.f32 %v228, %v272
    %v282 = vlaneseq
    %v283 = vshrl.u32 %v282, 7
    %v284 = vadd.s32 %v283, 8
    %v285 = vadd.s32 %v283, 16
    %v286 = vadd.s32 %v283, 24
    %vm287 = vcmp.lt.s32.totalorder %v283, 0
    %v288 = vsub.s32 0, %v283
    %v289 = vsel %vm287, %v288, %v283
    %v290 = vshrl.u32 %v289, 4
    %v291 = vand.u32 %v289, 15
    %v292 = vsub.s32 0, %v291
    %v293 = vsel %vm287, %v292, %v291
    %vm294 = vcmp.lt.s32.totalorder %v284, 0
    %v295 = vsub.s32 0, %v284
    %v296 = vsel %vm294, %v295, %v284
    %v297 = vshrl.u32 %v296, 4
    %v298 = vand.u32 %v296, 15
    %v299 = vsub.s32 0, %v298
    %v300 = vsel %vm294, %v299, %v298
    %vm301 = vcmp.lt.s32.totalorder %v285, 0
    %v302 = vsub.s32 0, %v285
    %v303 = vsel %vm301, %v302, %v285
    %v304 = vshrl.u32 %v303, 4
    %v305 = vand.u32 %v303, 15
    %v306 = vsub.s32 0, %v305
    %v307 = vsel %vm301, %v306, %v305
    %vm308 = vcmp.lt.s32.totalorder %v286, 0
    %v309 = vsub.s32 0, %v286
    %v310 = vsel %vm308, %v309, %v286
    %v311 = vshrl.u32 %v310, 4
    %v312 = vand.u32 %v310, 15
    %v313 = vsub.s32 0, %v312
    %v314 = vsel %vm308, %v313, %v312
    %vm315 = vcmp.ne.s32.totalorder %v293, 0
    %vm316 = vcmp.ne.s32.totalorder %v300, 0
    %vm317 = vcmp.ne.s32.totalorder %v307, 0
    %vm318 = vcmp.ne.s32.totalorder %v314, 0
    %vm319 = vcmp.lt.s32.totalorder %v293, 0
    %vm320 = vcmp.lt.s32.totalorder %v300, 0
    %vm321 = vcmp.lt.s32.totalorder %v307, 0
    %vm322 = vcmp.lt.s32.totalorder %v314, 0
    %vm323 = vmand %vm319, %vm315
    %vm324 = vmand %vm320, %vm316
    %vm325 = vmand %vm321, %vm317
    %vm326 = vmand %vm322, %vm318
    %v327 = vadd.s32 %v293, 16
    %v328 = vadd.s32 %v300, 16
    %v329 = vadd.s32 %v307, 16
    %v330 = vadd.s32 %v314, 16
    %v331 = vsel %vm323, %v327, %v293
    %v332 = vsel %vm324, %v328, %v300
    %v333 = vsel %vm325, %v329, %v307
    %v334 = vsel %vm326, %v330, %v314
    %vm335 = vcmp.eq.s32.totalorder %v331, 0
    %vm336 = vcmp.eq.s32.totalorder %v332, 0
    %vm337 = vcmp.eq.s32.totalorder %v333, 0
    %vm338 = vcmp.eq.s32.totalorder %v334, 0
    %v339 = vrot.slane %v274, 7
    %v340 = vrot.slane %v275, 7
    %v341 = vrot.slane %v276, 7
    %v342 = vrot.slane %v277, 7
    %v343 = vrot.slane %v278, 7
    %v344 = vrot.slane %v279, 7
    %v345 = vrot.slane %v280, 7
    %v346 = vrot.slane %v281, 7
    %vm347 = vcmp.lt.s32.totalorder %v283, 1
    %v348 = vsel %vm347, %v343, %v345
    %v349 = vsel %vm347, %v344, %v346
    %v350 = vsel %vm347, %v341, %v343
    %v351 = vsel %vm347, %v342, %v344
    %v352 = vsel %vm347, %v339, %v341
    %v353 = vsel %vm347, %v340, %v342
    %v354 = vsel %vm347, %v345, %v339
    %v355 = vsel %vm347, %v346, %v340
    %v356 = vsel %vm335, 0.0, %v354
    %v357 = vsel %vm335, 0.0, %v355
    %v358 = vsel %vm336, 0.0, %v352
    %v359 = vsel %vm336, 0.0, %v353
    %v360 = vsel %vm337, 0.0, %v350
    %v361 = vsel %vm337, 0.0, %v351
    %v362 = vsel %vm338, 0.0, %v348
    %v363 = vsel %vm338, 0.0, %v349
    %s364 = scalar_lea.vmem %s1, 64
    %v365 = vld [vmem:[%s364] sm:$0xff]
    %v366 = vld [vmem:[%s364 + $0x8] sm:$0xff]
    %v367 = vld [vmem:[%s364 + $0x10] sm:$0xff]
    %v368 = vld [vmem:[%s364 + $0x18] sm:$0xff]
    %v369 = vld [vmem:[%s364 + $0x20] sm:$0xff]
    %v370 = vld [vmem:[%s364 + $0x28] sm:$0xff]
    %v371 = vld [vmem:[%s364 + $0x30] sm:$0xff]
    %v372 = vld [vmem:[%s364 + $0x38] sm:$0xff]
    %s373 = scalar_lea.vmem %s1, 256
    %v374 = vld [vmem:[%s373] sm:$0xff]
    %v375 = vld [vmem:[%s373 + $0x8] sm:$0xff]
    %v376 = vld [vmem:[%s373 + $0x10] sm:$0xff]
    %v377 = vld [vmem:[%s373 + $0x18] sm:$0xff]
    %v378 = vld [vmem:[%s373 + $0x20] sm:$0xff]
    %v379 = vld [vmem:[%s373 + $0x28] sm:$0xff]
    %v380 = vld [vmem:[%s373 + $0x30] sm:$0xff]
    %v381 = vld [vmem:[%s373 + $0x38] sm:$0xff]
    %v390 = vunpack.c.l.b16 %v374
    %v391 = vunpack.c.h.b16 %v374
    %v392 = vunpack.c.l.b16 %v375
    %v393 = vunpack.c.h.b16 %v375
    %v394 = vunpack.c.l.b16 %v376
    %v395 = vunpack.c.h.b16 %v376
    %v396 = vunpack.c.l.b16 %v377
    %v397 = vunpack.c.h.b16 %v377
    %v398 = vunpack.c.l.b16 %v378
    %v399 = vunpack.c.h.b16 %v378
    %v400 = vunpack.c.l.b16 %v379
    %v401 = vunpack.c.h.b16 %v379
    %v402 = vunpack.c.l.b16 %v380
    %v403 = vunpack.c.h.b16 %v380
    %v404 = vunpack.c.l.b16 %v381
    %v405 = vunpack.c.h.b16 %v381
    %v406 = vpack.c.b16 %v392, %v390
    %v407 = vpack.c.b16 %v393, %v391
    %v408 = vpack.c.b16 %v396, %v394
    %v409 = vpack.c.b16 %v397, %v395
    %v410 = vpack.c.b16 %v400, %v398
    %v411 = vpack.c.b16 %v401, %v399
    %v412 = vpack.c.b16 %v404, %v402
    %v413 = vpack.c.b16 %v405, %v403
    %422 = vmatpush.bf16.msra.mxu0 0
    %423 = vmatpush.bf16.msra.mxu0 0
    %424 = vmatpush.bf16.msra.mxu0 0
    %425 = vmatpush.bf16.msra.mxu0 0
    %426 = vmatpush.bf16.msra.mxu0 %v412
    %427 = vmatpush.bf16.msra.mxu0 %v410
    %428 = vmatpush.bf16.msra.mxu0 %v408
    %429 = vmatpush.bf16.msra.mxu0 %v406
    %430 = vmatmul.bf16.gmra.mxu0 %v109
    %v431 = vpop.f32.mrf.mxu0
    %v432 = vadd.f32 0.0, %v431
    %v433 = vpop.f32.mrf.mxu0
    %v434 = vadd.f32 0.0, %v433
    %435 = vmatmul.bf16.gmra.mxu0 %v112
    %v436 = vpop.f32.mrf.mxu0
    %v437 = vadd.f32 0.0, %v436
    %v438 = vpop.f32.mrf.mxu0
    %v439 = vadd.f32 0.0, %v438
    %440 = vdwg.mxu0
    %441 = vmatpush.bf16.msra.mxu0 0
    %442 = vmatpush.bf16.msra.mxu0 0
    %443 = vmatpush.bf16.msra.mxu0 0
    %444 = vmatpush.bf16.msra.mxu0 0
    %445 = vmatpush.bf16.msra.mxu0 %v413
    %446 = vmatpush.bf16.msra.mxu0 %v411
    %447 = vmatpush.bf16.msra.mxu0 %v409
    %448 = vmatpush.bf16.msra.mxu0 %v407
    %449 = vmatmul.bf16.gmra.mxu0 %v109
    %v450 = vpop.f32.mrf.mxu0
    %v451 = vadd.f32 0.0, %v450
    %v452 = vpop.f32.mrf.mxu0
    %v453 = vadd.f32 0.0, %v452
    %454 = vmatmul.bf16.gmra.mxu0 %v112
    %v455 = vpop.f32.mrf.mxu0
    %v456 = vadd.f32 0.0, %v455
    %v457 = vpop.f32.mrf.mxu0
    %v458 = vadd.f32 0.0, %v457
    %459 = vdwg.mxu0
    %v468 = vunpack.c.l.b16 %v365
    %v469 = vunpack.c.h.b16 %v365
    %v470 = vunpack.c.l.b16 %v366
    %v471 = vunpack.c.h.b16 %v366
    %v472 = vunpack.c.l.b16 %v367
    %v473 = vunpack.c.h.b16 %v367
    %v474 = vunpack.c.l.b16 %v368
    %v475 = vunpack.c.h.b16 %v368
    %v476 = vunpack.c.l.b16 %v369
    %v477 = vunpack.c.h.b16 %v369
    %v478 = vunpack.c.l.b16 %v370
    %v479 = vunpack.c.h.b16 %v370
    %v480 = vunpack.c.l.b16 %v371
    %v481 = vunpack.c.h.b16 %v371
    %v482 = vunpack.c.l.b16 %v372
    %v483 = vunpack.c.h.b16 %v372
    %v484 = vpack.c.b16 %v470, %v468
    %v485 = vpack.c.b16 %v471, %v469
    %v486 = vpack.c.b16 %v474, %v472
    %v487 = vpack.c.b16 %v475, %v473
    %v488 = vpack.c.b16 %v478, %v476
    %v489 = vpack.c.b16 %v479, %v477
    %v490 = vpack.c.b16 %v482, %v480
    %v491 = vpack.c.b16 %v483, %v481
    %500 = vmatpush.bf16.msra.mxu0 0
    %501 = vmatpush.bf16.msra.mxu0 0
    %502 = vmatpush.bf16.msra.mxu0 0
    %503 = vmatpush.bf16.msra.mxu0 0
    %504 = vmatpush.bf16.msra.mxu0 %v490
    %505 = vmatpush.bf16.msra.mxu0 %v488
    %506 = vmatpush.bf16.msra.mxu0 %v486
    %507 = vmatpush.bf16.msra.mxu0 %v484
    %508 = vmatmul.bf16.gmra.mxu0 %v109
    %v509 = vpop.f32.mrf.mxu0
    %v510 = vadd.f32 %v432, %v509
    %v511 = vpop.f32.mrf.mxu0
    %v512 = vadd.f32 %v434, %v511
    %513 = vmatmul.bf16.gmra.mxu0 %v112
    %v514 = vpop.f32.mrf.mxu0
    %v515 = vadd.f32 %v437, %v514
    %v516 = vpop.f32.mrf.mxu0
    %v517 = vadd.f32 %v439, %v516
    %518 = vdwg.mxu0
    %519 = vmatpush.bf16.msra.mxu0 0
    %520 = vmatpush.bf16.msra.mxu0 0
    %521 = vmatpush.bf16.msra.mxu0 0
    %522 = vmatpush.bf16.msra.mxu0 0
    %523 = vmatpush.bf16.msra.mxu0 %v491
    %524 = vmatpush.bf16.msra.mxu0 %v489
    %525 = vmatpush.bf16.msra.mxu0 %v487
    %526 = vmatpush.bf16.msra.mxu0 %v485
    %527 = vmatmul.bf16.gmra.mxu0 %v109
    %v528 = vpop.f32.mrf.mxu0
    %v529 = vadd.f32 %v451, %v528
    %v530 = vpop.f32.mrf.mxu0
    %v531 = vadd.f32 %v453, %v530
    %532 = vmatmul.bf16.gmra.mxu0 %v112
    %v533 = vpop.f32.mrf.mxu0
    %v534 = vadd.f32 %v456, %v533
    %v535 = vpop.f32.mrf.mxu0
    %v536 = vadd.f32 %v458, %v535
    %537 = vdwg.mxu0
    %538 = vmatpush.bf16.msra.mxu0 0
    %539 = vmatpush.bf16.msra.mxu0 0
    %540 = vmatpush.bf16.msra.mxu0 0
    %541 = vmatpush.bf16.msra.mxu0 0
    %542 = vmatpush.bf16.msra.mxu0 %v490
    %543 = vmatpush.bf16.msra.mxu0 %v488
    %544 = vmatpush.bf16.msra.mxu0 %v486
    %545 = vmatpush.bf16.msra.mxu0 %v484
    %546 = vmatmul.bf16.gmra.mxu0 %v231
    %v547 = vpop.f32.mrf.mxu0
    %v548 = vadd.f32 0.0, %v547
    %v549 = vpop.f32.mrf.mxu0
    %v550 = vadd.f32 0.0, %v549
    %551 = vmatmul.bf16.gmra.mxu0 %v234
    %v552 = vpop.f32.mrf.mxu0
    %v553 = vadd.f32 0.0, %v552
    %v554 = vpop.f32.mrf.mxu0
    %v555 = vadd.f32 0.0, %v554
    %556 = vdwg.mxu0
    %557 = vmatpush.bf16.msra.mxu0 0
    %558 = vmatpush.bf16.msra.mxu0 0
    %559 = vmatpush.bf16.msra.mxu0 0
    %560 = vmatpush.bf16.msra.mxu0 0
    %561 = vmatpush.bf16.msra.mxu0 %v491
    %562 = vmatpush.bf16.msra.mxu0 %v489
    %563 = vmatpush.bf16.msra.mxu0 %v487
    %564 = vmatpush.bf16.msra.mxu0 %v485
    %565 = vmatmul.bf16.gmra.mxu0 %v231
    %v566 = vpop.f32.mrf.mxu0
    %v567 = vadd.f32 0.0, %v566
    %v568 = vpop.f32.mrf.mxu0
    %v569 = vadd.f32 0.0, %v568
    %570 = vmatmul.bf16.gmra.mxu0 %v234
    %v571 = vpop.f32.mrf.mxu0
    %v572 = vadd.f32 0.0, %v571
    %v573 = vpop.f32.mrf.mxu0
    %v574 = vadd.f32 0.0, %v573
    %575 = vdwg.mxu0
    %v576 = vadd.f32 %v510, %v548
    %v577 = vadd.f32 %v529, %v567
    %v578 = vadd.f32 %v512, %v550
    %v579 = vadd.f32 %v531, %v569
    %v580 = vadd.f32 %v515, %v553
    %v581 = vadd.f32 %v534, %v572
    %v582 = vadd.f32 %v517, %v555
    %v583 = vadd.f32 %v536, %v574
    %v584 = vadd.f32 %v356, %v576
    %v585 = vadd.f32 %v357, %v577
    %v586 = vadd.f32 %v358, %v578
    %v587 = vadd.f32 %v359, %v579
    %v588 = vadd.f32 %v360, %v580
    %v589 = vadd.f32 %v361, %v581
    %v590 = vadd.f32 %v362, %v582
    %v591 = vadd.f32 %v363, %v583
    %s592 = scalar_lea.vmem %s1, 128
    %v593 = vld [vmem:[%s592] sm:$0xff]
    %v594 = vld [vmem:[%s592 + $0x8] sm:$0xff]
    %v595 = vld [vmem:[%s592 + $0x10] sm:$0xff]
    %v596 = vld [vmem:[%s592 + $0x18] sm:$0xff]
    %v597 = vld [vmem:[%s592 + $0x20] sm:$0xff]
    %v598 = vld [vmem:[%s592 + $0x28] sm:$0xff]
    %v599 = vld [vmem:[%s592 + $0x30] sm:$0xff]
    %v600 = vld [vmem:[%s592 + $0x38] sm:$0xff]
    %s601 = scalar_lea.vmem %s1, 320
    %v602 = vld [vmem:[%s601] sm:$0xff]
    %v603 = vld [vmem:[%s601 + $0x8] sm:$0xff]
    %v604 = vld [vmem:[%s601 + $0x10] sm:$0xff]
    %v605 = vld [vmem:[%s601 + $0x18] sm:$0xff]
    %v606 = vld [vmem:[%s601 + $0x20] sm:$0xff]
    %v607 = vld [vmem:[%s601 + $0x28] sm:$0xff]
    %v608 = vld [vmem:[%s601 + $0x30] sm:$0xff]
    %v609 = vld [vmem:[%s601 + $0x38] sm:$0xff]
    %v618 = vunpack.c.l.b16 %v602
    %v619 = vunpack.c.h.b16 %v602
    %v620 = vunpack.c.l.b16 %v603
    %v621 = vunpack.c.h.b16 %v603
    %v622 = vunpack.c.l.b16 %v604
    %v623 = vunpack.c.h.b16 %v604
    %v624 = vunpack.c.l.b16 %v605
    %v625 = vunpack.c.h.b16 %v605
    %v626 = vunpack.c.l.b16 %v606
    %v627 = vunpack.c.h.b16 %v606
    %v628 = vunpack.c.l.b16 %v607
    %v629 = vunpack.c.h.b16 %v607
    %v630 = vunpack.c.l.b16 %v608
    %v631 = vunpack.c.h.b16 %v608
    %v632 = vunpack.c.l.b16 %v609
    %v633 = vunpack.c.h.b16 %v609
    %v634 = vpack.c.b16 %v620, %v618
    %v635 = vpack.c.b16 %v621, %v619
    %v636 = vpack.c.b16 %v624, %v622
    %v637 = vpack.c.b16 %v625, %v623
    %v638 = vpack.c.b16 %v628, %v626
    %v639 = vpack.c.b16 %v629, %v627
    %v640 = vpack.c.b16 %v632, %v630
    %v641 = vpack.c.b16 %v633, %v631
    %650 = vmatpush.bf16.msra.mxu0 0
    %651 = vmatpush.bf16.msra.mxu0 0
    %652 = vmatpush.bf16.msra.mxu0 0
    %653 = vmatpush.bf16.msra.mxu0 0
    %654 = vmatpush.bf16.msra.mxu0 %v640
    %655 = vmatpush.bf16.msra.mxu0 %v638
    %656 = vmatpush.bf16.msra.mxu0 %v636
    %657 = vmatpush.bf16.msra.mxu0 %v634
    %658 = vmatmul.bf16.gmra.mxu0 %v109
    %v659 = vpop.f32.mrf.mxu0
    %v660 = vadd.f32 0.0, %v659
    %v661 = vpop.f32.mrf.mxu0
    %v662 = vadd.f32 0.0, %v661
    %663 = vmatmul.bf16.gmra.mxu0 %v112
    %v664 = vpop.f32.mrf.mxu0
    %v665 = vadd.f32 0.0, %v664
    %v666 = vpop.f32.mrf.mxu0
    %v667 = vadd.f32 0.0, %v666
    %668 = vdwg.mxu0
    %669 = vmatpush.bf16.msra.mxu0 0
    %670 = vmatpush.bf16.msra.mxu0 0
    %671 = vmatpush.bf16.msra.mxu0 0
    %672 = vmatpush.bf16.msra.mxu0 0
    %673 = vmatpush.bf16.msra.mxu0 %v641
    %674 = vmatpush.bf16.msra.mxu0 %v639
    %675 = vmatpush.bf16.msra.mxu0 %v637
    %676 = vmatpush.bf16.msra.mxu0 %v635
    %677 = vmatmul.bf16.gmra.mxu0 %v109
    %v678 = vpop.f32.mrf.mxu0
    %v679 = vadd.f32 0.0, %v678
    %v680 = vpop.f32.mrf.mxu0
    %v681 = vadd.f32 0.0, %v680
    %682 = vmatmul.bf16.gmra.mxu0 %v112
    %v683 = vpop.f32.mrf.mxu0
    %v684 = vadd.f32 0.0, %v683
    %v685 = vpop.f32.mrf.mxu0
    %v686 = vadd.f32 0.0, %v685
    %687 = vdwg.mxu0
    %v696 = vunpack.c.l.b16 %v593
    %v697 = vunpack.c.h.b16 %v593
    %v698 = vunpack.c.l.b16 %v594
    %v699 = vunpack.c.h.b16 %v594
    %v700 = vunpack.c.l.b16 %v595
    %v701 = vunpack.c.h.b16 %v595
    %v702 = vunpack.c.l.b16 %v596
    %v703 = vunpack.c.h.b16 %v596
    %v704 = vunpack.c.l.b16 %v597
    %v705 = vunpack.c.h.b16 %v597
    %v706 = vunpack.c.l.b16 %v598
    %v707 = vunpack.c.h.b16 %v598
    %v708 = vunpack.c.l.b16 %v599
    %v709 = vunpack.c.h.b16 %v599
    %v710 = vunpack.c.l.b16 %v600
    %v711 = vunpack.c.h.b16 %v600
    %v712 = vpack.c.b16 %v698, %v696
    %v713 = vpack.c.b16 %v699, %v697
    %v714 = vpack.c.b16 %v702, %v700
    %v715 = vpack.c.b16 %v703, %v701
    %v716 = vpack.c.b16 %v706, %v704
    %v717 = vpack.c.b16 %v707, %v705
    %v718 = vpack.c.b16 %v710, %v708
    %v719 = vpack.c.b16 %v711, %v709
    %728 = vmatpush.bf16.msra.mxu0 0
    %729 = vmatpush.bf16.msra.mxu0 0
    %730 = vmatpush.bf16.msra.mxu0 0
    %731 = vmatpush.bf16.msra.mxu0 0
    %732 = vmatpush.bf16.msra.mxu0 %v718
    %733 = vmatpush.bf16.msra.mxu0 %v716
    %734 = vmatpush.bf16.msra.mxu0 %v714
    %735 = vmatpush.bf16.msra.mxu0 %v712
    %736 = vmatmul.bf16.gmra.mxu0 %v109
    %v737 = vpop.f32.mrf.mxu0
    %v738 = vadd.f32 %v660, %v737
    %v739 = vpop.f32.mrf.mxu0
    %v740 = vadd.f32 %v662, %v739
    %741 = vmatmul.bf16.gmra.mxu0 %v112
    %v742 = vpop.f32.mrf.mxu0
    %v743 = vadd.f32 %v665, %v742
    %v744 = vpop.f32.mrf.mxu0
    %v745 = vadd.f32 %v667, %v744
    %746 = vdwg.mxu0
    %747 = vmatpush.bf16.msra.mxu0 0
    %748 = vmatpush.bf16.msra.mxu0 0
    %749 = vmatpush.bf16.msra.mxu0 0
    %750 = vmatpush.bf16.msra.mxu0 0
    %751 = vmatpush.bf16.msra.mxu0 %v719
    %752 = vmatpush.bf16.msra.mxu0 %v717
    %753 = vmatpush.bf16.msra.mxu0 %v715
    %754 = vmatpush.bf16.msra.mxu0 %v713
    %755 = vmatmul.bf16.gmra.mxu0 %v109
    %v756 = vpop.f32.mrf.mxu0
    %v757 = vadd.f32 %v679, %v756
    %v758 = vpop.f32.mrf.mxu0
    %v759 = vadd.f32 %v681, %v758
    %760 = vmatmul.bf16.gmra.mxu0 %v112
    %v761 = vpop.f32.mrf.mxu0
    %v762 = vadd.f32 %v684, %v761
    %v763 = vpop.f32.mrf.mxu0
    %v764 = vadd.f32 %v686, %v763
    %765 = vdwg.mxu0
    %766 = vmatpush.bf16.msra.mxu0 0
    %767 = vmatpush.bf16.msra.mxu0 0
    %768 = vmatpush.bf16.msra.mxu0 0
    %769 = vmatpush.bf16.msra.mxu0 0
    %770 = vmatpush.bf16.msra.mxu0 %v718
    %771 = vmatpush.bf16.msra.mxu0 %v716
    %772 = vmatpush.bf16.msra.mxu0 %v714
    %773 = vmatpush.bf16.msra.mxu0 %v712
    %774 = vmatmul.bf16.gmra.mxu0 %v231
    %v775 = vpop.f32.mrf.mxu0
    %v776 = vadd.f32 0.0, %v775
    %v777 = vpop.f32.mrf.mxu0
    %v778 = vadd.f32 0.0, %v777
    %779 = vmatmul.bf16.gmra.mxu0 %v234
    %v780 = vpop.f32.mrf.mxu0
    %v781 = vadd.f32 0.0, %v780
    %v782 = vpop.f32.mrf.mxu0
    %v783 = vadd.f32 0.0, %v782
    %784 = vdwg.mxu0
    %785 = vmatpush.bf16.msra.mxu0 0
    %786 = vmatpush.bf16.msra.mxu0 0
    %787 = vmatpush.bf16.msra.mxu0 0
    %788 = vmatpush.bf16.msra.mxu0 0
    %789 = vmatpush.bf16.msra.mxu0 %v719
    %790 = vmatpush.bf16.msra.mxu0 %v717
    %791 = vmatpush.bf16.msra.mxu0 %v715
    %792 = vmatpush.bf16.msra.mxu0 %v713
    %793 = vmatmul.bf16.gmra.mxu0 %v231
    %v794 = vpop.f32.mrf.mxu0
    %v795 = vadd.f32 0.0, %v794
    %v796 = vpop.f32.mrf.mxu0
    %v797 = vadd.f32 0.0, %v796
    %798 = vmatmul.bf16.gmra.mxu0 %v234
    %v799 = vpop.f32.mrf.mxu0
    %v800 = vadd.f32 0.0, %v799
    %v801 = vpop.f32.mrf.mxu0
    %v802 = vadd.f32 0.0, %v801
    %803 = vdwg.mxu0
    %v804 = vadd.f32 %v738, %v776
    %v805 = vadd.f32 %v757, %v795
    %v806 = vadd.f32 %v740, %v778
    %v807 = vadd.f32 %v759, %v797
    %v808 = vadd.f32 %v743, %v781
    %v809 = vadd.f32 %v762, %v800
    %v810 = vadd.f32 %v745, %v783
    %v811 = vadd.f32 %v764, %v802
    %vm812 = vcmp.eq.s32.totalorder %v331, 15
    %vm813 = vcmp.eq.s32.totalorder %v332, 15
    %vm814 = vcmp.eq.s32.totalorder %v333, 15
    %vm815 = vcmp.eq.s32.totalorder %v334, 15
    %v816 = vrot.slane %v804, 1
    %v817 = vrot.slane %v805, 1
    %v818 = vrot.slane %v806, 1
    %v819 = vrot.slane %v807, 1
    %v820 = vrot.slane %v808, 1
    %v821 = vrot.slane %v809, 1
    %v822 = vrot.slane %v810, 1
    %v823 = vrot.slane %v811, 1
    %vm824 = vcmp.lt.s32.totalorder %v283, 7
    %v825 = vsel %vm824, %v820, %v822
    %v826 = vsel %vm824, %v821, %v823
    %v827 = vsel %vm824, %v818, %v820
    %v828 = vsel %vm824, %v819, %v821
    %v829 = vsel %vm824, %v816, %v818
    %v830 = vsel %vm824, %v817, %v819
    %v831 = vsel %vm824, %v822, %v816
    %v832 = vsel %vm824, %v823, %v817
    %v833 = vsel %vm812, 0.0, %v829
    %v834 = vsel %vm812, 0.0, %v830
    %v835 = vsel %vm813, 0.0, %v827
    %v836 = vsel %vm813, 0.0, %v828
    %v837 = vsel %vm814, 0.0, %v825
    %v838 = vsel %vm814, 0.0, %v826
    %v839 = vsel %vm815, 0.0, %v831
    %v840 = vsel %vm815, 0.0, %v832
    %v841 = vadd.f32 %v584, %v833
    %v842 = vadd.f32 %v585, %v834
    %v843 = vadd.f32 %v586, %v835
    %v844 = vadd.f32 %v587, %v836
    %v845 = vadd.f32 %v588, %v837
    %v846 = vadd.f32 %v589, %v838
    %v847 = vadd.f32 %v590, %v839
    %v848 = vadd.f32 %v591, %v840
    %v849 = vadd.f32 %v841, %v842
    %v850 = vadd.f32 %v849, %v843
    %v851 = vadd.f32 %v850, %v844
    %852 = vadd.xlane.f32.xlu0 %v851
    %v853 = vpop.xlane.xlu0 %852
    %v854 = vrot.slane %v853, 4
    %v855 = vadd.f32 %v853, %v854
    %v856 = vrot.slane %v855, 2
    %v857 = vadd.f32 %v855, %v856
    %v858 = vrot.slane %v857, 1
    %v859 = vadd.f32 %v857, %v858
    %s860 = vtos %v859
    %s861 = smul.f32 %s860, 0.00024414063
    %v862 = vmul.f32 %v841, %v841
    %v863 = vmul.f32 %v842, %v842
    %v864 = vmul.f32 %v843, %v843
    %v865 = vmul.f32 %v844, %v844
    %v866 = vadd.f32 %v862, %v863
    %v867 = vadd.f32 %v866, %v864
    %v868 = vadd.f32 %v867, %v865
    %869 = vadd.xlane.f32.xlu0 %v868
    %v870 = vpop.xlane.xlu0 %869
    %v871 = vrot.slane %v870, 4
    %v872 = vadd.f32 %v870, %v871
    %v873 = vrot.slane %v872, 2
    %v874 = vadd.f32 %v872, %v873
    %v875 = vrot.slane %v874, 1
    %v876 = vadd.f32 %v874, %v875
    %s877 = vtos %v876
    %s878 = smul.f32 %s877, 0.00024414063
    %s879 = smul.f32 %s861, %s861
    %s880 = ssub.f32 %s878, %s879
    %v881 = vstv %s861
    %v882 = vsub.f32 %v841, %v881
    %v883 = vsub.f32 %v842, %v881
    %v884 = vsub.f32 %v843, %v881
    %v885 = vsub.f32 %v844, %v881
    %s886 = sadd.f32 %s880, 1e-05
    %v887 = vstv %s886
    %v888 = vrsqrt.pop %v887
    %v889 = vmul.f32 %v888, %v887
    %v890 = vmul.f32 %v889, %v888
    %v891 = vmul.f32 0.5, %v890
    %v892 = vsub.f32 1.5, %v891
    %v893 = vmul.f32 %v888, %v892
    %vm894 = vweird.f32 %v887
    %vm895 = vweird.f32 %v888
    %vm896 = vmor %vm894, %vm895
    %v897 = vsel %vm896, %v888, %v893
    %s898 = vtos %v897
    %v899 = vstv %s898
    %v900 = vmul.f32 %v882, %v899
    %v901 = vmul.f32 %v883, %v899
    %v902 = vmul.f32 %v884, %v899
    %v903 = vmul.f32 %v885, %v899
    %v904 = vadd.f32 %v845, %v846
    %v905 = vadd.f32 %v904, %v847
    %v906 = vadd.f32 %v905, %v848
    %907 = vadd.xlane.f32.xlu0 %v906
    %v908 = vpop.xlane.xlu0 %907
    %v909 = vrot.slane %v908, 4
    %v910 = vadd.f32 %v908, %v909
    %v911 = vrot.slane %v910, 2
    %v912 = vadd.f32 %v910, %v911
    %v913 = vrot.slane %v912, 1
    %v914 = vadd.f32 %v912, %v913
    %s915 = vtos %v914
    %s916 = smul.f32 %s915, 0.00024414063
    %v917 = vmul.f32 %v845, %v845
    %v918 = vmul.f32 %v846, %v846
    %v919 = vmul.f32 %v847, %v847
    %v920 = vmul.f32 %v848, %v848
    %v921 = vadd.f32 %v917, %v918
    %v922 = vadd.f32 %v921, %v919
    %v923 = vadd.f32 %v922, %v920
    %924 = vadd.xlane.f32.xlu0 %v923
    %v925 = vpop.xlane.xlu0 %924
    %v926 = vrot.slane %v925, 4
    %v927 = vadd.f32 %v925, %v926
    %v928 = vrot.slane %v927, 2
    %v929 = vadd.f32 %v927, %v928
    %v930 = vrot.slane %v929, 1
    %v931 = vadd.f32 %v929, %v930
    %s932 = vtos %v931
    %s933 = smul.f32 %s932, 0.00024414063
    %s934 = smul.f32 %s916, %s916
    %s935 = ssub.f32 %s933, %s934
    %v936 = vstv %s916
    %v937 = vsub.f32 %v845, %v936
    %v938 = vsub.f32 %v846, %v936
    %v939 = vsub.f32 %v847, %v936
    %v940 = vsub.f32 %v848, %v936
    %s941 = sadd.f32 %s935, 1e-05
    %v942 = vstv %s941
    %v943 = vrsqrt.pop %v942
    %v944 = vmul.f32 %v943, %v942
    %v945 = vmul.f32 %v944, %v943
    %v946 = vmul.f32 0.5, %v945
    %v947 = vsub.f32 1.5, %v946
    %v948 = vmul.f32 %v943, %v947
    %vm949 = vweird.f32 %v942
    %vm950 = vweird.f32 %v943
    %vm951 = vmor %vm949, %vm950
    %v952 = vsel %vm951, %v943, %v948
    %s953 = vtos %v952
    %v954 = vstv %s953
    %v955 = vmul.f32 %v937, %v954
    %v956 = vmul.f32 %v938, %v954
    %v957 = vmul.f32 %v939, %v954
    %v958 = vmul.f32 %v940, %v954
    %v959 = vxor.u32 %v900, 2147483648
    %v960 = vxor.u32 %v901, 2147483648
    %v961 = vxor.u32 %v902, 2147483648
    %v962 = vxor.u32 %v903, 2147483648
    %v963 = vxor.u32 %v955, 2147483648
    %v964 = vxor.u32 %v956, 2147483648
    %v965 = vxor.u32 %v957, 2147483648
    %v966 = vxor.u32 %v958, 2147483648
    %v967 = vmul.f32 %v959, 1.442695
    %v968 = vpow.pop %v967
    %v969 = vmul.f32 %v960, 1.442695
    %v970 = vpow.pop %v969
    %v971 = vmul.f32 %v961, 1.442695
    %v972 = vpow.pop %v971
    %v973 = vmul.f32 %v962, 1.442695
    %v974 = vpow.pop %v973
    %v975 = vmul.f32 %v963, 1.442695
    %v976 = vpow.pop %v975
    %v977 = vmul.f32 %v964, 1.442695
    %v978 = vpow.pop %v977
    %v979 = vmul.f32 %v965, 1.442695
    %v980 = vpow.pop %v979
    %v981 = vmul.f32 %v966, 1.442695
    %v982 = vpow.pop %v981
    %v983 = vadd.f32 %v968, 1.0
    %v984 = vadd.f32 %v970, 1.0
    %v985 = vadd.f32 %v972, 1.0
    %v986 = vadd.f32 %v974, 1.0
    %v987 = vadd.f32 %v976, 1.0
    %v988 = vadd.f32 %v978, 1.0
    %v989 = vadd.f32 %v980, 1.0
    %v990 = vadd.f32 %v982, 1.0
    %v991 = vrcp.pop %v983
    %v992 = vmul.f32 %v983, %v991
    %v993 = vsub.f32 1.0, %v992
    %v994 = vmul.f32 %v991, %v993
    %v995 = vadd.f32 %v991, %v994
    %vm996 = vweird.f32 %v983
    %vm997 = vweird.f32 %v991
    %vm998 = vmor %vm996, %vm997
    %v999 = vsel %vm998, %v991, %v995
    %v1000 = vand.u32 2147483647, %v983
    %vm1001 = vcmp.eq.f32.partialorder %v1000, 8.507059e+37
    %v1002 = vand.u32 %v983, 2147483648
    %v1003 = vor.u32 1.1754944e-38, %v1002
    %v1004 = vsel %vm1001, %v1003, %v999
    %v1005 = vmul.f32 1.0, %v1004
    %v1006 = vrcp.pop %v984
    %v1007 = vmul.f32 %v984, %v1006
    %v1008 = vsub.f32 1.0, %v1007
    %v1009 = vmul.f32 %v1006, %v1008
    %v1010 = vadd.f32 %v1006, %v1009
    %vm1011 = vweird.f32 %v984
    %vm1012 = vweird.f32 %v1006
    %vm1013 = vmor %vm1011, %vm1012
    %v1014 = vsel %vm1013, %v1006, %v1010
    %v1015 = vand.u32 2147483647, %v984
    %vm1016 = vcmp.eq.f32.partialorder %v1015, 8.507059e+37
    %v1017 = vand.u32 %v984, 2147483648
    %v1018 = vor.u32 1.1754944e-38, %v1017
    %v1019 = vsel %vm1016, %v1018, %v1014
    %v1020 = vmul.f32 1.0, %v1019
    %v1021 = vrcp.pop %v985
    %v1022 = vmul.f32 %v985, %v1021
    %v1023 = vsub.f32 1.0, %v1022
    %v1024 = vmul.f32 %v1021, %v1023
    %v1025 = vadd.f32 %v1021, %v1024
    %vm1026 = vweird.f32 %v985
    %vm1027 = vweird.f32 %v1021
    %vm1028 = vmor %vm1026, %vm1027
    %v1029 = vsel %vm1028, %v1021, %v1025
    %v1030 = vand.u32 2147483647, %v985
    %vm1031 = vcmp.eq.f32.partialorder %v1030, 8.507059e+37
    %v1032 = vand.u32 %v985, 2147483648
    %v1033 = vor.u32 1.1754944e-38, %v1032
    %v1034 = vsel %vm1031, %v1033, %v1029
    %v1035 = vmul.f32 1.0, %v1034
    %v1036 = vrcp.pop %v986
    %v1037 = vmul.f32 %v986, %v1036
    %v1038 = vsub.f32 1.0, %v1037
    %v1039 = vmul.f32 %v1036, %v1038
    %v1040 = vadd.f32 %v1036, %v1039
    %vm1041 = vweird.f32 %v986
    %vm1042 = vweird.f32 %v1036
    %vm1043 = vmor %vm1041, %vm1042
    %v1044 = vsel %vm1043, %v1036, %v1040
    %v1045 = vand.u32 2147483647, %v986
    %vm1046 = vcmp.eq.f32.partialorder %v1045, 8.507059e+37
    %v1047 = vand.u32 %v986, 2147483648
    %v1048 = vor.u32 1.1754944e-38, %v1047
    %v1049 = vsel %vm1046, %v1048, %v1044
    %v1050 = vmul.f32 1.0, %v1049
    %v1051 = vrcp.pop %v987
    %v1052 = vmul.f32 %v987, %v1051
    %v1053 = vsub.f32 1.0, %v1052
    %v1054 = vmul.f32 %v1051, %v1053
    %v1055 = vadd.f32 %v1051, %v1054
    %vm1056 = vweird.f32 %v987
    %vm1057 = vweird.f32 %v1051
    %vm1058 = vmor %vm1056, %vm1057
    %v1059 = vsel %vm1058, %v1051, %v1055
    %v1060 = vand.u32 2147483647, %v987
    %vm1061 = vcmp.eq.f32.partialorder %v1060, 8.507059e+37
    %v1062 = vand.u32 %v987, 2147483648
    %v1063 = vor.u32 1.1754944e-38, %v1062
    %v1064 = vsel %vm1061, %v1063, %v1059
    %v1065 = vmul.f32 1.0, %v1064
    %v1066 = vrcp.pop %v988
    %v1067 = vmul.f32 %v988, %v1066
    %v1068 = vsub.f32 1.0, %v1067
    %v1069 = vmul.f32 %v1066, %v1068
    %v1070 = vadd.f32 %v1066, %v1069
    %vm1071 = vweird.f32 %v988
    %vm1072 = vweird.f32 %v1066
    %vm1073 = vmor %vm1071, %vm1072
    %v1074 = vsel %vm1073, %v1066, %v1070
    %v1075 = vand.u32 2147483647, %v988
    %vm1076 = vcmp.eq.f32.partialorder %v1075, 8.507059e+37
    %v1077 = vand.u32 %v988, 2147483648
    %v1078 = vor.u32 1.1754944e-38, %v1077
    %v1079 = vsel %vm1076, %v1078, %v1074
    %v1080 = vmul.f32 1.0, %v1079
    %v1081 = vrcp.pop %v989
    %v1082 = vmul.f32 %v989, %v1081
    %v1083 = vsub.f32 1.0, %v1082
    %v1084 = vmul.f32 %v1081, %v1083
    %v1085 = vadd.f32 %v1081, %v1084
    %vm1086 = vweird.f32 %v989
    %vm1087 = vweird.f32 %v1081
    %vm1088 = vmor %vm1086, %vm1087
    %v1089 = vsel %vm1088, %v1081, %v1085
    %v1090 = vand.u32 2147483647, %v989
    %vm1091 = vcmp.eq.f32.partialorder %v1090, 8.507059e+37
    %v1092 = vand.u32 %v989, 2147483648
    %v1093 = vor.u32 1.1754944e-38, %v1092
    %v1094 = vsel %vm1091, %v1093, %v1089
    %v1095 = vmul.f32 1.0, %v1094
    %v1096 = vrcp.pop %v990
    %v1097 = vmul.f32 %v990, %v1096
    %v1098 = vsub.f32 1.0, %v1097
    %v1099 = vmul.f32 %v1096, %v1098
    %v1100 = vadd.f32 %v1096, %v1099
    %vm1101 = vweird.f32 %v990
    %vm1102 = vweird.f32 %v1096
    %vm1103 = vmor %vm1101, %vm1102
    %v1104 = vsel %vm1103, %v1096, %v1100
    %v1105 = vand.u32 2147483647, %v990
    %vm1106 = vcmp.eq.f32.partialorder %v1105, 8.507059e+37
    %v1107 = vand.u32 %v990, 2147483648
    %v1108 = vor.u32 1.1754944e-38, %v1107
    %v1109 = vsel %vm1106, %v1108, %v1104
    %v1110 = vmul.f32 1.0, %v1109
    %v1111 = vmul.f32 %v900, %v1005
    %v1112 = vmul.f32 %v901, %v1020
    %v1113 = vmul.f32 %v902, %v1035
    %v1114 = vmul.f32 %v903, %v1050
    %v1115 = vmul.f32 %v955, %v1065
    %v1116 = vmul.f32 %v956, %v1080
    %v1117 = vmul.f32 %v957, %v1095
    %v1118 = vmul.f32 %v958, %v1110
    %v1119 = vpack.c.bf16 %v1112, %v1111
    %v1120 = vpack.c.bf16 %v1114, %v1113
    %v1121 = vpack.c.bf16 %v1116, %v1115
    %v1122 = vpack.c.bf16 %v1118, %v1117
    %v1123 = vunpack.c.l.bf16 %v1119
    %v1124 = vunpack.c.h.bf16 %v1119
    %v1125 = vunpack.c.l.bf16 %v1120
    %v1126 = vunpack.c.h.bf16 %v1120
    %v1127 = vunpack.c.l.bf16 %v1121
    %v1128 = vunpack.c.h.bf16 %v1121
    %v1129 = vunpack.c.l.bf16 %v1122
    %v1130 = vunpack.c.h.bf16 %v1122
    %v1131 = vsub.f32 %v1111, %v1123
    %v1132 = vsub.f32 %v1112, %v1124
    %v1133 = vsub.f32 %v1113, %v1125
    %v1134 = vsub.f32 %v1114, %v1126
    %v1135 = vsub.f32 %v1115, %v1127
    %v1136 = vsub.f32 %v1116, %v1128
    %v1137 = vsub.f32 %v1117, %v1129
    %v1138 = vsub.f32 %v1118, %v1130
    %v1139 = vpack.c.bf16 %v1133, %v1131
    %v1140 = vpack.c.bf16 %v1134, %v1132
    %v1141 = vpack.c.bf16 %v1137, %v1135
    %v1142 = vpack.c.bf16 %v1138, %v1136
    %v1143 = vld [vmem:[%s2] sm:$0xf]
    %v1144 = vld [vmem:[%s2 + $0x4] sm:$0xf]
    %v1145 = vld [vmem:[%s2 + $0x8] sm:$0xf]
    %v1146 = vld [vmem:[%s2 + $0xc] sm:$0xf]
    %v1147 = vld [vmem:[%s2 + $0x10] sm:$0xf]
    %v1148 = vld [vmem:[%s2 + $0x14] sm:$0xf]
    %v1149 = vld [vmem:[%s2 + $0x18] sm:$0xf]
    %v1150 = vld [vmem:[%s2 + $0x1c] sm:$0xf]
    %v1151 = vld [vmem:[%s2 + $0x20] sm:$0xf]
    %v1152 = vld [vmem:[%s2 + $0x24] sm:$0xf]
    %v1153 = vld [vmem:[%s2 + $0x28] sm:$0xf]
    %v1154 = vld [vmem:[%s2 + $0x2c] sm:$0xf]
    %v1155 = vld [vmem:[%s2 + $0x30] sm:$0xf]
    %v1156 = vld [vmem:[%s2 + $0x34] sm:$0xf]
    %v1157 = vld [vmem:[%s2 + $0x38] sm:$0xf]
    %v1158 = vld [vmem:[%s2 + $0x3c] sm:$0xf]
    %v1159 = vld [vmem:[%s2 + $0x40] sm:$0xf]
    %v1160 = vld [vmem:[%s2 + $0x44] sm:$0xf]
    %v1161 = vld [vmem:[%s2 + $0x48] sm:$0xf]
    %v1162 = vld [vmem:[%s2 + $0x4c] sm:$0xf]
    %v1163 = vld [vmem:[%s2 + $0x50] sm:$0xf]
    %v1164 = vld [vmem:[%s2 + $0x54] sm:$0xf]
    %v1165 = vld [vmem:[%s2 + $0x58] sm:$0xf]
    %v1166 = vld [vmem:[%s2 + $0x5c] sm:$0xf]
    %v1167 = vld [vmem:[%s2 + $0x60] sm:$0xf]
    %v1168 = vld [vmem:[%s2 + $0x64] sm:$0xf]
    %v1169 = vld [vmem:[%s2 + $0x68] sm:$0xf]
    %v1170 = vld [vmem:[%s2 + $0x6c] sm:$0xf]
    %v1171 = vld [vmem:[%s2 + $0x70] sm:$0xf]
    %v1172 = vld [vmem:[%s2 + $0x74] sm:$0xf]
    %v1173 = vld [vmem:[%s2 + $0x78] sm:$0xf]
    %v1174 = vld [vmem:[%s2 + $0x7c] sm:$0xf]
    %s1175 = scalar_lea.vmem %s2, 384
    %v1176 = vld [vmem:[%s1175] sm:$0xf]
    %v1177 = vld [vmem:[%s1175 + $0x4] sm:$0xf]
    %v1178 = vld [vmem:[%s1175 + $0x8] sm:$0xf]
    %v1179 = vld [vmem:[%s1175 + $0xc] sm:$0xf]
    %v1180 = vld [vmem:[%s1175 + $0x10] sm:$0xf]
    %v1181 = vld [vmem:[%s1175 + $0x14] sm:$0xf]
    %v1182 = vld [vmem:[%s1175 + $0x18] sm:$0xf]
    %v1183 = vld [vmem:[%s1175 + $0x1c] sm:$0xf]
    %v1184 = vld [vmem:[%s1175 + $0x20] sm:$0xf]
    %v1185 = vld [vmem:[%s1175 + $0x24] sm:$0xf]
    %v1186 = vld [vmem:[%s1175 + $0x28] sm:$0xf]
    %v1187 = vld [vmem:[%s1175 + $0x2c] sm:$0xf]
    %v1188 = vld [vmem:[%s1175 + $0x30] sm:$0xf]
    %v1189 = vld [vmem:[%s1175 + $0x34] sm:$0xf]
    %v1190 = vld [vmem:[%s1175 + $0x38] sm:$0xf]
    %v1191 = vld [vmem:[%s1175 + $0x3c] sm:$0xf]
    %v1192 = vld [vmem:[%s1175 + $0x40] sm:$0xf]
    %v1193 = vld [vmem:[%s1175 + $0x44] sm:$0xf]
    %v1194 = vld [vmem:[%s1175 + $0x48] sm:$0xf]
    %v1195 = vld [vmem:[%s1175 + $0x4c] sm:$0xf]
    %v1196 = vld [vmem:[%s1175 + $0x50] sm:$0xf]
    %v1197 = vld [vmem:[%s1175 + $0x54] sm:$0xf]
    %v1198 = vld [vmem:[%s1175 + $0x58] sm:$0xf]
    %v1199 = vld [vmem:[%s1175 + $0x5c] sm:$0xf]
    %v1200 = vld [vmem:[%s1175 + $0x60] sm:$0xf]
    %v1201 = vld [vmem:[%s1175 + $0x64] sm:$0xf]
    %v1202 = vld [vmem:[%s1175 + $0x68] sm:$0xf]
    %v1203 = vld [vmem:[%s1175 + $0x6c] sm:$0xf]
    %v1204 = vld [vmem:[%s1175 + $0x70] sm:$0xf]
    %v1205 = vld [vmem:[%s1175 + $0x74] sm:$0xf]
    %v1206 = vld [vmem:[%s1175 + $0x78] sm:$0xf]
    %v1207 = vld [vmem:[%s1175 + $0x7c] sm:$0xf]
    %v1212 = vunpack.c.l.b16 %v1119
    %v1213 = vunpack.c.h.b16 %v1119
    %v1214 = vunpack.c.l.b16 %v1120
    %v1215 = vunpack.c.h.b16 %v1120
    %v1216 = vunpack.c.l.b16 %v1121
    %v1217 = vunpack.c.h.b16 %v1121
    %v1218 = vunpack.c.l.b16 %v1122
    %v1219 = vunpack.c.h.b16 %v1122
    %v1220 = vpack.c.b16 %v1214, %v1212
    %v1221 = vpack.c.b16 %v1215, %v1213
    %v1222 = vpack.c.b16 %v1218, %v1216
    %v1223 = vpack.c.b16 %v1219, %v1217
    %v1260 = vunpack.c.l.b16 %v1176
    %v1261 = vunpack.c.l.b16 %v1177
    %v1262 = vunpack.c.l.b16 %v1178
    %v1263 = vunpack.c.l.b16 %v1179
    %v1264 = vunpack.c.l.b16 %v1180
    %v1265 = vunpack.c.l.b16 %v1181
    %v1266 = vunpack.c.l.b16 %v1182
    %v1267 = vunpack.c.l.b16 %v1183
    %v1268 = vunpack.c.l.b16 %v1184
    %v1269 = vunpack.c.l.b16 %v1185
    %v1270 = vunpack.c.l.b16 %v1186
    %v1271 = vunpack.c.l.b16 %v1187
    %v1272 = vunpack.c.l.b16 %v1188
    %v1273 = vunpack.c.l.b16 %v1189
    %v1274 = vunpack.c.l.b16 %v1190
    %v1275 = vunpack.c.l.b16 %v1191
    %v1276 = vunpack.c.l.b16 %v1192
    %v1277 = vunpack.c.l.b16 %v1193
    %v1278 = vunpack.c.l.b16 %v1194
    %v1279 = vunpack.c.l.b16 %v1195
    %v1280 = vunpack.c.l.b16 %v1196
    %v1281 = vunpack.c.l.b16 %v1197
    %v1282 = vunpack.c.l.b16 %v1198
    %v1283 = vunpack.c.l.b16 %v1199
    %v1284 = vunpack.c.l.b16 %v1200
    %v1285 = vunpack.c.l.b16 %v1201
    %v1286 = vunpack.c.l.b16 %v1202
    %v1287 = vunpack.c.l.b16 %v1203
    %v1288 = vunpack.c.l.b16 %v1204
    %v1289 = vunpack.c.l.b16 %v1205
    %v1290 = vunpack.c.l.b16 %v1206
    %v1291 = vunpack.c.l.b16 %v1207
    %v1292 = vpack.c.b16 %v1261, %v1260
    %v1293 = vpack.c.b16 %v1263, %v1262
    %v1294 = vpack.c.b16 %v1265, %v1264
    %v1295 = vpack.c.b16 %v1267, %v1266
    %v1296 = vpack.c.b16 %v1269, %v1268
    %v1297 = vpack.c.b16 %v1271, %v1270
    %v1298 = vpack.c.b16 %v1273, %v1272
    %v1299 = vpack.c.b16 %v1275, %v1274
    %v1300 = vpack.c.b16 %v1277, %v1276
    %v1301 = vpack.c.b16 %v1279, %v1278
    %v1302 = vpack.c.b16 %v1281, %v1280
    %v1303 = vpack.c.b16 %v1283, %v1282
    %v1304 = vpack.c.b16 %v1285, %v1284
    %v1305 = vpack.c.b16 %v1287, %v1286
    %v1306 = vpack.c.b16 %v1289, %v1288
    %v1307 = vpack.c.b16 %v1291, %v1290
    %1324 = vmatpush.bf16.msra.mxu0 %v1299
    %1325 = vmatpush.bf16.msra.mxu0 %v1298
    %1326 = vmatpush.bf16.msra.mxu0 %v1297
    %1327 = vmatpush.bf16.msra.mxu0 %v1296
    %1328 = vmatpush.bf16.msra.mxu0 %v1295
    %1329 = vmatpush.bf16.msra.mxu0 %v1294
    %1330 = vmatpush.bf16.msra.mxu0 %v1293
    %1331 = vmatpush.bf16.msra.mxu0 %v1292
    %1332 = vmatmul.bf16.gmra.mxu0 %v1220
    %v1333 = vpop.f32.mrf.mxu0
    %v1334 = vadd.f32 0.0, %v1333
    %v1335 = vpop.f32.mrf.mxu0
    %v1336 = vadd.f32 0.0, %v1335
    %1337 = vmatmul.bf16.gmra.mxu0 %v1222
    %v1338 = vpop.f32.mrf.mxu0
    %v1339 = vadd.f32 0.0, %v1338
    %v1340 = vpop.f32.mrf.mxu0
    %v1341 = vadd.f32 0.0, %v1340
    %1342 = vdwg.mxu0
    %1343 = vmatpush.bf16.msra.mxu0 %v1307
    %1344 = vmatpush.bf16.msra.mxu0 %v1306
    %1345 = vmatpush.bf16.msra.mxu0 %v1305
    %1346 = vmatpush.bf16.msra.mxu0 %v1304
    %1347 = vmatpush.bf16.msra.mxu0 %v1303
    %1348 = vmatpush.bf16.msra.mxu0 %v1302
    %1349 = vmatpush.bf16.msra.mxu0 %v1301
    %1350 = vmatpush.bf16.msra.mxu0 %v1300
    %1351 = vmatmul.bf16.gmra.mxu0 %v1221
    %v1352 = vpop.f32.mrf.mxu0
    %v1353 = vadd.f32 %v1334, %v1352
    %v1354 = vpop.f32.mrf.mxu0
    %v1355 = vadd.f32 %v1336, %v1354
    %1356 = vmatmul.bf16.gmra.mxu0 %v1223
    %v1357 = vpop.f32.mrf.mxu0
    %v1358 = vadd.f32 %v1339, %v1357
    %v1359 = vpop.f32.mrf.mxu0
    %v1360 = vadd.f32 %v1341, %v1359
    %1361 = vdwg.mxu0
    %v1394 = vunpack.c.l.b16 %v1143
    %v1395 = vunpack.c.l.b16 %v1144
    %v1396 = vunpack.c.l.b16 %v1145
    %v1397 = vunpack.c.l.b16 %v1146
    %v1398 = vunpack.c.l.b16 %v1147
    %v1399 = vunpack.c.l.b16 %v1148
    %v1400 = vunpack.c.l.b16 %v1149
    %v1401 = vunpack.c.l.b16 %v1150
    %v1402 = vunpack.c.l.b16 %v1151
    %v1403 = vunpack.c.l.b16 %v1152
    %v1404 = vunpack.c.l.b16 %v1153
    %v1405 = vunpack.c.l.b16 %v1154
    %v1406 = vunpack.c.l.b16 %v1155
    %v1407 = vunpack.c.l.b16 %v1156
    %v1408 = vunpack.c.l.b16 %v1157
    %v1409 = vunpack.c.l.b16 %v1158
    %v1410 = vunpack.c.l.b16 %v1159
    %v1411 = vunpack.c.l.b16 %v1160
    %v1412 = vunpack.c.l.b16 %v1161
    %v1413 = vunpack.c.l.b16 %v1162
    %v1414 = vunpack.c.l.b16 %v1163
    %v1415 = vunpack.c.l.b16 %v1164
    %v1416 = vunpack.c.l.b16 %v1165
    %v1417 = vunpack.c.l.b16 %v1166
    %v1418 = vunpack.c.l.b16 %v1167
    %v1419 = vunpack.c.l.b16 %v1168
    %v1420 = vunpack.c.l.b16 %v1169
    %v1421 = vunpack.c.l.b16 %v1170
    %v1422 = vunpack.c.l.b16 %v1171
    %v1423 = vunpack.c.l.b16 %v1172
    %v1424 = vunpack.c.l.b16 %v1173
    %v1425 = vunpack.c.l.b16 %v1174
    %v1426 = vpack.c.b16 %v1395, %v1394
    %v1427 = vpack.c.b16 %v1397, %v1396
    %v1428 = vpack.c.b16 %v1399, %v1398
    %v1429 = vpack.c.b16 %v1401, %v1400
    %v1430 = vpack.c.b16 %v1403, %v1402
    %v1431 = vpack.c.b16 %v1405, %v1404
    %v1432 = vpack.c.b16 %v1407, %v1406
    %v1433 = vpack.c.b16 %v1409, %v1408
    %v1434 = vpack.c.b16 %v1411, %v1410
    %v1435 = vpack.c.b16 %v1413, %v1412
    %v1436 = vpack.c.b16 %v1415, %v1414
    %v1437 = vpack.c.b16 %v1417, %v1416
    %v1438 = vpack.c.b16 %v1419, %v1418
    %v1439 = vpack.c.b16 %v1421, %v1420
    %v1440 = vpack.c.b16 %v1423, %v1422
    %v1441 = vpack.c.b16 %v1425, %v1424
    %1458 = vmatpush.bf16.msra.mxu0 %v1433
    %1459 = vmatpush.bf16.msra.mxu0 %v1432
    %1460 = vmatpush.bf16.msra.mxu0 %v1431
    %1461 = vmatpush.bf16.msra.mxu0 %v1430
    %1462 = vmatpush.bf16.msra.mxu0 %v1429
    %1463 = vmatpush.bf16.msra.mxu0 %v1428
    %1464 = vmatpush.bf16.msra.mxu0 %v1427
    %1465 = vmatpush.bf16.msra.mxu0 %v1426
    %1466 = vmatmul.bf16.gmra.mxu0 %v1220
    %v1467 = vpop.f32.mrf.mxu0
    %v1468 = vadd.f32 %v1353, %v1467
    %v1469 = vpop.f32.mrf.mxu0
    %v1470 = vadd.f32 %v1355, %v1469
    %1471 = vmatmul.bf16.gmra.mxu0 %v1222
    %v1472 = vpop.f32.mrf.mxu0
    %v1473 = vadd.f32 %v1358, %v1472
    %v1474 = vpop.f32.mrf.mxu0
    %v1475 = vadd.f32 %v1360, %v1474
    %1476 = vdwg.mxu0
    %1477 = vmatpush.bf16.msra.mxu0 %v1441
    %1478 = vmatpush.bf16.msra.mxu0 %v1440
    %1479 = vmatpush.bf16.msra.mxu0 %v1439
    %1480 = vmatpush.bf16.msra.mxu0 %v1438
    %1481 = vmatpush.bf16.msra.mxu0 %v1437
    %1482 = vmatpush.bf16.msra.mxu0 %v1436
    %1483 = vmatpush.bf16.msra.mxu0 %v1435
    %1484 = vmatpush.bf16.msra.mxu0 %v1434
    %1485 = vmatmul.bf16.gmra.mxu0 %v1221
    %v1486 = vpop.f32.mrf.mxu0
    %v1487 = vadd.f32 %v1468, %v1486
    %v1488 = vpop.f32.mrf.mxu0
    %v1489 = vadd.f32 %v1470, %v1488
    %1490 = vmatmul.bf16.gmra.mxu0 %v1223
    %v1491 = vpop.f32.mrf.mxu0
    %v1492 = vadd.f32 %v1473, %v1491
    %v1493 = vpop.f32.mrf.mxu0
    %v1494 = vadd.f32 %v1475, %v1493
    %1495 = vdwg.mxu0
    %1496 = vmatpush.bf16.msra.mxu0 %v1433
    %1497 = vmatpush.bf16.msra.mxu0 %v1432
    %1498 = vmatpush.bf16.msra.mxu0 %v1431
    %1499 = vmatpush.bf16.msra.mxu0 %v1430
    %1500 = vmatpush.bf16.msra.mxu0 %v1429
    %1501 = vmatpush.bf16.msra.mxu0 %v1428
    %1502 = vmatpush.bf16.msra.mxu0 %v1427
    %1503 = vmatpush.bf16.msra.mxu0 %v1426
    %1504 = vmatmul.bf16.gmra.mxu0 %v1139
    %v1505 = vpop.f32.mrf.mxu0
    %v1506 = vadd.f32 0.0, %v1505
    %v1507 = vpop.f32.mrf.mxu0
    %v1508 = vadd.f32 0.0, %v1507
    %1509 = vmatmul.bf16.gmra.mxu0 %v1141
    %v1510 = vpop.f32.mrf.mxu0
    %v1511 = vadd.f32 0.0, %v1510
    %v1512 = vpop.f32.mrf.mxu0
    %v1513 = vadd.f32 0.0, %v1512
    %1514 = vdwg.mxu0
    %1515 = vmatpush.bf16.msra.mxu0 %v1441
    %1516 = vmatpush.bf16.msra.mxu0 %v1440
    %1517 = vmatpush.bf16.msra.mxu0 %v1439
    %1518 = vmatpush.bf16.msra.mxu0 %v1438
    %1519 = vmatpush.bf16.msra.mxu0 %v1437
    %1520 = vmatpush.bf16.msra.mxu0 %v1436
    %1521 = vmatpush.bf16.msra.mxu0 %v1435
    %1522 = vmatpush.bf16.msra.mxu0 %v1434
    %1523 = vmatmul.bf16.gmra.mxu0 %v1140
    %v1524 = vpop.f32.mrf.mxu0
    %v1525 = vadd.f32 %v1506, %v1524
    %v1526 = vpop.f32.mrf.mxu0
    %v1527 = vadd.f32 %v1508, %v1526
    %1528 = vmatmul.bf16.gmra.mxu0 %v1142
    %v1529 = vpop.f32.mrf.mxu0
    %v1530 = vadd.f32 %v1511, %v1529
    %v1531 = vpop.f32.mrf.mxu0
    %v1532 = vadd.f32 %v1513, %v1531
    %1533 = vdwg.mxu0
    %v1534 = vadd.f32 %v1487, %v1525
    %v1535 = vadd.f32 %v1489, %v1527
    %v1536 = vadd.f32 %v1492, %v1530
    %v1537 = vadd.f32 %v1494, %v1532
    %v1538 = vrot.slane %v1534, 7
    %v1539 = vrot.slane %v1535, 7
    %v1540 = vrot.slane %v1536, 7
    %v1541 = vrot.slane %v1537, 7
    %v1542 = vsel %vm347, %v1540, %v1541
    %v1543 = vsel %vm347, %v1539, %v1540
    %v1544 = vsel %vm347, %v1538, %v1539
    %v1545 = vsel %vm347, %v1541, %v1538
    %v1546 = vsel %vm335, 0.0, %v1545
    %v1547 = vsel %vm336, 0.0, %v1544
    %v1548 = vsel %vm337, 0.0, %v1543
    %v1549 = vsel %vm338, 0.0, %v1542
    %s1550 = scalar_lea.vmem %s2, 128
    %v1551 = vld [vmem:[%s1550] sm:$0xf]
    %v1552 = vld [vmem:[%s1550 + $0x4] sm:$0xf]
    %v1553 = vld [vmem:[%s1550 + $0x8] sm:$0xf]
    %v1554 = vld [vmem:[%s1550 + $0xc] sm:$0xf]
    %v1555 = vld [vmem:[%s1550 + $0x10] sm:$0xf]
    %v1556 = vld [vmem:[%s1550 + $0x14] sm:$0xf]
    %v1557 = vld [vmem:[%s1550 + $0x18] sm:$0xf]
    %v1558 = vld [vmem:[%s1550 + $0x1c] sm:$0xf]
    %v1559 = vld [vmem:[%s1550 + $0x20] sm:$0xf]
    %v1560 = vld [vmem:[%s1550 + $0x24] sm:$0xf]
    %v1561 = vld [vmem:[%s1550 + $0x28] sm:$0xf]
    %v1562 = vld [vmem:[%s1550 + $0x2c] sm:$0xf]
    %v1563 = vld [vmem:[%s1550 + $0x30] sm:$0xf]
    %v1564 = vld [vmem:[%s1550 + $0x34] sm:$0xf]
    %v1565 = vld [vmem:[%s1550 + $0x38] sm:$0xf]
    %v1566 = vld [vmem:[%s1550 + $0x3c] sm:$0xf]
    %v1567 = vld [vmem:[%s1550 + $0x40] sm:$0xf]
    %v1568 = vld [vmem:[%s1550 + $0x44] sm:$0xf]
    %v1569 = vld [vmem:[%s1550 + $0x48] sm:$0xf]
    %v1570 = vld [vmem:[%s1550 + $0x4c] sm:$0xf]
    %v1571 = vld [vmem:[%s1550 + $0x50] sm:$0xf]
    %v1572 = vld [vmem:[%s1550 + $0x54] sm:$0xf]
    %v1573 = vld [vmem:[%s1550 + $0x58] sm:$0xf]
    %v1574 = vld [vmem:[%s1550 + $0x5c] sm:$0xf]
    %v1575 = vld [vmem:[%s1550 + $0x60] sm:$0xf]
    %v1576 = vld [vmem:[%s1550 + $0x64] sm:$0xf]
    %v1577 = vld [vmem:[%s1550 + $0x68] sm:$0xf]
    %v1578 = vld [vmem:[%s1550 + $0x6c] sm:$0xf]
    %v1579 = vld [vmem:[%s1550 + $0x70] sm:$0xf]
    %v1580 = vld [vmem:[%s1550 + $0x74] sm:$0xf]
    %v1581 = vld [vmem:[%s1550 + $0x78] sm:$0xf]
    %v1582 = vld [vmem:[%s1550 + $0x7c] sm:$0xf]
    %s1583 = scalar_lea.vmem %s2, 512
    %v1584 = vld [vmem:[%s1583] sm:$0xf]
    %v1585 = vld [vmem:[%s1583 + $0x4] sm:$0xf]
    %v1586 = vld [vmem:[%s1583 + $0x8] sm:$0xf]
    %v1587 = vld [vmem:[%s1583 + $0xc] sm:$0xf]
    %v1588 = vld [vmem:[%s1583 + $0x10] sm:$0xf]
    %v1589 = vld [vmem:[%s1583 + $0x14] sm:$0xf]
    %v1590 = vld [vmem:[%s1583 + $0x18] sm:$0xf]
    %v1591 = vld [vmem:[%s1583 + $0x1c] sm:$0xf]
    %v1592 = vld [vmem:[%s1583 + $0x20] sm:$0xf]
    %v1593 = vld [vmem:[%s1583 + $0x24] sm:$0xf]
    %v1594 = vld [vmem:[%s1583 + $0x28] sm:$0xf]
    %v1595 = vld [vmem:[%s1583 + $0x2c] sm:$0xf]
    %v1596 = vld [vmem:[%s1583 + $0x30] sm:$0xf]
    %v1597 = vld [vmem:[%s1583 + $0x34] sm:$0xf]
    %v1598 = vld [vmem:[%s1583 + $0x38] sm:$0xf]
    %v1599 = vld [vmem:[%s1583 + $0x3c] sm:$0xf]
    %v1600 = vld [vmem:[%s1583 + $0x40] sm:$0xf]
    %v1601 = vld [vmem:[%s1583 + $0x44] sm:$0xf]
    %v1602 = vld [vmem:[%s1583 + $0x48] sm:$0xf]
    %v1603 = vld [vmem:[%s1583 + $0x4c] sm:$0xf]
    %v1604 = vld [vmem:[%s1583 + $0x50] sm:$0xf]
    %v1605 = vld [vmem:[%s1583 + $0x54] sm:$0xf]
    %v1606 = vld [vmem:[%s1583 + $0x58] sm:$0xf]
    %v1607 = vld [vmem:[%s1583 + $0x5c] sm:$0xf]
    %v1608 = vld [vmem:[%s1583 + $0x60] sm:$0xf]
    %v1609 = vld [vmem:[%s1583 + $0x64] sm:$0xf]
    %v1610 = vld [vmem:[%s1583 + $0x68] sm:$0xf]
    %v1611 = vld [vmem:[%s1583 + $0x6c] sm:$0xf]
    %v1612 = vld [vmem:[%s1583 + $0x70] sm:$0xf]
    %v1613 = vld [vmem:[%s1583 + $0x74] sm:$0xf]
    %v1614 = vld [vmem:[%s1583 + $0x78] sm:$0xf]
    %v1615 = vld [vmem:[%s1583 + $0x7c] sm:$0xf]
    %v1648 = vunpack.c.l.b16 %v1584
    %v1649 = vunpack.c.l.b16 %v1585
    %v1650 = vunpack.c.l.b16 %v1586
    %v1651 = vunpack.c.l.b16 %v1587
    %v1652 = vunpack.c.l.b16 %v1588
    %v1653 = vunpack.c.l.b16 %v1589
    %v1654 = vunpack.c.l.b16 %v1590
    %v1655 = vunpack.c.l.b16 %v1591
    %v1656 = vunpack.c.l.b16 %v1592
    %v1657 = vunpack.c.l.b16 %v1593
    %v1658 = vunpack.c.l.b16 %v1594
    %v1659 = vunpack.c.l.b16 %v1595
    %v1660 = vunpack.c.l.b16 %v1596
    %v1661 = vunpack.c.l.b16 %v1597
    %v1662 = vunpack.c.l.b16 %v1598
    %v1663 = vunpack.c.l.b16 %v1599
    %v1664 = vunpack.c.l.b16 %v1600
    %v1665 = vunpack.c.l.b16 %v1601
    %v1666 = vunpack.c.l.b16 %v1602
    %v1667 = vunpack.c.l.b16 %v1603
    %v1668 = vunpack.c.l.b16 %v1604
    %v1669 = vunpack.c.l.b16 %v1605
    %v1670 = vunpack.c.l.b16 %v1606
    %v1671 = vunpack.c.l.b16 %v1607
    %v1672 = vunpack.c.l.b16 %v1608
    %v1673 = vunpack.c.l.b16 %v1609
    %v1674 = vunpack.c.l.b16 %v1610
    %v1675 = vunpack.c.l.b16 %v1611
    %v1676 = vunpack.c.l.b16 %v1612
    %v1677 = vunpack.c.l.b16 %v1613
    %v1678 = vunpack.c.l.b16 %v1614
    %v1679 = vunpack.c.l.b16 %v1615
    %v1680 = vpack.c.b16 %v1649, %v1648
    %v1681 = vpack.c.b16 %v1651, %v1650
    %v1682 = vpack.c.b16 %v1653, %v1652
    %v1683 = vpack.c.b16 %v1655, %v1654
    %v1684 = vpack.c.b16 %v1657, %v1656
    %v1685 = vpack.c.b16 %v1659, %v1658
    %v1686 = vpack.c.b16 %v1661, %v1660
    %v1687 = vpack.c.b16 %v1663, %v1662
    %v1688 = vpack.c.b16 %v1665, %v1664
    %v1689 = vpack.c.b16 %v1667, %v1666
    %v1690 = vpack.c.b16 %v1669, %v1668
    %v1691 = vpack.c.b16 %v1671, %v1670
    %v1692 = vpack.c.b16 %v1673, %v1672
    %v1693 = vpack.c.b16 %v1675, %v1674
    %v1694 = vpack.c.b16 %v1677, %v1676
    %v1695 = vpack.c.b16 %v1679, %v1678
    %1712 = vmatpush.bf16.msra.mxu0 %v1687
    %1713 = vmatpush.bf16.msra.mxu0 %v1686
    %1714 = vmatpush.bf16.msra.mxu0 %v1685
    %1715 = vmatpush.bf16.msra.mxu0 %v1684
    %1716 = vmatpush.bf16.msra.mxu0 %v1683
    %1717 = vmatpush.bf16.msra.mxu0 %v1682
    %1718 = vmatpush.bf16.msra.mxu0 %v1681
    %1719 = vmatpush.bf16.msra.mxu0 %v1680
    %1720 = vmatmul.bf16.gmra.mxu0 %v1220
    %v1721 = vpop.f32.mrf.mxu0
    %v1722 = vadd.f32 0.0, %v1721
    %v1723 = vpop.f32.mrf.mxu0
    %v1724 = vadd.f32 0.0, %v1723
    %1725 = vmatmul.bf16.gmra.mxu0 %v1222
    %v1726 = vpop.f32.mrf.mxu0
    %v1727 = vadd.f32 0.0, %v1726
    %v1728 = vpop.f32.mrf.mxu0
    %v1729 = vadd.f32 0.0, %v1728
    %1730 = vdwg.mxu0
    %1731 = vmatpush.bf16.msra.mxu0 %v1695
    %1732 = vmatpush.bf16.msra.mxu0 %v1694
    %1733 = vmatpush.bf16.msra.mxu0 %v1693
    %1734 = vmatpush.bf16.msra.mxu0 %v1692
    %1735 = vmatpush.bf16.msra.mxu0 %v1691
    %1736 = vmatpush.bf16.msra.mxu0 %v1690
    %1737 = vmatpush.bf16.msra.mxu0 %v1689
    %1738 = vmatpush.bf16.msra.mxu0 %v1688
    %1739 = vmatmul.bf16.gmra.mxu0 %v1221
    %v1740 = vpop.f32.mrf.mxu0
    %v1741 = vadd.f32 %v1722, %v1740
    %v1742 = vpop.f32.mrf.mxu0
    %v1743 = vadd.f32 %v1724, %v1742
    %1744 = vmatmul.bf16.gmra.mxu0 %v1223
    %v1745 = vpop.f32.mrf.mxu0
    %v1746 = vadd.f32 %v1727, %v1745
    %v1747 = vpop.f32.mrf.mxu0
    %v1748 = vadd.f32 %v1729, %v1747
    %1749 = vdwg.mxu0
    %v1782 = vunpack.c.l.b16 %v1551
    %v1783 = vunpack.c.l.b16 %v1552
    %v1784 = vunpack.c.l.b16 %v1553
    %v1785 = vunpack.c.l.b16 %v1554
    %v1786 = vunpack.c.l.b16 %v1555
    %v1787 = vunpack.c.l.b16 %v1556
    %v1788 = vunpack.c.l.b16 %v1557
    %v1789 = vunpack.c.l.b16 %v1558
    %v1790 = vunpack.c.l.b16 %v1559
    %v1791 = vunpack.c.l.b16 %v1560
    %v1792 = vunpack.c.l.b16 %v1561
    %v1793 = vunpack.c.l.b16 %v1562
    %v1794 = vunpack.c.l.b16 %v1563
    %v1795 = vunpack.c.l.b16 %v1564
    %v1796 = vunpack.c.l.b16 %v1565
    %v1797 = vunpack.c.l.b16 %v1566
    %v1798 = vunpack.c.l.b16 %v1567
    %v1799 = vunpack.c.l.b16 %v1568
    %v1800 = vunpack.c.l.b16 %v1569
    %v1801 = vunpack.c.l.b16 %v1570
    %v1802 = vunpack.c.l.b16 %v1571
    %v1803 = vunpack.c.l.b16 %v1572
    %v1804 = vunpack.c.l.b16 %v1573
    %v1805 = vunpack.c.l.b16 %v1574
    %v1806 = vunpack.c.l.b16 %v1575
    %v1807 = vunpack.c.l.b16 %v1576
    %v1808 = vunpack.c.l.b16 %v1577
    %v1809 = vunpack.c.l.b16 %v1578
    %v1810 = vunpack.c.l.b16 %v1579
    %v1811 = vunpack.c.l.b16 %v1580
    %v1812 = vunpack.c.l.b16 %v1581
    %v1813 = vunpack.c.l.b16 %v1582
    %v1814 = vpack.c.b16 %v1783, %v1782
    %v1815 = vpack.c.b16 %v1785, %v1784
    %v1816 = vpack.c.b16 %v1787, %v1786
    %v1817 = vpack.c.b16 %v1789, %v1788
    %v1818 = vpack.c.b16 %v1791, %v1790
    %v1819 = vpack.c.b16 %v1793, %v1792
    %v1820 = vpack.c.b16 %v1795, %v1794
    %v1821 = vpack.c.b16 %v1797, %v1796
    %v1822 = vpack.c.b16 %v1799, %v1798
    %v1823 = vpack.c.b16 %v1801, %v1800
    %v1824 = vpack.c.b16 %v1803, %v1802
    %v1825 = vpack.c.b16 %v1805, %v1804
    %v1826 = vpack.c.b16 %v1807, %v1806
    %v1827 = vpack.c.b16 %v1809, %v1808
    %v1828 = vpack.c.b16 %v1811, %v1810
    %v1829 = vpack.c.b16 %v1813, %v1812
    %1846 = vmatpush.bf16.msra.mxu0 %v1821
    %1847 = vmatpush.bf16.msra.mxu0 %v1820
    %1848 = vmatpush.bf16.msra.mxu0 %v1819
    %1849 = vmatpush.bf16.msra.mxu0 %v1818
    %1850 = vmatpush.bf16.msra.mxu0 %v1817
    %1851 = vmatpush.bf16.msra.mxu0 %v1816
    %1852 = vmatpush.bf16.msra.mxu0 %v1815
    %1853 = vmatpush.bf16.msra.mxu0 %v1814
    %1854 = vmatmul.bf16.gmra.mxu0 %v1220
    %v1855 = vpop.f32.mrf.mxu0
    %v1856 = vadd.f32 %v1741, %v1855
    %v1857 = vpop.f32.mrf.mxu0
    %v1858 = vadd.f32 %v1743, %v1857
    %1859 = vmatmul.bf16.gmra.mxu0 %v1222
    %v1860 = vpop.f32.mrf.mxu0
    %v1861 = vadd.f32 %v1746, %v1860
    %v1862 = vpop.f32.mrf.mxu0
    %v1863 = vadd.f32 %v1748, %v1862
    %1864 = vdwg.mxu0
    %1865 = vmatpush.bf16.msra.mxu0 %v1829
    %1866 = vmatpush.bf16.msra.mxu0 %v1828
    %1867 = vmatpush.bf16.msra.mxu0 %v1827
    %1868 = vmatpush.bf16.msra.mxu0 %v1826
    %1869 = vmatpush.bf16.msra.mxu0 %v1825
    %1870 = vmatpush.bf16.msra.mxu0 %v1824
    %1871 = vmatpush.bf16.msra.mxu0 %v1823
    %1872 = vmatpush.bf16.msra.mxu0 %v1822
    %1873 = vmatmul.bf16.gmra.mxu0 %v1221
    %v1874 = vpop.f32.mrf.mxu0
    %v1875 = vadd.f32 %v1856, %v1874
    %v1876 = vpop.f32.mrf.mxu0
    %v1877 = vadd.f32 %v1858, %v1876
    %1878 = vmatmul.bf16.gmra.mxu0 %v1223
    %v1879 = vpop.f32.mrf.mxu0
    %v1880 = vadd.f32 %v1861, %v1879
    %v1881 = vpop.f32.mrf.mxu0
    %v1882 = vadd.f32 %v1863, %v1881
    %1883 = vdwg.mxu0
    %1884 = vmatpush.bf16.msra.mxu0 %v1821
    %1885 = vmatpush.bf16.msra.mxu0 %v1820
    %1886 = vmatpush.bf16.msra.mxu0 %v1819
    %1887 = vmatpush.bf16.msra.mxu0 %v1818
    %1888 = vmatpush.bf16.msra.mxu0 %v1817
    %1889 = vmatpush.bf16.msra.mxu0 %v1816
    %1890 = vmatpush.bf16.msra.mxu0 %v1815
    %1891 = vmatpush.bf16.msra.mxu0 %v1814
    %1892 = vmatmul.bf16.gmra.mxu0 %v1139
    %v1893 = vpop.f32.mrf.mxu0
    %v1894 = vadd.f32 0.0, %v1893
    %v1895 = vpop.f32.mrf.mxu0
    %v1896 = vadd.f32 0.0, %v1895
    %1897 = vmatmul.bf16.gmra.mxu0 %v1141
    %v1898 = vpop.f32.mrf.mxu0
    %v1899 = vadd.f32 0.0, %v1898
    %v1900 = vpop.f32.mrf.mxu0
    %v1901 = vadd.f32 0.0, %v1900
    %1902 = vdwg.mxu0
    %1903 = vmatpush.bf16.msra.mxu0 %v1829
    %1904 = vmatpush.bf16.msra.mxu0 %v1828
    %1905 = vmatpush.bf16.msra.mxu0 %v1827
    %1906 = vmatpush.bf16.msra.mxu0 %v1826
    %1907 = vmatpush.bf16.msra.mxu0 %v1825
    %1908 = vmatpush.bf16.msra.mxu0 %v1824
    %1909 = vmatpush.bf16.msra.mxu0 %v1823
    %1910 = vmatpush.bf16.msra.mxu0 %v1822
    %1911 = vmatmul.bf16.gmra.mxu0 %v1140
    %v1912 = vpop.f32.mrf.mxu0
    %v1913 = vadd.f32 %v1894, %v1912
    %v1914 = vpop.f32.mrf.mxu0
    %v1915 = vadd.f32 %v1896, %v1914
    %1916 = vmatmul.bf16.gmra.mxu0 %v1142
    %v1917 = vpop.f32.mrf.mxu0
    %v1918 = vadd.f32 %v1899, %v1917
    %v1919 = vpop.f32.mrf.mxu0
    %v1920 = vadd.f32 %v1901, %v1919
    %1921 = vdwg.mxu0
    %v1922 = vadd.f32 %v1875, %v1913
    %v1923 = vadd.f32 %v1877, %v1915
    %v1924 = vadd.f32 %v1880, %v1918
    %v1925 = vadd.f32 %v1882, %v1920
    %v1926 = vadd.f32 %v1546, %v1922
    %v1927 = vadd.f32 %v1547, %v1923
    %v1928 = vadd.f32 %v1548, %v1924
    %v1929 = vadd.f32 %v1549, %v1925
    %s1930 = scalar_lea.vmem %s2, 256
    %v1931 = vld [vmem:[%s1930] sm:$0xf]
    %v1932 = vld [vmem:[%s1930 + $0x4] sm:$0xf]
    %v1933 = vld [vmem:[%s1930 + $0x8] sm:$0xf]
    %v1934 = vld [vmem:[%s1930 + $0xc] sm:$0xf]
    %v1935 = vld [vmem:[%s1930 + $0x10] sm:$0xf]
    %v1936 = vld [vmem:[%s1930 + $0x14] sm:$0xf]
    %v1937 = vld [vmem:[%s1930 + $0x18] sm:$0xf]
    %v1938 = vld [vmem:[%s1930 + $0x1c] sm:$0xf]
    %v1939 = vld [vmem:[%s1930 + $0x20] sm:$0xf]
    %v1940 = vld [vmem:[%s1930 + $0x24] sm:$0xf]
    %v1941 = vld [vmem:[%s1930 + $0x28] sm:$0xf]
    %v1942 = vld [vmem:[%s1930 + $0x2c] sm:$0xf]
    %v1943 = vld [vmem:[%s1930 + $0x30] sm:$0xf]
    %v1944 = vld [vmem:[%s1930 + $0x34] sm:$0xf]
    %v1945 = vld [vmem:[%s1930 + $0x38] sm:$0xf]
    %v1946 = vld [vmem:[%s1930 + $0x3c] sm:$0xf]
    %v1947 = vld [vmem:[%s1930 + $0x40] sm:$0xf]
    %v1948 = vld [vmem:[%s1930 + $0x44] sm:$0xf]
    %v1949 = vld [vmem:[%s1930 + $0x48] sm:$0xf]
    %v1950 = vld [vmem:[%s1930 + $0x4c] sm:$0xf]
    %v1951 = vld [vmem:[%s1930 + $0x50] sm:$0xf]
    %v1952 = vld [vmem:[%s1930 + $0x54] sm:$0xf]
    %v1953 = vld [vmem:[%s1930 + $0x58] sm:$0xf]
    %v1954 = vld [vmem:[%s1930 + $0x5c] sm:$0xf]
    %v1955 = vld [vmem:[%s1930 + $0x60] sm:$0xf]
    %v1956 = vld [vmem:[%s1930 + $0x64] sm:$0xf]
    %v1957 = vld [vmem:[%s1930 + $0x68] sm:$0xf]
    %v1958 = vld [vmem:[%s1930 + $0x6c] sm:$0xf]
    %v1959 = vld [vmem:[%s1930 + $0x70] sm:$0xf]
    %v1960 = vld [vmem:[%s1930 + $0x74] sm:$0xf]
    %v1961 = vld [vmem:[%s1930 + $0x78] sm:$0xf]
    %v1962 = vld [vmem:[%s1930 + $0x7c] sm:$0xf]
    %s1963 = scalar_lea.vmem %s2, 640
    %v1964 = vld [vmem:[%s1963] sm:$0xf]
    %v1965 = vld [vmem:[%s1963 + $0x4] sm:$0xf]
    %v1966 = vld [vmem:[%s1963 + $0x8] sm:$0xf]
    %v1967 = vld [vmem:[%s1963 + $0xc] sm:$0xf]
    %v1968 = vld [vmem:[%s1963 + $0x10] sm:$0xf]
    %v1969 = vld [vmem:[%s1963 + $0x14] sm:$0xf]
    %v1970 = vld [vmem:[%s1963 + $0x18] sm:$0xf]
    %v1971 = vld [vmem:[%s1963 + $0x1c] sm:$0xf]
    %v1972 = vld [vmem:[%s1963 + $0x20] sm:$0xf]
    %v1973 = vld [vmem:[%s1963 + $0x24] sm:$0xf]
    %v1974 = vld [vmem:[%s1963 + $0x28] sm:$0xf]
    %v1975 = vld [vmem:[%s1963 + $0x2c] sm:$0xf]
    %v1976 = vld [vmem:[%s1963 + $0x30] sm:$0xf]
    %v1977 = vld [vmem:[%s1963 + $0x34] sm:$0xf]
    %v1978 = vld [vmem:[%s1963 + $0x38] sm:$0xf]
    %v1979 = vld [vmem:[%s1963 + $0x3c] sm:$0xf]
    %v1980 = vld [vmem:[%s1963 + $0x40] sm:$0xf]
    %v1981 = vld [vmem:[%s1963 + $0x44] sm:$0xf]
    %v1982 = vld [vmem:[%s1963 + $0x48] sm:$0xf]
    %v1983 = vld [vmem:[%s1963 + $0x4c] sm:$0xf]
    %v1984 = vld [vmem:[%s1963 + $0x50] sm:$0xf]
    %v1985 = vld [vmem:[%s1963 + $0x54] sm:$0xf]
    %v1986 = vld [vmem:[%s1963 + $0x58] sm:$0xf]
    %v1987 = vld [vmem:[%s1963 + $0x5c] sm:$0xf]
    %v1988 = vld [vmem:[%s1963 + $0x60] sm:$0xf]
    %v1989 = vld [vmem:[%s1963 + $0x64] sm:$0xf]
    %v1990 = vld [vmem:[%s1963 + $0x68] sm:$0xf]
    %v1991 = vld [vmem:[%s1963 + $0x6c] sm:$0xf]
    %v1992 = vld [vmem:[%s1963 + $0x70] sm:$0xf]
    %v1993 = vld [vmem:[%s1963 + $0x74] sm:$0xf]
    %v1994 = vld [vmem:[%s1963 + $0x78] sm:$0xf]
    %v1995 = vld [vmem:[%s1963 + $0x7c] sm:$0xf]
    %v2028 = vunpack.c.l.b16 %v1964
    %v2029 = vunpack.c.l.b16 %v1965
    %v2030 = vunpack.c.l.b16 %v1966
    %v2031 = vunpack.c.l.b16 %v1967
    %v2032 = vunpack.c.l.b16 %v1968
    %v2033 = vunpack.c.l.b16 %v1969
    %v2034 = vunpack.c.l.b16 %v1970
    %v2035 = vunpack.c.l.b16 %v1971
    %v2036 = vunpack.c.l.b16 %v1972
    %v2037 = vunpack.c.l.b16 %v1973
    %v2038 = vunpack.c.l.b16 %v1974
    %v2039 = vunpack.c.l.b16 %v1975
    %v2040 = vunpack.c.l.b16 %v1976
    %v2041 = vunpack.c.l.b16 %v1977
    %v2042 = vunpack.c.l.b16 %v1978
    %v2043 = vunpack.c.l.b16 %v1979
    %v2044 = vunpack.c.l.b16 %v1980
    %v2045 = vunpack.c.l.b16 %v1981
    %v2046 = vunpack.c.l.b16 %v1982
    %v2047 = vunpack.c.l.b16 %v1983
    %v2048 = vunpack.c.l.b16 %v1984
    %v2049 = vunpack.c.l.b16 %v1985
    %v2050 = vunpack.c.l.b16 %v1986
    %v2051 = vunpack.c.l.b16 %v1987
    %v2052 = vunpack.c.l.b16 %v1988
    %v2053 = vunpack.c.l.b16 %v1989
    %v2054 = vunpack.c.l.b16 %v1990
    %v2055 = vunpack.c.l.b16 %v1991
    %v2056 = vunpack.c.l.b16 %v1992
    %v2057 = vunpack.c.l.b16 %v1993
    %v2058 = vunpack.c.l.b16 %v1994
    %v2059 = vunpack.c.l.b16 %v1995
    %v2060 = vpack.c.b16 %v2029, %v2028
    %v2061 = vpack.c.b16 %v2031, %v2030
    %v2062 = vpack.c.b16 %v2033, %v2032
    %v2063 = vpack.c.b16 %v2035, %v2034
    %v2064 = vpack.c.b16 %v2037, %v2036
    %v2065 = vpack.c.b16 %v2039, %v2038
    %v2066 = vpack.c.b16 %v2041, %v2040
    %v2067 = vpack.c.b16 %v2043, %v2042
    %v2068 = vpack.c.b16 %v2045, %v2044
    %v2069 = vpack.c.b16 %v2047, %v2046
    %v2070 = vpack.c.b16 %v2049, %v2048
    %v2071 = vpack.c.b16 %v2051, %v2050
    %v2072 = vpack.c.b16 %v2053, %v2052
    %v2073 = vpack.c.b16 %v2055, %v2054
    %v2074 = vpack.c.b16 %v2057, %v2056
    %v2075 = vpack.c.b16 %v2059, %v2058
    %2092 = vmatpush.bf16.msra.mxu0 %v2067
    %2093 = vmatpush.bf16.msra.mxu0 %v2066
    %2094 = vmatpush.bf16.msra.mxu0 %v2065
    %2095 = vmatpush.bf16.msra.mxu0 %v2064
    %2096 = vmatpush.bf16.msra.mxu0 %v2063
    %2097 = vmatpush.bf16.msra.mxu0 %v2062
    %2098 = vmatpush.bf16.msra.mxu0 %v2061
    %2099 = vmatpush.bf16.msra.mxu0 %v2060
    %2100 = vmatmul.bf16.gmra.mxu0 %v1220
    %v2101 = vpop.f32.mrf.mxu0
    %v2102 = vadd.f32 0.0, %v2101
    %v2103 = vpop.f32.mrf.mxu0
    %v2104 = vadd.f32 0.0, %v2103
    %2105 = vmatmul.bf16.gmra.mxu0 %v1222
    %v2106 = vpop.f32.mrf.mxu0
    %v2107 = vadd.f32 0.0, %v2106
    %v2108 = vpop.f32.mrf.mxu0
    %v2109 = vadd.f32 0.0, %v2108
    %2110 = vdwg.mxu0
    %2111 = vmatpush.bf16.msra.mxu0 %v2075
    %2112 = vmatpush.bf16.msra.mxu0 %v2074
    %2113 = vmatpush.bf16.msra.mxu0 %v2073
    %2114 = vmatpush.bf16.msra.mxu0 %v2072
    %2115 = vmatpush.bf16.msra.mxu0 %v2071
    %2116 = vmatpush.bf16.msra.mxu0 %v2070
    %2117 = vmatpush.bf16.msra.mxu0 %v2069
    %2118 = vmatpush.bf16.msra.mxu0 %v2068
    %2119 = vmatmul.bf16.gmra.mxu0 %v1221
    %v2120 = vpop.f32.mrf.mxu0
    %v2121 = vadd.f32 %v2102, %v2120
    %v2122 = vpop.f32.mrf.mxu0
    %v2123 = vadd.f32 %v2104, %v2122
    %2124 = vmatmul.bf16.gmra.mxu0 %v1223
    %v2125 = vpop.f32.mrf.mxu0
    %v2126 = vadd.f32 %v2107, %v2125
    %v2127 = vpop.f32.mrf.mxu0
    %v2128 = vadd.f32 %v2109, %v2127
    %2129 = vdwg.mxu0
    %v2162 = vunpack.c.l.b16 %v1931
    %v2163 = vunpack.c.l.b16 %v1932
    %v2164 = vunpack.c.l.b16 %v1933
    %v2165 = vunpack.c.l.b16 %v1934
    %v2166 = vunpack.c.l.b16 %v1935
    %v2167 = vunpack.c.l.b16 %v1936
    %v2168 = vunpack.c.l.b16 %v1937
    %v2169 = vunpack.c.l.b16 %v1938
    %v2170 = vunpack.c.l.b16 %v1939
    %v2171 = vunpack.c.l.b16 %v1940
    %v2172 = vunpack.c.l.b16 %v1941
    %v2173 = vunpack.c.l.b16 %v1942
    %v2174 = vunpack.c.l.b16 %v1943
    %v2175 = vunpack.c.l.b16 %v1944
    %v2176 = vunpack.c.l.b16 %v1945
    %v2177 = vunpack.c.l.b16 %v1946
    %v2178 = vunpack.c.l.b16 %v1947
    %v2179 = vunpack.c.l.b16 %v1948
    %v2180 = vunpack.c.l.b16 %v1949
    %v2181 = vunpack.c.l.b16 %v1950
    %v2182 = vunpack.c.l.b16 %v1951
    %v2183 = vunpack.c.l.b16 %v1952
    %v2184 = vunpack.c.l.b16 %v1953
    %v2185 = vunpack.c.l.b16 %v1954
    %v2186 = vunpack.c.l.b16 %v1955
    %v2187 = vunpack.c.l.b16 %v1956
    %v2188 = vunpack.c.l.b16 %v1957
    %v2189 = vunpack.c.l.b16 %v1958
    %v2190 = vunpack.c.l.b16 %v1959
    %v2191 = vunpack.c.l.b16 %v1960
    %v2192 = vunpack.c.l.b16 %v1961
    %v2193 = vunpack.c.l.b16 %v1962
    %v2194 = vpack.c.b16 %v2163, %v2162
    %v2195 = vpack.c.b16 %v2165, %v2164
    %v2196 = vpack.c.b16 %v2167, %v2166
    %v2197 = vpack.c.b16 %v2169, %v2168
    %v2198 = vpack.c.b16 %v2171, %v2170
    %v2199 = vpack.c.b16 %v2173, %v2172
    %v2200 = vpack.c.b16 %v2175, %v2174
    %v2201 = vpack.c.b16 %v2177, %v2176
    %v2202 = vpack.c.b16 %v2179, %v2178
    %v2203 = vpack.c.b16 %v2181, %v2180
    %v2204 = vpack.c.b16 %v2183, %v2182
    %v2205 = vpack.c.b16 %v2185, %v2184
    %v2206 = vpack.c.b16 %v2187, %v2186
    %v2207 = vpack.c.b16 %v2189, %v2188
    %v2208 = vpack.c.b16 %v2191, %v2190
    %v2209 = vpack.c.b16 %v2193, %v2192
    %2226 = vmatpush.bf16.msra.mxu0 %v2201
    %2227 = vmatpush.bf16.msra.mxu0 %v2200
    %2228 = vmatpush.bf16.msra.mxu0 %v2199
    %2229 = vmatpush.bf16.msra.mxu0 %v2198
    %2230 = vmatpush.bf16.msra.mxu0 %v2197
    %2231 = vmatpush.bf16.msra.mxu0 %v2196
    %2232 = vmatpush.bf16.msra.mxu0 %v2195
    %2233 = vmatpush.bf16.msra.mxu0 %v2194
    %2234 = vmatmul.bf16.gmra.mxu0 %v1220
    %v2235 = vpop.f32.mrf.mxu0
    %v2236 = vadd.f32 %v2121, %v2235
    %v2237 = vpop.f32.mrf.mxu0
    %v2238 = vadd.f32 %v2123, %v2237
    %2239 = vmatmul.bf16.gmra.mxu0 %v1222
    %v2240 = vpop.f32.mrf.mxu0
    %v2241 = vadd.f32 %v2126, %v2240
    %v2242 = vpop.f32.mrf.mxu0
    %v2243 = vadd.f32 %v2128, %v2242
    %2244 = vdwg.mxu0
    %2245 = vmatpush.bf16.msra.mxu0 %v2209
    %2246 = vmatpush.bf16.msra.mxu0 %v2208
    %2247 = vmatpush.bf16.msra.mxu0 %v2207
    %2248 = vmatpush.bf16.msra.mxu0 %v2206
    %2249 = vmatpush.bf16.msra.mxu0 %v2205
    %2250 = vmatpush.bf16.msra.mxu0 %v2204
    %2251 = vmatpush.bf16.msra.mxu0 %v2203
    %2252 = vmatpush.bf16.msra.mxu0 %v2202
    %2253 = vmatmul.bf16.gmra.mxu0 %v1221
    %v2254 = vpop.f32.mrf.mxu0
    %v2255 = vadd.f32 %v2236, %v2254
    %v2256 = vpop.f32.mrf.mxu0
    %v2257 = vadd.f32 %v2238, %v2256
    %2258 = vmatmul.bf16.gmra.mxu0 %v1223
    %v2259 = vpop.f32.mrf.mxu0
    %v2260 = vadd.f32 %v2241, %v2259
    %v2261 = vpop.f32.mrf.mxu0
    %v2262 = vadd.f32 %v2243, %v2261
    %2263 = vdwg.mxu0
    %2264 = vmatpush.bf16.msra.mxu0 %v2201
    %2265 = vmatpush.bf16.msra.mxu0 %v2200
    %2266 = vmatpush.bf16.msra.mxu0 %v2199
    %2267 = vmatpush.bf16.msra.mxu0 %v2198
    %2268 = vmatpush.bf16.msra.mxu0 %v2197
    %2269 = vmatpush.bf16.msra.mxu0 %v2196
    %2270 = vmatpush.bf16.msra.mxu0 %v2195
    %2271 = vmatpush.bf16.msra.mxu0 %v2194
    %2272 = vmatmul.bf16.gmra.mxu0 %v1139
    %v2273 = vpop.f32.mrf.mxu0
    %v2274 = vadd.f32 0.0, %v2273
    %v2275 = vpop.f32.mrf.mxu0
    %v2276 = vadd.f32 0.0, %v2275
    %2277 = vmatmul.bf16.gmra.mxu0 %v1141
    %v2278 = vpop.f32.mrf.mxu0
    %v2279 = vadd.f32 0.0, %v2278
    %v2280 = vpop.f32.mrf.mxu0
    %v2281 = vadd.f32 0.0, %v2280
    %2282 = vdwg.mxu0
    %2283 = vmatpush.bf16.msra.mxu0 %v2209
    %2284 = vmatpush.bf16.msra.mxu0 %v2208
    %2285 = vmatpush.bf16.msra.mxu0 %v2207
    %2286 = vmatpush.bf16.msra.mxu0 %v2206
    %2287 = vmatpush.bf16.msra.mxu0 %v2205
    %2288 = vmatpush.bf16.msra.mxu0 %v2204
    %2289 = vmatpush.bf16.msra.mxu0 %v2203
    %2290 = vmatpush.bf16.msra.mxu0 %v2202
    %2291 = vmatmul.bf16.gmra.mxu0 %v1140
    %v2292 = vpop.f32.mrf.mxu0
    %v2293 = vadd.f32 %v2274, %v2292
    %v2294 = vpop.f32.mrf.mxu0
    %v2295 = vadd.f32 %v2276, %v2294
    %2296 = vmatmul.bf16.gmra.mxu0 %v1142
    %v2297 = vpop.f32.mrf.mxu0
    %v2298 = vadd.f32 %v2279, %v2297
    %v2299 = vpop.f32.mrf.mxu0
    %v2300 = vadd.f32 %v2281, %v2299
    %2301 = vdwg.mxu0
    %v2302 = vadd.f32 %v2255, %v2293
    %v2303 = vadd.f32 %v2257, %v2295
    %v2304 = vadd.f32 %v2260, %v2298
    %v2305 = vadd.f32 %v2262, %v2300
    %v2306 = vrot.slane %v2302, 1
    %v2307 = vrot.slane %v2303, 1
    %v2308 = vrot.slane %v2304, 1
    %v2309 = vrot.slane %v2305, 1
    %v2310 = vsel %vm824, %v2308, %v2309
    %v2311 = vsel %vm824, %v2307, %v2308
    %v2312 = vsel %vm824, %v2306, %v2307
    %v2313 = vsel %vm824, %v2309, %v2306
    %v2314 = vsel %vm812, 0.0, %v2312
    %v2315 = vsel %vm813, 0.0, %v2311
    %v2316 = vsel %vm814, 0.0, %v2310
    %v2317 = vsel %vm815, 0.0, %v2313
    %v2318 = vadd.f32 %v1926, %v2314
    %v2319 = vadd.f32 %v1927, %v2315
    %v2320 = vadd.f32 %v1928, %v2316
    %v2321 = vadd.f32 %v1929, %v2317
    %v2322 = vadd.f32 %v22, %v2318
    %v2323 = vadd.f32 %v23, %v2319
    %v2324 = vadd.f32 %v24, %v2320
    %v2325 = vadd.f32 %v25, %v2321
    %v2326 = vsel %vm107, %v2322, 0.0
    %v2327 = vsel %vm107, %v2323, 0.0
    %v2328 = vadd.f32 %v2326, %v2327
    %2329 = vadd.xlane.f32.xlu0 %v2328
    %v2330 = vpop.xlane.xlu0 %2329
    %v2331 = vrot.slane %v2330, 4
    %v2332 = vadd.f32 %v2330, %v2331
    %v2333 = vrot.slane %v2332, 2
    %v2334 = vadd.f32 %v2332, %v2333
    %v2335 = vrot.slane %v2334, 1
    %v2336 = vadd.f32 %v2334, %v2335
    %s2337 = vtos %v2336
    %s2338 = smul.f32 %s2337, 0.0009765625
    %v2339 = vmul.f32 %v2322, %v2322
    %v2340 = vmul.f32 %v2323, %v2323
    %v2341 = vsel %vm107, %v2339, 0.0
    %v2342 = vsel %vm107, %v2340, 0.0
    %v2343 = vadd.f32 %v2341, %v2342
    %2344 = vadd.xlane.f32.xlu0 %v2343
    %v2345 = vpop.xlane.xlu0 %2344
    %v2346 = vrot.slane %v2345, 4
    %v2347 = vadd.f32 %v2345, %v2346
    %v2348 = vrot.slane %v2347, 2
    %v2349 = vadd.f32 %v2347, %v2348
    %v2350 = vrot.slane %v2349, 1
    %v2351 = vadd.f32 %v2349, %v2350
    %s2352 = vtos %v2351
    %s2353 = smul.f32 %s2352, 0.0009765625
    %s2354 = smul.f32 %s2338, %s2338
    %s2355 = ssub.f32 %s2353, %s2354
    %v2356 = vstv %s2338
    %v2357 = vsub.f32 %v2322, %v2356
    %v2358 = vsub.f32 %v2323, %v2356
    %s2359 = sadd.f32 %s2355, 1e-05
    %v2360 = vstv %s2359
    %v2361 = vrsqrt.pop %v2360
    %v2362 = vmul.f32 %v2361, %v2360
    %v2363 = vmul.f32 %v2362, %v2361
    %v2364 = vmul.f32 0.5, %v2363
    %v2365 = vsub.f32 1.5, %v2364
    %v2366 = vmul.f32 %v2361, %v2365
    %vm2367 = vweird.f32 %v2360
    %vm2368 = vweird.f32 %v2361
    %vm2369 = vmor %vm2367, %vm2368
    %v2370 = vsel %vm2369, %v2361, %v2366
    %s2371 = vtos %v2370
    %v2372 = vstv %s2371
    %v2373 = vmul.f32 %v2357, %v2372
    %v2374 = vmul.f32 %v2358, %v2372
    %v2375 = vsel %vm107, %v2324, 0.0
    %v2376 = vsel %vm107, %v2325, 0.0
    %v2377 = vadd.f32 %v2375, %v2376
    %2378 = vadd.xlane.f32.xlu0 %v2377
    %v2379 = vpop.xlane.xlu0 %2378
    %v2380 = vrot.slane %v2379, 4
    %v2381 = vadd.f32 %v2379, %v2380
    %v2382 = vrot.slane %v2381, 2
    %v2383 = vadd.f32 %v2381, %v2382
    %v2384 = vrot.slane %v2383, 1
    %v2385 = vadd.f32 %v2383, %v2384
    %s2386 = vtos %v2385
    %s2387 = smul.f32 %s2386, 0.0009765625
    %v2388 = vmul.f32 %v2324, %v2324
    %v2389 = vmul.f32 %v2325, %v2325
    %v2390 = vsel %vm107, %v2388, 0.0
    %v2391 = vsel %vm107, %v2389, 0.0
    %v2392 = vadd.f32 %v2390, %v2391
    %2393 = vadd.xlane.f32.xlu0 %v2392
    %v2394 = vpop.xlane.xlu0 %2393
    %v2395 = vrot.slane %v2394, 4
    %v2396 = vadd.f32 %v2394, %v2395
    %v2397 = vrot.slane %v2396, 2
    %v2398 = vadd.f32 %v2396, %v2397
    %v2399 = vrot.slane %v2398, 1
    %v2400 = vadd.f32 %v2398, %v2399
    %s2401 = vtos %v2400
    %s2402 = smul.f32 %s2401, 0.0009765625
    %s2403 = smul.f32 %s2387, %s2387
    %s2404 = ssub.f32 %s2402, %s2403
    %v2405 = vstv %s2387
    %v2406 = vsub.f32 %v2324, %v2405
    %v2407 = vsub.f32 %v2325, %v2405
    %s2408 = sadd.f32 %s2404, 1e-05
    %v2409 = vstv %s2408
    %v2410 = vrsqrt.pop %v2409
    %v2411 = vmul.f32 %v2410, %v2409
    %v2412 = vmul.f32 %v2411, %v2410
    %v2413 = vmul.f32 0.5, %v2412
    %v2414 = vsub.f32 1.5, %v2413
    %v2415 = vmul.f32 %v2410, %v2414
    %vm2416 = vweird.f32 %v2409
    %vm2417 = vweird.f32 %v2410
    %vm2418 = vmor %vm2416, %vm2417
    %v2419 = vsel %vm2418, %v2410, %v2415
    %s2420 = vtos %v2419
    %v2421 = vstv %s2420
    %v2422 = vmul.f32 %v2406, %v2421
    %v2423 = vmul.f32 %v2407, %v2421
    %v2424 = vpack.c.bf16 %v2373, %v2373
    %v2425 = vpack.c.bf16 %v2374, %v2374
    %v2426 = vpack.c.bf16 %v2422, %v2422
    %v2427 = vpack.c.bf16 %v2423, %v2423
    %v2428 = vunpack.c.l.bf16 %v2424
    %v2429 = vunpack.c.l.bf16 %v2425
    %v2430 = vunpack.c.l.bf16 %v2426
    %v2431 = vunpack.c.l.bf16 %v2427
    %v2432 = vsub.f32 %v2373, %v2428
    %v2433 = vsub.f32 %v2374, %v2429
    %v2434 = vsub.f32 %v2422, %v2430
    %v2435 = vsub.f32 %v2423, %v2431
    %v2436 = vpack.c.bf16 %v2433, %v2432
    %v2437 = vpack.c.bf16 %v2435, %v2434
    %v2438 = vld [vmem:[%s3] sm:$0xff]
    %v2439 = vld [vmem:[%s3 + $0x8] sm:$0xff]
    %v2440 = vld [vmem:[%s3 + $0x10] sm:$0xff]
    %v2441 = vld [vmem:[%s3 + $0x18] sm:$0xff]
    %v2442 = vld [vmem:[%s3 + $0x20] sm:$0xff]
    %v2443 = vld [vmem:[%s3 + $0x28] sm:$0xff]
    %v2444 = vld [vmem:[%s3 + $0x30] sm:$0xff]
    %v2445 = vld [vmem:[%s3 + $0x38] sm:$0xff]
    %s2446 = scalar_lea.vmem %s3, 192
    %v2447 = vld [vmem:[%s2446] sm:$0xff]
    %v2448 = vld [vmem:[%s2446 + $0x8] sm:$0xff]
    %v2449 = vld [vmem:[%s2446 + $0x10] sm:$0xff]
    %v2450 = vld [vmem:[%s2446 + $0x18] sm:$0xff]
    %v2451 = vld [vmem:[%s2446 + $0x20] sm:$0xff]
    %v2452 = vld [vmem:[%s2446 + $0x28] sm:$0xff]
    %v2453 = vld [vmem:[%s2446 + $0x30] sm:$0xff]
    %v2454 = vld [vmem:[%s2446 + $0x38] sm:$0xff]
    %v2459 = vunpack.c.l.b16 %v2424
    %v2460 = vunpack.c.l.b16 %v2425
    %v2461 = vunpack.c.l.b16 %v2426
    %v2462 = vunpack.c.l.b16 %v2427
    %v2463 = vpack.c.b16 %v2460, %v2459
    %v2464 = vpack.c.b16 %v2462, %v2461
    %v2473 = vunpack.c.l.b16 %v2447
    %v2474 = vunpack.c.h.b16 %v2447
    %v2475 = vunpack.c.l.b16 %v2448
    %v2476 = vunpack.c.h.b16 %v2448
    %v2477 = vunpack.c.l.b16 %v2449
    %v2478 = vunpack.c.h.b16 %v2449
    %v2479 = vunpack.c.l.b16 %v2450
    %v2480 = vunpack.c.h.b16 %v2450
    %v2481 = vunpack.c.l.b16 %v2451
    %v2482 = vunpack.c.h.b16 %v2451
    %v2483 = vunpack.c.l.b16 %v2452
    %v2484 = vunpack.c.h.b16 %v2452
    %v2485 = vunpack.c.l.b16 %v2453
    %v2486 = vunpack.c.h.b16 %v2453
    %v2487 = vunpack.c.l.b16 %v2454
    %v2488 = vunpack.c.h.b16 %v2454
    %v2489 = vpack.c.b16 %v2475, %v2473
    %v2490 = vpack.c.b16 %v2476, %v2474
    %v2491 = vpack.c.b16 %v2479, %v2477
    %v2492 = vpack.c.b16 %v2480, %v2478
    %v2493 = vpack.c.b16 %v2483, %v2481
    %v2494 = vpack.c.b16 %v2484, %v2482
    %v2495 = vpack.c.b16 %v2487, %v2485
    %v2496 = vpack.c.b16 %v2488, %v2486
    %v2506 = vsel %vm107, %v2463, 0
    %v2509 = vsel %vm107, %v2464, 0
    %2511 = vmatpush.bf16.msra.mxu0 0
    %2512 = vmatpush.bf16.msra.mxu0 0
    %2513 = vmatpush.bf16.msra.mxu0 0
    %2514 = vmatpush.bf16.msra.mxu0 0
    %2515 = vmatpush.bf16.msra.mxu0 %v2495
    %2516 = vmatpush.bf16.msra.mxu0 %v2493
    %2517 = vmatpush.bf16.msra.mxu0 %v2491
    %2518 = vmatpush.bf16.msra.mxu0 %v2489
    %2519 = vmatmul.bf16.gmra.mxu0 %v2506
    %v2520 = vpop.f32.mrf.mxu0
    %v2521 = vadd.f32 0.0, %v2520
    %v2522 = vpop.f32.mrf.mxu0
    %v2523 = vadd.f32 0.0, %v2522
    %2524 = vmatmul.bf16.gmra.mxu0 %v2509
    %v2525 = vpop.f32.mrf.mxu0
    %v2526 = vadd.f32 0.0, %v2525
    %v2527 = vpop.f32.mrf.mxu0
    %v2528 = vadd.f32 0.0, %v2527
    %2529 = vdwg.mxu0
    %2530 = vmatpush.bf16.msra.mxu0 0
    %2531 = vmatpush.bf16.msra.mxu0 0
    %2532 = vmatpush.bf16.msra.mxu0 0
    %2533 = vmatpush.bf16.msra.mxu0 0
    %2534 = vmatpush.bf16.msra.mxu0 %v2496
    %2535 = vmatpush.bf16.msra.mxu0 %v2494
    %2536 = vmatpush.bf16.msra.mxu0 %v2492
    %2537 = vmatpush.bf16.msra.mxu0 %v2490
    %2538 = vmatmul.bf16.gmra.mxu0 %v2506
    %v2539 = vpop.f32.mrf.mxu0
    %v2540 = vadd.f32 0.0, %v2539
    %v2541 = vpop.f32.mrf.mxu0
    %v2542 = vadd.f32 0.0, %v2541
    %2543 = vmatmul.bf16.gmra.mxu0 %v2509
    %v2544 = vpop.f32.mrf.mxu0
    %v2545 = vadd.f32 0.0, %v2544
    %v2546 = vpop.f32.mrf.mxu0
    %v2547 = vadd.f32 0.0, %v2546
    %2548 = vdwg.mxu0
    %v2557 = vunpack.c.l.b16 %v2438
    %v2558 = vunpack.c.h.b16 %v2438
    %v2559 = vunpack.c.l.b16 %v2439
    %v2560 = vunpack.c.h.b16 %v2439
    %v2561 = vunpack.c.l.b16 %v2440
    %v2562 = vunpack.c.h.b16 %v2440
    %v2563 = vunpack.c.l.b16 %v2441
    %v2564 = vunpack.c.h.b16 %v2441
    %v2565 = vunpack.c.l.b16 %v2442
    %v2566 = vunpack.c.h.b16 %v2442
    %v2567 = vunpack.c.l.b16 %v2443
    %v2568 = vunpack.c.h.b16 %v2443
    %v2569 = vunpack.c.l.b16 %v2444
    %v2570 = vunpack.c.h.b16 %v2444
    %v2571 = vunpack.c.l.b16 %v2445
    %v2572 = vunpack.c.h.b16 %v2445
    %v2573 = vpack.c.b16 %v2559, %v2557
    %v2574 = vpack.c.b16 %v2560, %v2558
    %v2575 = vpack.c.b16 %v2563, %v2561
    %v2576 = vpack.c.b16 %v2564, %v2562
    %v2577 = vpack.c.b16 %v2567, %v2565
    %v2578 = vpack.c.b16 %v2568, %v2566
    %v2579 = vpack.c.b16 %v2571, %v2569
    %v2580 = vpack.c.b16 %v2572, %v2570
    %2589 = vmatpush.bf16.msra.mxu0 0
    %2590 = vmatpush.bf16.msra.mxu0 0
    %2591 = vmatpush.bf16.msra.mxu0 0
    %2592 = vmatpush.bf16.msra.mxu0 0
    %2593 = vmatpush.bf16.msra.mxu0 %v2579
    %2594 = vmatpush.bf16.msra.mxu0 %v2577
    %2595 = vmatpush.bf16.msra.mxu0 %v2575
    %2596 = vmatpush.bf16.msra.mxu0 %v2573
    %2597 = vmatmul.bf16.gmra.mxu0 %v2506
    %v2598 = vpop.f32.mrf.mxu0
    %v2599 = vadd.f32 %v2521, %v2598
    %v2600 = vpop.f32.mrf.mxu0
    %v2601 = vadd.f32 %v2523, %v2600
    %2602 = vmatmul.bf16.gmra.mxu0 %v2509
    %v2603 = vpop.f32.mrf.mxu0
    %v2604 = vadd.f32 %v2526, %v2603
    %v2605 = vpop.f32.mrf.mxu0
    %v2606 = vadd.f32 %v2528, %v2605
    %2607 = vdwg.mxu0
    %2608 = vmatpush.bf16.msra.mxu0 0
    %2609 = vmatpush.bf16.msra.mxu0 0
    %2610 = vmatpush.bf16.msra.mxu0 0
    %2611 = vmatpush.bf16.msra.mxu0 0
    %2612 = vmatpush.bf16.msra.mxu0 %v2580
    %2613 = vmatpush.bf16.msra.mxu0 %v2578
    %2614 = vmatpush.bf16.msra.mxu0 %v2576
    %2615 = vmatpush.bf16.msra.mxu0 %v2574
    %2616 = vmatmul.bf16.gmra.mxu0 %v2506
    %v2617 = vpop.f32.mrf.mxu0
    %v2618 = vadd.f32 %v2540, %v2617
    %v2619 = vpop.f32.mrf.mxu0
    %v2620 = vadd.f32 %v2542, %v2619
    %2621 = vmatmul.bf16.gmra.mxu0 %v2509
    %v2622 = vpop.f32.mrf.mxu0
    %v2623 = vadd.f32 %v2545, %v2622
    %v2624 = vpop.f32.mrf.mxu0
    %v2625 = vadd.f32 %v2547, %v2624
    %2626 = vdwg.mxu0
    %v2628 = vsel %vm107, %v2436, 0
    %v2631 = vsel %vm107, %v2437, 0
    %2633 = vmatpush.bf16.msra.mxu0 0
    %2634 = vmatpush.bf16.msra.mxu0 0
    %2635 = vmatpush.bf16.msra.mxu0 0
    %2636 = vmatpush.bf16.msra.mxu0 0
    %2637 = vmatpush.bf16.msra.mxu0 %v2579
    %2638 = vmatpush.bf16.msra.mxu0 %v2577
    %2639 = vmatpush.bf16.msra.mxu0 %v2575
    %2640 = vmatpush.bf16.msra.mxu0 %v2573
    %2641 = vmatmul.bf16.gmra.mxu0 %v2628
    %v2642 = vpop.f32.mrf.mxu0
    %v2643 = vadd.f32 0.0, %v2642
    %v2644 = vpop.f32.mrf.mxu0
    %v2645 = vadd.f32 0.0, %v2644
    %2646 = vmatmul.bf16.gmra.mxu0 %v2631
    %v2647 = vpop.f32.mrf.mxu0
    %v2648 = vadd.f32 0.0, %v2647
    %v2649 = vpop.f32.mrf.mxu0
    %v2650 = vadd.f32 0.0, %v2649
    %2651 = vdwg.mxu0
    %2652 = vmatpush.bf16.msra.mxu0 0
    %2653 = vmatpush.bf16.msra.mxu0 0
    %2654 = vmatpush.bf16.msra.mxu0 0
    %2655 = vmatpush.bf16.msra.mxu0 0
    %2656 = vmatpush.bf16.msra.mxu0 %v2580
    %2657 = vmatpush.bf16.msra.mxu0 %v2578
    %2658 = vmatpush.bf16.msra.mxu0 %v2576
    %2659 = vmatpush.bf16.msra.mxu0 %v2574
    %2660 = vmatmul.bf16.gmra.mxu0 %v2628
    %v2661 = vpop.f32.mrf.mxu0
    %v2662 = vadd.f32 0.0, %v2661
    %v2663 = vpop.f32.mrf.mxu0
    %v2664 = vadd.f32 0.0, %v2663
    %2665 = vmatmul.bf16.gmra.mxu0 %v2631
    %v2666 = vpop.f32.mrf.mxu0
    %v2667 = vadd.f32 0.0, %v2666
    %v2668 = vpop.f32.mrf.mxu0
    %v2669 = vadd.f32 0.0, %v2668
    %2670 = vdwg.mxu0
    %v2671 = vadd.f32 %v2599, %v2643
    %v2672 = vadd.f32 %v2618, %v2662
    %v2673 = vadd.f32 %v2601, %v2645
    %v2674 = vadd.f32 %v2620, %v2664
    %v2675 = vadd.f32 %v2604, %v2648
    %v2676 = vadd.f32 %v2623, %v2667
    %v2677 = vadd.f32 %v2606, %v2650
    %v2678 = vadd.f32 %v2625, %v2669
    %v2679 = vrot.slane %v2671, 7
    %v2680 = vrot.slane %v2672, 7
    %v2681 = vrot.slane %v2673, 7
    %v2682 = vrot.slane %v2674, 7
    %v2683 = vrot.slane %v2675, 7
    %v2684 = vrot.slane %v2676, 7
    %v2685 = vrot.slane %v2677, 7
    %v2686 = vrot.slane %v2678, 7
    %v2687 = vsel %vm347, %v2683, %v2685
    %v2688 = vsel %vm347, %v2684, %v2686
    %v2689 = vsel %vm347, %v2681, %v2683
    %v2690 = vsel %vm347, %v2682, %v2684
    %v2691 = vsel %vm347, %v2679, %v2681
    %v2692 = vsel %vm347, %v2680, %v2682
    %v2693 = vsel %vm347, %v2685, %v2679
    %v2694 = vsel %vm347, %v2686, %v2680
    %v2695 = vsel %vm335, 0.0, %v2693
    %v2696 = vsel %vm335, 0.0, %v2694
    %v2697 = vsel %vm336, 0.0, %v2691
    %v2698 = vsel %vm336, 0.0, %v2692
    %v2699 = vsel %vm337, 0.0, %v2689
    %v2700 = vsel %vm337, 0.0, %v2690
    %v2701 = vsel %vm338, 0.0, %v2687
    %v2702 = vsel %vm338, 0.0, %v2688
    %s2703 = scalar_lea.vmem %s3, 64
    %v2704 = vld [vmem:[%s2703] sm:$0xff]
    %v2705 = vld [vmem:[%s2703 + $0x8] sm:$0xff]
    %v2706 = vld [vmem:[%s2703 + $0x10] sm:$0xff]
    %v2707 = vld [vmem:[%s2703 + $0x18] sm:$0xff]
    %v2708 = vld [vmem:[%s2703 + $0x20] sm:$0xff]
    %v2709 = vld [vmem:[%s2703 + $0x28] sm:$0xff]
    %v2710 = vld [vmem:[%s2703 + $0x30] sm:$0xff]
    %v2711 = vld [vmem:[%s2703 + $0x38] sm:$0xff]
    %s2712 = scalar_lea.vmem %s3, 256
    %v2713 = vld [vmem:[%s2712] sm:$0xff]
    %v2714 = vld [vmem:[%s2712 + $0x8] sm:$0xff]
    %v2715 = vld [vmem:[%s2712 + $0x10] sm:$0xff]
    %v2716 = vld [vmem:[%s2712 + $0x18] sm:$0xff]
    %v2717 = vld [vmem:[%s2712 + $0x20] sm:$0xff]
    %v2718 = vld [vmem:[%s2712 + $0x28] sm:$0xff]
    %v2719 = vld [vmem:[%s2712 + $0x30] sm:$0xff]
    %v2720 = vld [vmem:[%s2712 + $0x38] sm:$0xff]
    %v2729 = vunpack.c.l.b16 %v2713
    %v2730 = vunpack.c.h.b16 %v2713
    %v2731 = vunpack.c.l.b16 %v2714
    %v2732 = vunpack.c.h.b16 %v2714
    %v2733 = vunpack.c.l.b16 %v2715
    %v2734 = vunpack.c.h.b16 %v2715
    %v2735 = vunpack.c.l.b16 %v2716
    %v2736 = vunpack.c.h.b16 %v2716
    %v2737 = vunpack.c.l.b16 %v2717
    %v2738 = vunpack.c.h.b16 %v2717
    %v2739 = vunpack.c.l.b16 %v2718
    %v2740 = vunpack.c.h.b16 %v2718
    %v2741 = vunpack.c.l.b16 %v2719
    %v2742 = vunpack.c.h.b16 %v2719
    %v2743 = vunpack.c.l.b16 %v2720
    %v2744 = vunpack.c.h.b16 %v2720
    %v2745 = vpack.c.b16 %v2731, %v2729
    %v2746 = vpack.c.b16 %v2732, %v2730
    %v2747 = vpack.c.b16 %v2735, %v2733
    %v2748 = vpack.c.b16 %v2736, %v2734
    %v2749 = vpack.c.b16 %v2739, %v2737
    %v2750 = vpack.c.b16 %v2740, %v2738
    %v2751 = vpack.c.b16 %v2743, %v2741
    %v2752 = vpack.c.b16 %v2744, %v2742
    %2761 = vmatpush.bf16.msra.mxu0 0
    %2762 = vmatpush.bf16.msra.mxu0 0
    %2763 = vmatpush.bf16.msra.mxu0 0
    %2764 = vmatpush.bf16.msra.mxu0 0
    %2765 = vmatpush.bf16.msra.mxu0 %v2751
    %2766 = vmatpush.bf16.msra.mxu0 %v2749
    %2767 = vmatpush.bf16.msra.mxu0 %v2747
    %2768 = vmatpush.bf16.msra.mxu0 %v2745
    %2769 = vmatmul.bf16.gmra.mxu0 %v2506
    %v2770 = vpop.f32.mrf.mxu0
    %v2771 = vadd.f32 0.0, %v2770
    %v2772 = vpop.f32.mrf.mxu0
    %v2773 = vadd.f32 0.0, %v2772
    %2774 = vmatmul.bf16.gmra.mxu0 %v2509
    %v2775 = vpop.f32.mrf.mxu0
    %v2776 = vadd.f32 0.0, %v2775
    %v2777 = vpop.f32.mrf.mxu0
    %v2778 = vadd.f32 0.0, %v2777
    %2779 = vdwg.mxu0
    %2780 = vmatpush.bf16.msra.mxu0 0
    %2781 = vmatpush.bf16.msra.mxu0 0
    %2782 = vmatpush.bf16.msra.mxu0 0
    %2783 = vmatpush.bf16.msra.mxu0 0
    %2784 = vmatpush.bf16.msra.mxu0 %v2752
    %2785 = vmatpush.bf16.msra.mxu0 %v2750
    %2786 = vmatpush.bf16.msra.mxu0 %v2748
    %2787 = vmatpush.bf16.msra.mxu0 %v2746
    %2788 = vmatmul.bf16.gmra.mxu0 %v2506
    %v2789 = vpop.f32.mrf.mxu0
    %v2790 = vadd.f32 0.0, %v2789
    %v2791 = vpop.f32.mrf.mxu0
    %v2792 = vadd.f32 0.0, %v2791
    %2793 = vmatmul.bf16.gmra.mxu0 %v2509
    %v2794 = vpop.f32.mrf.mxu0
    %v2795 = vadd.f32 0.0, %v2794
    %v2796 = vpop.f32.mrf.mxu0
    %v2797 = vadd.f32 0.0, %v2796
    %2798 = vdwg.mxu0
    %v2807 = vunpack.c.l.b16 %v2704
    %v2808 = vunpack.c.h.b16 %v2704
    %v2809 = vunpack.c.l.b16 %v2705
    %v2810 = vunpack.c.h.b16 %v2705
    %v2811 = vunpack.c.l.b16 %v2706
    %v2812 = vunpack.c.h.b16 %v2706
    %v2813 = vunpack.c.l.b16 %v2707
    %v2814 = vunpack.c.h.b16 %v2707
    %v2815 = vunpack.c.l.b16 %v2708
    %v2816 = vunpack.c.h.b16 %v2708
    %v2817 = vunpack.c.l.b16 %v2709
    %v2818 = vunpack.c.h.b16 %v2709
    %v2819 = vunpack.c.l.b16 %v2710
    %v2820 = vunpack.c.h.b16 %v2710
    %v2821 = vunpack.c.l.b16 %v2711
    %v2822 = vunpack.c.h.b16 %v2711
    %v2823 = vpack.c.b16 %v2809, %v2807
    %v2824 = vpack.c.b16 %v2810, %v2808
    %v2825 = vpack.c.b16 %v2813, %v2811
    %v2826 = vpack.c.b16 %v2814, %v2812
    %v2827 = vpack.c.b16 %v2817, %v2815
    %v2828 = vpack.c.b16 %v2818, %v2816
    %v2829 = vpack.c.b16 %v2821, %v2819
    %v2830 = vpack.c.b16 %v2822, %v2820
    %2839 = vmatpush.bf16.msra.mxu0 0
    %2840 = vmatpush.bf16.msra.mxu0 0
    %2841 = vmatpush.bf16.msra.mxu0 0
    %2842 = vmatpush.bf16.msra.mxu0 0
    %2843 = vmatpush.bf16.msra.mxu0 %v2829
    %2844 = vmatpush.bf16.msra.mxu0 %v2827
    %2845 = vmatpush.bf16.msra.mxu0 %v2825
    %2846 = vmatpush.bf16.msra.mxu0 %v2823
    %2847 = vmatmul.bf16.gmra.mxu0 %v2506
    %v2848 = vpop.f32.mrf.mxu0
    %v2849 = vadd.f32 %v2771, %v2848
    %v2850 = vpop.f32.mrf.mxu0
    %v2851 = vadd.f32 %v2773, %v2850
    %2852 = vmatmul.bf16.gmra.mxu0 %v2509
    %v2853 = vpop.f32.mrf.mxu0
    %v2854 = vadd.f32 %v2776, %v2853
    %v2855 = vpop.f32.mrf.mxu0
    %v2856 = vadd.f32 %v2778, %v2855
    %2857 = vdwg.mxu0
    %2858 = vmatpush.bf16.msra.mxu0 0
    %2859 = vmatpush.bf16.msra.mxu0 0
    %2860 = vmatpush.bf16.msra.mxu0 0
    %2861 = vmatpush.bf16.msra.mxu0 0
    %2862 = vmatpush.bf16.msra.mxu0 %v2830
    %2863 = vmatpush.bf16.msra.mxu0 %v2828
    %2864 = vmatpush.bf16.msra.mxu0 %v2826
    %2865 = vmatpush.bf16.msra.mxu0 %v2824
    %2866 = vmatmul.bf16.gmra.mxu0 %v2506
    %v2867 = vpop.f32.mrf.mxu0
    %v2868 = vadd.f32 %v2790, %v2867
    %v2869 = vpop.f32.mrf.mxu0
    %v2870 = vadd.f32 %v2792, %v2869
    %2871 = vmatmul.bf16.gmra.mxu0 %v2509
    %v2872 = vpop.f32.mrf.mxu0
    %v2873 = vadd.f32 %v2795, %v2872
    %v2874 = vpop.f32.mrf.mxu0
    %v2875 = vadd.f32 %v2797, %v2874
    %2876 = vdwg.mxu0
    %2877 = vmatpush.bf16.msra.mxu0 0
    %2878 = vmatpush.bf16.msra.mxu0 0
    %2879 = vmatpush.bf16.msra.mxu0 0
    %2880 = vmatpush.bf16.msra.mxu0 0
    %2881 = vmatpush.bf16.msra.mxu0 %v2829
    %2882 = vmatpush.bf16.msra.mxu0 %v2827
    %2883 = vmatpush.bf16.msra.mxu0 %v2825
    %2884 = vmatpush.bf16.msra.mxu0 %v2823
    %2885 = vmatmul.bf16.gmra.mxu0 %v2628
    %v2886 = vpop.f32.mrf.mxu0
    %v2887 = vadd.f32 0.0, %v2886
    %v2888 = vpop.f32.mrf.mxu0
    %v2889 = vadd.f32 0.0, %v2888
    %2890 = vmatmul.bf16.gmra.mxu0 %v2631
    %v2891 = vpop.f32.mrf.mxu0
    %v2892 = vadd.f32 0.0, %v2891
    %v2893 = vpop.f32.mrf.mxu0
    %v2894 = vadd.f32 0.0, %v2893
    %2895 = vdwg.mxu0
    %2896 = vmatpush.bf16.msra.mxu0 0
    %2897 = vmatpush.bf16.msra.mxu0 0
    %2898 = vmatpush.bf16.msra.mxu0 0
    %2899 = vmatpush.bf16.msra.mxu0 0
    %2900 = vmatpush.bf16.msra.mxu0 %v2830
    %2901 = vmatpush.bf16.msra.mxu0 %v2828
    %2902 = vmatpush.bf16.msra.mxu0 %v2826
    %2903 = vmatpush.bf16.msra.mxu0 %v2824
    %2904 = vmatmul.bf16.gmra.mxu0 %v2628
    %v2905 = vpop.f32.mrf.mxu0
    %v2906 = vadd.f32 0.0, %v2905
    %v2907 = vpop.f32.mrf.mxu0
    %v2908 = vadd.f32 0.0, %v2907
    %2909 = vmatmul.bf16.gmra.mxu0 %v2631
    %v2910 = vpop.f32.mrf.mxu0
    %v2911 = vadd.f32 0.0, %v2910
    %v2912 = vpop.f32.mrf.mxu0
    %v2913 = vadd.f32 0.0, %v2912
    %2914 = vdwg.mxu0
    %v2915 = vadd.f32 %v2849, %v2887
    %v2916 = vadd.f32 %v2868, %v2906
    %v2917 = vadd.f32 %v2851, %v2889
    %v2918 = vadd.f32 %v2870, %v2908
    %v2919 = vadd.f32 %v2854, %v2892
    %v2920 = vadd.f32 %v2873, %v2911
    %v2921 = vadd.f32 %v2856, %v2894
    %v2922 = vadd.f32 %v2875, %v2913
    %v2923 = vadd.f32 %v2695, %v2915
    %v2924 = vadd.f32 %v2696, %v2916
    %v2925 = vadd.f32 %v2697, %v2917
    %v2926 = vadd.f32 %v2698, %v2918
    %v2927 = vadd.f32 %v2699, %v2919
    %v2928 = vadd.f32 %v2700, %v2920
    %v2929 = vadd.f32 %v2701, %v2921
    %v2930 = vadd.f32 %v2702, %v2922
    %s2931 = scalar_lea.vmem %s3, 128
    %v2932 = vld [vmem:[%s2931] sm:$0xff]
    %v2933 = vld [vmem:[%s2931 + $0x8] sm:$0xff]
    %v2934 = vld [vmem:[%s2931 + $0x10] sm:$0xff]
    %v2935 = vld [vmem:[%s2931 + $0x18] sm:$0xff]
    %v2936 = vld [vmem:[%s2931 + $0x20] sm:$0xff]
    %v2937 = vld [vmem:[%s2931 + $0x28] sm:$0xff]
    %v2938 = vld [vmem:[%s2931 + $0x30] sm:$0xff]
    %v2939 = vld [vmem:[%s2931 + $0x38] sm:$0xff]
    %s2940 = scalar_lea.vmem %s3, 320
    %v2941 = vld [vmem:[%s2940] sm:$0xff]
    %v2942 = vld [vmem:[%s2940 + $0x8] sm:$0xff]
    %v2943 = vld [vmem:[%s2940 + $0x10] sm:$0xff]
    %v2944 = vld [vmem:[%s2940 + $0x18] sm:$0xff]
    %v2945 = vld [vmem:[%s2940 + $0x20] sm:$0xff]
    %v2946 = vld [vmem:[%s2940 + $0x28] sm:$0xff]
    %v2947 = vld [vmem:[%s2940 + $0x30] sm:$0xff]
    %v2948 = vld [vmem:[%s2940 + $0x38] sm:$0xff]
    %v2957 = vunpack.c.l.b16 %v2941
    %v2958 = vunpack.c.h.b16 %v2941
    %v2959 = vunpack.c.l.b16 %v2942
    %v2960 = vunpack.c.h.b16 %v2942
    %v2961 = vunpack.c.l.b16 %v2943
    %v2962 = vunpack.c.h.b16 %v2943
    %v2963 = vunpack.c.l.b16 %v2944
    %v2964 = vunpack.c.h.b16 %v2944
    %v2965 = vunpack.c.l.b16 %v2945
    %v2966 = vunpack.c.h.b16 %v2945
    %v2967 = vunpack.c.l.b16 %v2946
    %v2968 = vunpack.c.h.b16 %v2946
    %v2969 = vunpack.c.l.b16 %v2947
    %v2970 = vunpack.c.h.b16 %v2947
    %v2971 = vunpack.c.l.b16 %v2948
    %v2972 = vunpack.c.h.b16 %v2948
    %v2973 = vpack.c.b16 %v2959, %v2957
    %v2974 = vpack.c.b16 %v2960, %v2958
    %v2975 = vpack.c.b16 %v2963, %v2961
    %v2976 = vpack.c.b16 %v2964, %v2962
    %v2977 = vpack.c.b16 %v2967, %v2965
    %v2978 = vpack.c.b16 %v2968, %v2966
    %v2979 = vpack.c.b16 %v2971, %v2969
    %v2980 = vpack.c.b16 %v2972, %v2970
    %2989 = vmatpush.bf16.msra.mxu0 0
    %2990 = vmatpush.bf16.msra.mxu0 0
    %2991 = vmatpush.bf16.msra.mxu0 0
    %2992 = vmatpush.bf16.msra.mxu0 0
    %2993 = vmatpush.bf16.msra.mxu0 %v2979
    %2994 = vmatpush.bf16.msra.mxu0 %v2977
    %2995 = vmatpush.bf16.msra.mxu0 %v2975
    %2996 = vmatpush.bf16.msra.mxu0 %v2973
    %2997 = vmatmul.bf16.gmra.mxu0 %v2506
    %v2998 = vpop.f32.mrf.mxu0
    %v2999 = vadd.f32 0.0, %v2998
    %v3000 = vpop.f32.mrf.mxu0
    %v3001 = vadd.f32 0.0, %v3000
    %3002 = vmatmul.bf16.gmra.mxu0 %v2509
    %v3003 = vpop.f32.mrf.mxu0
    %v3004 = vadd.f32 0.0, %v3003
    %v3005 = vpop.f32.mrf.mxu0
    %v3006 = vadd.f32 0.0, %v3005
    %3007 = vdwg.mxu0
    %3008 = vmatpush.bf16.msra.mxu0 0
    %3009 = vmatpush.bf16.msra.mxu0 0
    %3010 = vmatpush.bf16.msra.mxu0 0
    %3011 = vmatpush.bf16.msra.mxu0 0
    %3012 = vmatpush.bf16.msra.mxu0 %v2980
    %3013 = vmatpush.bf16.msra.mxu0 %v2978
    %3014 = vmatpush.bf16.msra.mxu0 %v2976
    %3015 = vmatpush.bf16.msra.mxu0 %v2974
    %3016 = vmatmul.bf16.gmra.mxu0 %v2506
    %v3017 = vpop.f32.mrf.mxu0
    %v3018 = vadd.f32 0.0, %v3017
    %v3019 = vpop.f32.mrf.mxu0
    %v3020 = vadd.f32 0.0, %v3019
    %3021 = vmatmul.bf16.gmra.mxu0 %v2509
    %v3022 = vpop.f32.mrf.mxu0
    %v3023 = vadd.f32 0.0, %v3022
    %v3024 = vpop.f32.mrf.mxu0
    %v3025 = vadd.f32 0.0, %v3024
    %3026 = vdwg.mxu0
    %v3035 = vunpack.c.l.b16 %v2932
    %v3036 = vunpack.c.h.b16 %v2932
    %v3037 = vunpack.c.l.b16 %v2933
    %v3038 = vunpack.c.h.b16 %v2933
    %v3039 = vunpack.c.l.b16 %v2934
    %v3040 = vunpack.c.h.b16 %v2934
    %v3041 = vunpack.c.l.b16 %v2935
    %v3042 = vunpack.c.h.b16 %v2935
    %v3043 = vunpack.c.l.b16 %v2936
    %v3044 = vunpack.c.h.b16 %v2936
    %v3045 = vunpack.c.l.b16 %v2937
    %v3046 = vunpack.c.h.b16 %v2937
    %v3047 = vunpack.c.l.b16 %v2938
    %v3048 = vunpack.c.h.b16 %v2938
    %v3049 = vunpack.c.l.b16 %v2939
    %v3050 = vunpack.c.h.b16 %v2939
    %v3051 = vpack.c.b16 %v3037, %v3035
    %v3052 = vpack.c.b16 %v3038, %v3036
    %v3053 = vpack.c.b16 %v3041, %v3039
    %v3054 = vpack.c.b16 %v3042, %v3040
    %v3055 = vpack.c.b16 %v3045, %v3043
    %v3056 = vpack.c.b16 %v3046, %v3044
    %v3057 = vpack.c.b16 %v3049, %v3047
    %v3058 = vpack.c.b16 %v3050, %v3048
    %3067 = vmatpush.bf16.msra.mxu0 0
    %3068 = vmatpush.bf16.msra.mxu0 0
    %3069 = vmatpush.bf16.msra.mxu0 0
    %3070 = vmatpush.bf16.msra.mxu0 0
    %3071 = vmatpush.bf16.msra.mxu0 %v3057
    %3072 = vmatpush.bf16.msra.mxu0 %v3055
    %3073 = vmatpush.bf16.msra.mxu0 %v3053
    %3074 = vmatpush.bf16.msra.mxu0 %v3051
    %3075 = vmatmul.bf16.gmra.mxu0 %v2506
    %v3076 = vpop.f32.mrf.mxu0
    %v3077 = vadd.f32 %v2999, %v3076
    %v3078 = vpop.f32.mrf.mxu0
    %v3079 = vadd.f32 %v3001, %v3078
    %3080 = vmatmul.bf16.gmra.mxu0 %v2509
    %v3081 = vpop.f32.mrf.mxu0
    %v3082 = vadd.f32 %v3004, %v3081
    %v3083 = vpop.f32.mrf.mxu0
    %v3084 = vadd.f32 %v3006, %v3083
    %3085 = vdwg.mxu0
    %3086 = vmatpush.bf16.msra.mxu0 0
    %3087 = vmatpush.bf16.msra.mxu0 0
    %3088 = vmatpush.bf16.msra.mxu0 0
    %3089 = vmatpush.bf16.msra.mxu0 0
    %3090 = vmatpush.bf16.msra.mxu0 %v3058
    %3091 = vmatpush.bf16.msra.mxu0 %v3056
    %3092 = vmatpush.bf16.msra.mxu0 %v3054
    %3093 = vmatpush.bf16.msra.mxu0 %v3052
    %3094 = vmatmul.bf16.gmra.mxu0 %v2506
    %v3095 = vpop.f32.mrf.mxu0
    %v3096 = vadd.f32 %v3018, %v3095
    %v3097 = vpop.f32.mrf.mxu0
    %v3098 = vadd.f32 %v3020, %v3097
    %3099 = vmatmul.bf16.gmra.mxu0 %v2509
    %v3100 = vpop.f32.mrf.mxu0
    %v3101 = vadd.f32 %v3023, %v3100
    %v3102 = vpop.f32.mrf.mxu0
    %v3103 = vadd.f32 %v3025, %v3102
    %3104 = vdwg.mxu0
    %3105 = vmatpush.bf16.msra.mxu0 0
    %3106 = vmatpush.bf16.msra.mxu0 0
    %3107 = vmatpush.bf16.msra.mxu0 0
    %3108 = vmatpush.bf16.msra.mxu0 0
    %3109 = vmatpush.bf16.msra.mxu0 %v3057
    %3110 = vmatpush.bf16.msra.mxu0 %v3055
    %3111 = vmatpush.bf16.msra.mxu0 %v3053
    %3112 = vmatpush.bf16.msra.mxu0 %v3051
    %3113 = vmatmul.bf16.gmra.mxu0 %v2628
    %v3114 = vpop.f32.mrf.mxu0
    %v3115 = vadd.f32 0.0, %v3114
    %v3116 = vpop.f32.mrf.mxu0
    %v3117 = vadd.f32 0.0, %v3116
    %3118 = vmatmul.bf16.gmra.mxu0 %v2631
    %v3119 = vpop.f32.mrf.mxu0
    %v3120 = vadd.f32 0.0, %v3119
    %v3121 = vpop.f32.mrf.mxu0
    %v3122 = vadd.f32 0.0, %v3121
    %3123 = vdwg.mxu0
    %3124 = vmatpush.bf16.msra.mxu0 0
    %3125 = vmatpush.bf16.msra.mxu0 0
    %3126 = vmatpush.bf16.msra.mxu0 0
    %3127 = vmatpush.bf16.msra.mxu0 0
    %3128 = vmatpush.bf16.msra.mxu0 %v3058
    %3129 = vmatpush.bf16.msra.mxu0 %v3056
    %3130 = vmatpush.bf16.msra.mxu0 %v3054
    %3131 = vmatpush.bf16.msra.mxu0 %v3052
    %3132 = vmatmul.bf16.gmra.mxu0 %v2628
    %v3133 = vpop.f32.mrf.mxu0
    %v3134 = vadd.f32 0.0, %v3133
    %v3135 = vpop.f32.mrf.mxu0
    %v3136 = vadd.f32 0.0, %v3135
    %3137 = vmatmul.bf16.gmra.mxu0 %v2631
    %v3138 = vpop.f32.mrf.mxu0
    %v3139 = vadd.f32 0.0, %v3138
    %v3140 = vpop.f32.mrf.mxu0
    %v3141 = vadd.f32 0.0, %v3140
    %3142 = vdwg.mxu0
    %v3143 = vadd.f32 %v3077, %v3115
    %v3144 = vadd.f32 %v3096, %v3134
    %v3145 = vadd.f32 %v3079, %v3117
    %v3146 = vadd.f32 %v3098, %v3136
    %v3147 = vadd.f32 %v3082, %v3120
    %v3148 = vadd.f32 %v3101, %v3139
    %v3149 = vadd.f32 %v3084, %v3122
    %v3150 = vadd.f32 %v3103, %v3141
    %v3151 = vrot.slane %v3143, 1
    %v3152 = vrot.slane %v3144, 1
    %v3153 = vrot.slane %v3145, 1
    %v3154 = vrot.slane %v3146, 1
    %v3155 = vrot.slane %v3147, 1
    %v3156 = vrot.slane %v3148, 1
    %v3157 = vrot.slane %v3149, 1
    %v3158 = vrot.slane %v3150, 1
    %v3159 = vsel %vm824, %v3155, %v3157
    %v3160 = vsel %vm824, %v3156, %v3158
    %v3161 = vsel %vm824, %v3153, %v3155
    %v3162 = vsel %vm824, %v3154, %v3156
    %v3163 = vsel %vm824, %v3151, %v3153
    %v3164 = vsel %vm824, %v3152, %v3154
    %v3165 = vsel %vm824, %v3157, %v3151
    %v3166 = vsel %vm824, %v3158, %v3152
    %v3167 = vsel %vm812, 0.0, %v3163
    %v3168 = vsel %vm812, 0.0, %v3164
    %v3169 = vsel %vm813, 0.0, %v3161
    %v3170 = vsel %vm813, 0.0, %v3162
    %v3171 = vsel %vm814, 0.0, %v3159
    %v3172 = vsel %vm814, 0.0, %v3160
    %v3173 = vsel %vm815, 0.0, %v3165
    %v3174 = vsel %vm815, 0.0, %v3166
    %v3175 = vadd.f32 %v2923, %v3167
    %v3176 = vadd.f32 %v2924, %v3168
    %v3177 = vadd.f32 %v2925, %v3169
    %v3178 = vadd.f32 %v2926, %v3170
    %v3179 = vadd.f32 %v2927, %v3171
    %v3180 = vadd.f32 %v2928, %v3172
    %v3181 = vadd.f32 %v2929, %v3173
    %v3182 = vadd.f32 %v2930, %v3174
    %v3183 = vadd.f32 %v3175, %v3176
    %v3184 = vadd.f32 %v3183, %v3177
    %v3185 = vadd.f32 %v3184, %v3178
    %3186 = vadd.xlane.f32.xlu0 %v3185
    %v3187 = vpop.xlane.xlu0 %3186
    %v3188 = vrot.slane %v3187, 4
    %v3189 = vadd.f32 %v3187, %v3188
    %v3190 = vrot.slane %v3189, 2
    %v3191 = vadd.f32 %v3189, %v3190
    %v3192 = vrot.slane %v3191, 1
    %v3193 = vadd.f32 %v3191, %v3192
    %s3194 = vtos %v3193
    %s3195 = smul.f32 %s3194, 0.00024414063
    %v3196 = vmul.f32 %v3175, %v3175
    %v3197 = vmul.f32 %v3176, %v3176
    %v3198 = vmul.f32 %v3177, %v3177
    %v3199 = vmul.f32 %v3178, %v3178
    %v3200 = vadd.f32 %v3196, %v3197
    %v3201 = vadd.f32 %v3200, %v3198
    %v3202 = vadd.f32 %v3201, %v3199
    %3203 = vadd.xlane.f32.xlu0 %v3202
    %v3204 = vpop.xlane.xlu0 %3203
    %v3205 = vrot.slane %v3204, 4
    %v3206 = vadd.f32 %v3204, %v3205
    %v3207 = vrot.slane %v3206, 2
    %v3208 = vadd.f32 %v3206, %v3207
    %v3209 = vrot.slane %v3208, 1
    %v3210 = vadd.f32 %v3208, %v3209
    %s3211 = vtos %v3210
    %s3212 = smul.f32 %s3211, 0.00024414063
    %s3213 = smul.f32 %s3195, %s3195
    %s3214 = ssub.f32 %s3212, %s3213
    %v3215 = vstv %s3195
    %v3216 = vsub.f32 %v3175, %v3215
    %v3217 = vsub.f32 %v3176, %v3215
    %v3218 = vsub.f32 %v3177, %v3215
    %v3219 = vsub.f32 %v3178, %v3215
    %s3220 = sadd.f32 %s3214, 1e-05
    %v3221 = vstv %s3220
    %v3222 = vrsqrt.pop %v3221
    %v3223 = vmul.f32 %v3222, %v3221
    %v3224 = vmul.f32 %v3223, %v3222
    %v3225 = vmul.f32 0.5, %v3224
    %v3226 = vsub.f32 1.5, %v3225
    %v3227 = vmul.f32 %v3222, %v3226
    %vm3228 = vweird.f32 %v3221
    %vm3229 = vweird.f32 %v3222
    %vm3230 = vmor %vm3228, %vm3229
    %v3231 = vsel %vm3230, %v3222, %v3227
    %s3232 = vtos %v3231
    %v3233 = vstv %s3232
    %v3234 = vmul.f32 %v3216, %v3233
    %v3235 = vmul.f32 %v3217, %v3233
    %v3236 = vmul.f32 %v3218, %v3233
    %v3237 = vmul.f32 %v3219, %v3233
    %v3238 = vadd.f32 %v3179, %v3180
    %v3239 = vadd.f32 %v3238, %v3181
    %v3240 = vadd.f32 %v3239, %v3182
    %3241 = vadd.xlane.f32.xlu0 %v3240
    %v3242 = vpop.xlane.xlu0 %3241
    %v3243 = vrot.slane %v3242, 4
    %v3244 = vadd.f32 %v3242, %v3243
    %v3245 = vrot.slane %v3244, 2
    %v3246 = vadd.f32 %v3244, %v3245
    %v3247 = vrot.slane %v3246, 1
    %v3248 = vadd.f32 %v3246, %v3247
    %s3249 = vtos %v3248
    %s3250 = smul.f32 %s3249, 0.00024414063
    %v3251 = vmul.f32 %v3179, %v3179
    %v3252 = vmul.f32 %v3180, %v3180
    %v3253 = vmul.f32 %v3181, %v3181
    %v3254 = vmul.f32 %v3182, %v3182
    %v3255 = vadd.f32 %v3251, %v3252
    %v3256 = vadd.f32 %v3255, %v3253
    %v3257 = vadd.f32 %v3256, %v3254
    %3258 = vadd.xlane.f32.xlu0 %v3257
    %v3259 = vpop.xlane.xlu0 %3258
    %v3260 = vrot.slane %v3259, 4
    %v3261 = vadd.f32 %v3259, %v3260
    %v3262 = vrot.slane %v3261, 2
    %v3263 = vadd.f32 %v3261, %v3262
    %v3264 = vrot.slane %v3263, 1
    %v3265 = vadd.f32 %v3263, %v3264
    %s3266 = vtos %v3265
    %s3267 = smul.f32 %s3266, 0.00024414063
    %s3268 = smul.f32 %s3250, %s3250
    %s3269 = ssub.f32 %s3267, %s3268
    %v3270 = vstv %s3250
    %v3271 = vsub.f32 %v3179, %v3270
    %v3272 = vsub.f32 %v3180, %v3270
    %v3273 = vsub.f32 %v3181, %v3270
    %v3274 = vsub.f32 %v3182, %v3270
    %s3275 = sadd.f32 %s3269, 1e-05
    %v3276 = vstv %s3275
    %v3277 = vrsqrt.pop %v3276
    %v3278 = vmul.f32 %v3277, %v3276
    %v3279 = vmul.f32 %v3278, %v3277
    %v3280 = vmul.f32 0.5, %v3279
    %v3281 = vsub.f32 1.5, %v3280
    %v3282 = vmul.f32 %v3277, %v3281
    %vm3283 = vweird.f32 %v3276
    %vm3284 = vweird.f32 %v3277
    %vm3285 = vmor %vm3283, %vm3284
    %v3286 = vsel %vm3285, %v3277, %v3282
    %s3287 = vtos %v3286
    %v3288 = vstv %s3287
    %v3289 = vmul.f32 %v3271, %v3288
    %v3290 = vmul.f32 %v3272, %v3288
    %v3291 = vmul.f32 %v3273, %v3288
    %v3292 = vmul.f32 %v3274, %v3288
    %v3293 = vxor.u32 %v3234, 2147483648
    %v3294 = vxor.u32 %v3235, 2147483648
    %v3295 = vxor.u32 %v3236, 2147483648
    %v3296 = vxor.u32 %v3237, 2147483648
    %v3297 = vxor.u32 %v3289, 2147483648
    %v3298 = vxor.u32 %v3290, 2147483648
    %v3299 = vxor.u32 %v3291, 2147483648
    %v3300 = vxor.u32 %v3292, 2147483648
    %v3301 = vmul.f32 %v3293, 1.442695
    %v3302 = vpow.pop %v3301
    %v3303 = vmul.f32 %v3294, 1.442695
    %v3304 = vpow.pop %v3303
    %v3305 = vmul.f32 %v3295, 1.442695
    %v3306 = vpow.pop %v3305
    %v3307 = vmul.f32 %v3296, 1.442695
    %v3308 = vpow.pop %v3307
    %v3309 = vmul.f32 %v3297, 1.442695
    %v3310 = vpow.pop %v3309
    %v3311 = vmul.f32 %v3298, 1.442695
    %v3312 = vpow.pop %v3311
    %v3313 = vmul.f32 %v3299, 1.442695
    %v3314 = vpow.pop %v3313
    %v3315 = vmul.f32 %v3300, 1.442695
    %v3316 = vpow.pop %v3315
    %v3317 = vadd.f32 %v3302, 1.0
    %v3318 = vadd.f32 %v3304, 1.0
    %v3319 = vadd.f32 %v3306, 1.0
    %v3320 = vadd.f32 %v3308, 1.0
    %v3321 = vadd.f32 %v3310, 1.0
    %v3322 = vadd.f32 %v3312, 1.0
    %v3323 = vadd.f32 %v3314, 1.0
    %v3324 = vadd.f32 %v3316, 1.0
    %v3325 = vrcp.pop %v3317
    %v3326 = vmul.f32 %v3317, %v3325
    %v3327 = vsub.f32 1.0, %v3326
    %v3328 = vmul.f32 %v3325, %v3327
    %v3329 = vadd.f32 %v3325, %v3328
    %vm3330 = vweird.f32 %v3317
    %vm3331 = vweird.f32 %v3325
    %vm3332 = vmor %vm3330, %vm3331
    %v3333 = vsel %vm3332, %v3325, %v3329
    %v3334 = vand.u32 2147483647, %v3317
    %vm3335 = vcmp.eq.f32.partialorder %v3334, 8.507059e+37
    %v3336 = vand.u32 %v3317, 2147483648
    %v3337 = vor.u32 1.1754944e-38, %v3336
    %v3338 = vsel %vm3335, %v3337, %v3333
    %v3339 = vmul.f32 1.0, %v3338
    %v3340 = vrcp.pop %v3318
    %v3341 = vmul.f32 %v3318, %v3340
    %v3342 = vsub.f32 1.0, %v3341
    %v3343 = vmul.f32 %v3340, %v3342
    %v3344 = vadd.f32 %v3340, %v3343
    %vm3345 = vweird.f32 %v3318
    %vm3346 = vweird.f32 %v3340
    %vm3347 = vmor %vm3345, %vm3346
    %v3348 = vsel %vm3347, %v3340, %v3344
    %v3349 = vand.u32 2147483647, %v3318
    %vm3350 = vcmp.eq.f32.partialorder %v3349, 8.507059e+37
    %v3351 = vand.u32 %v3318, 2147483648
    %v3352 = vor.u32 1.1754944e-38, %v3351
    %v3353 = vsel %vm3350, %v3352, %v3348
    %v3354 = vmul.f32 1.0, %v3353
    %v3355 = vrcp.pop %v3319
    %v3356 = vmul.f32 %v3319, %v3355
    %v3357 = vsub.f32 1.0, %v3356
    %v3358 = vmul.f32 %v3355, %v3357
    %v3359 = vadd.f32 %v3355, %v3358
    %vm3360 = vweird.f32 %v3319
    %vm3361 = vweird.f32 %v3355
    %vm3362 = vmor %vm3360, %vm3361
    %v3363 = vsel %vm3362, %v3355, %v3359
    %v3364 = vand.u32 2147483647, %v3319
    %vm3365 = vcmp.eq.f32.partialorder %v3364, 8.507059e+37
    %v3366 = vand.u32 %v3319, 2147483648
    %v3367 = vor.u32 1.1754944e-38, %v3366
    %v3368 = vsel %vm3365, %v3367, %v3363
    %v3369 = vmul.f32 1.0, %v3368
    %v3370 = vrcp.pop %v3320
    %v3371 = vmul.f32 %v3320, %v3370
    %v3372 = vsub.f32 1.0, %v3371
    %v3373 = vmul.f32 %v3370, %v3372
    %v3374 = vadd.f32 %v3370, %v3373
    %vm3375 = vweird.f32 %v3320
    %vm3376 = vweird.f32 %v3370
    %vm3377 = vmor %vm3375, %vm3376
    %v3378 = vsel %vm3377, %v3370, %v3374
    %v3379 = vand.u32 2147483647, %v3320
    %vm3380 = vcmp.eq.f32.partialorder %v3379, 8.507059e+37
    %v3381 = vand.u32 %v3320, 2147483648
    %v3382 = vor.u32 1.1754944e-38, %v3381
    %v3383 = vsel %vm3380, %v3382, %v3378
    %v3384 = vmul.f32 1.0, %v3383
    %v3385 = vrcp.pop %v3321
    %v3386 = vmul.f32 %v3321, %v3385
    %v3387 = vsub.f32 1.0, %v3386
    %v3388 = vmul.f32 %v3385, %v3387
    %v3389 = vadd.f32 %v3385, %v3388
    %vm3390 = vweird.f32 %v3321
    %vm3391 = vweird.f32 %v3385
    %vm3392 = vmor %vm3390, %vm3391
    %v3393 = vsel %vm3392, %v3385, %v3389
    %v3394 = vand.u32 2147483647, %v3321
    %vm3395 = vcmp.eq.f32.partialorder %v3394, 8.507059e+37
    %v3396 = vand.u32 %v3321, 2147483648
    %v3397 = vor.u32 1.1754944e-38, %v3396
    %v3398 = vsel %vm3395, %v3397, %v3393
    %v3399 = vmul.f32 1.0, %v3398
    %v3400 = vrcp.pop %v3322
    %v3401 = vmul.f32 %v3322, %v3400
    %v3402 = vsub.f32 1.0, %v3401
    %v3403 = vmul.f32 %v3400, %v3402
    %v3404 = vadd.f32 %v3400, %v3403
    %vm3405 = vweird.f32 %v3322
    %vm3406 = vweird.f32 %v3400
    %vm3407 = vmor %vm3405, %vm3406
    %v3408 = vsel %vm3407, %v3400, %v3404
    %v3409 = vand.u32 2147483647, %v3322
    %vm3410 = vcmp.eq.f32.partialorder %v3409, 8.507059e+37
    %v3411 = vand.u32 %v3322, 2147483648
    %v3412 = vor.u32 1.1754944e-38, %v3411
    %v3413 = vsel %vm3410, %v3412, %v3408
    %v3414 = vmul.f32 1.0, %v3413
    %v3415 = vrcp.pop %v3323
    %v3416 = vmul.f32 %v3323, %v3415
    %v3417 = vsub.f32 1.0, %v3416
    %v3418 = vmul.f32 %v3415, %v3417
    %v3419 = vadd.f32 %v3415, %v3418
    %vm3420 = vweird.f32 %v3323
    %vm3421 = vweird.f32 %v3415
    %vm3422 = vmor %vm3420, %vm3421
    %v3423 = vsel %vm3422, %v3415, %v3419
    %v3424 = vand.u32 2147483647, %v3323
    %vm3425 = vcmp.eq.f32.partialorder %v3424, 8.507059e+37
    %v3426 = vand.u32 %v3323, 2147483648
    %v3427 = vor.u32 1.1754944e-38, %v3426
    %v3428 = vsel %vm3425, %v3427, %v3423
    %v3429 = vmul.f32 1.0, %v3428
    %v3430 = vrcp.pop %v3324
    %v3431 = vmul.f32 %v3324, %v3430
    %v3432 = vsub.f32 1.0, %v3431
    %v3433 = vmul.f32 %v3430, %v3432
    %v3434 = vadd.f32 %v3430, %v3433
    %vm3435 = vweird.f32 %v3324
    %vm3436 = vweird.f32 %v3430
    %vm3437 = vmor %vm3435, %vm3436
    %v3438 = vsel %vm3437, %v3430, %v3434
    %v3439 = vand.u32 2147483647, %v3324
    %vm3440 = vcmp.eq.f32.partialorder %v3439, 8.507059e+37
    %v3441 = vand.u32 %v3324, 2147483648
    %v3442 = vor.u32 1.1754944e-38, %v3441
    %v3443 = vsel %vm3440, %v3442, %v3438
    %v3444 = vmul.f32 1.0, %v3443
    %v3445 = vmul.f32 %v3234, %v3339
    %v3446 = vmul.f32 %v3235, %v3354
    %v3447 = vmul.f32 %v3236, %v3369
    %v3448 = vmul.f32 %v3237, %v3384
    %v3449 = vmul.f32 %v3289, %v3399
    %v3450 = vmul.f32 %v3290, %v3414
    %v3451 = vmul.f32 %v3291, %v3429
    %v3452 = vmul.f32 %v3292, %v3444
    %v3453 = vpack.c.bf16 %v3446, %v3445
    %v3454 = vpack.c.bf16 %v3448, %v3447
    %v3455 = vpack.c.bf16 %v3450, %v3449
    %v3456 = vpack.c.bf16 %v3452, %v3451
    %v3457 = vunpack.c.l.bf16 %v3453
    %v3458 = vunpack.c.h.bf16 %v3453
    %v3459 = vunpack.c.l.bf16 %v3454
    %v3460 = vunpack.c.h.bf16 %v3454
    %v3461 = vunpack.c.l.bf16 %v3455
    %v3462 = vunpack.c.h.bf16 %v3455
    %v3463 = vunpack.c.l.bf16 %v3456
    %v3464 = vunpack.c.h.bf16 %v3456
    %v3465 = vsub.f32 %v3445, %v3457
    %v3466 = vsub.f32 %v3446, %v3458
    %v3467 = vsub.f32 %v3447, %v3459
    %v3468 = vsub.f32 %v3448, %v3460
    %v3469 = vsub.f32 %v3449, %v3461
    %v3470 = vsub.f32 %v3450, %v3462
    %v3471 = vsub.f32 %v3451, %v3463
    %v3472 = vsub.f32 %v3452, %v3464
    %v3473 = vpack.c.bf16 %v3467, %v3465
    %v3474 = vpack.c.bf16 %v3468, %v3466
    %v3475 = vpack.c.bf16 %v3471, %v3469
    %v3476 = vpack.c.bf16 %v3472, %v3470
    %v3477 = vld [vmem:[%s4] sm:$0xf]
    %v3478 = vld [vmem:[%s4 + $0x4] sm:$0xf]
    %v3479 = vld [vmem:[%s4 + $0x8] sm:$0xf]
    %v3480 = vld [vmem:[%s4 + $0xc] sm:$0xf]
    %v3481 = vld [vmem:[%s4 + $0x10] sm:$0xf]
    %v3482 = vld [vmem:[%s4 + $0x14] sm:$0xf]
    %v3483 = vld [vmem:[%s4 + $0x18] sm:$0xf]
    %v3484 = vld [vmem:[%s4 + $0x1c] sm:$0xf]
    %v3485 = vld [vmem:[%s4 + $0x20] sm:$0xf]
    %v3486 = vld [vmem:[%s4 + $0x24] sm:$0xf]
    %v3487 = vld [vmem:[%s4 + $0x28] sm:$0xf]
    %v3488 = vld [vmem:[%s4 + $0x2c] sm:$0xf]
    %v3489 = vld [vmem:[%s4 + $0x30] sm:$0xf]
    %v3490 = vld [vmem:[%s4 + $0x34] sm:$0xf]
    %v3491 = vld [vmem:[%s4 + $0x38] sm:$0xf]
    %v3492 = vld [vmem:[%s4 + $0x3c] sm:$0xf]
    %v3493 = vld [vmem:[%s4 + $0x40] sm:$0xf]
    %v3494 = vld [vmem:[%s4 + $0x44] sm:$0xf]
    %v3495 = vld [vmem:[%s4 + $0x48] sm:$0xf]
    %v3496 = vld [vmem:[%s4 + $0x4c] sm:$0xf]
    %v3497 = vld [vmem:[%s4 + $0x50] sm:$0xf]
    %v3498 = vld [vmem:[%s4 + $0x54] sm:$0xf]
    %v3499 = vld [vmem:[%s4 + $0x58] sm:$0xf]
    %v3500 = vld [vmem:[%s4 + $0x5c] sm:$0xf]
    %v3501 = vld [vmem:[%s4 + $0x60] sm:$0xf]
    %v3502 = vld [vmem:[%s4 + $0x64] sm:$0xf]
    %v3503 = vld [vmem:[%s4 + $0x68] sm:$0xf]
    %v3504 = vld [vmem:[%s4 + $0x6c] sm:$0xf]
    %v3505 = vld [vmem:[%s4 + $0x70] sm:$0xf]
    %v3506 = vld [vmem:[%s4 + $0x74] sm:$0xf]
    %v3507 = vld [vmem:[%s4 + $0x78] sm:$0xf]
    %v3508 = vld [vmem:[%s4 + $0x7c] sm:$0xf]
    %s3509 = scalar_lea.vmem %s4, 384
    %v3510 = vld [vmem:[%s3509] sm:$0xf]
    %v3511 = vld [vmem:[%s3509 + $0x4] sm:$0xf]
    %v3512 = vld [vmem:[%s3509 + $0x8] sm:$0xf]
    %v3513 = vld [vmem:[%s3509 + $0xc] sm:$0xf]
    %v3514 = vld [vmem:[%s3509 + $0x10] sm:$0xf]
    %v3515 = vld [vmem:[%s3509 + $0x14] sm:$0xf]
    %v3516 = vld [vmem:[%s3509 + $0x18] sm:$0xf]
    %v3517 = vld [vmem:[%s3509 + $0x1c] sm:$0xf]
    %v3518 = vld [vmem:[%s3509 + $0x20] sm:$0xf]
    %v3519 = vld [vmem:[%s3509 + $0x24] sm:$0xf]
    %v3520 = vld [vmem:[%s3509 + $0x28] sm:$0xf]
    %v3521 = vld [vmem:[%s3509 + $0x2c] sm:$0xf]
    %v3522 = vld [vmem:[%s3509 + $0x30] sm:$0xf]
    %v3523 = vld [vmem:[%s3509 + $0x34] sm:$0xf]
    %v3524 = vld [vmem:[%s3509 + $0x38] sm:$0xf]
    %v3525 = vld [vmem:[%s3509 + $0x3c] sm:$0xf]
    %v3526 = vld [vmem:[%s3509 + $0x40] sm:$0xf]
    %v3527 = vld [vmem:[%s3509 + $0x44] sm:$0xf]
    %v3528 = vld [vmem:[%s3509 + $0x48] sm:$0xf]
    %v3529 = vld [vmem:[%s3509 + $0x4c] sm:$0xf]
    %v3530 = vld [vmem:[%s3509 + $0x50] sm:$0xf]
    %v3531 = vld [vmem:[%s3509 + $0x54] sm:$0xf]
    %v3532 = vld [vmem:[%s3509 + $0x58] sm:$0xf]
    %v3533 = vld [vmem:[%s3509 + $0x5c] sm:$0xf]
    %v3534 = vld [vmem:[%s3509 + $0x60] sm:$0xf]
    %v3535 = vld [vmem:[%s3509 + $0x64] sm:$0xf]
    %v3536 = vld [vmem:[%s3509 + $0x68] sm:$0xf]
    %v3537 = vld [vmem:[%s3509 + $0x6c] sm:$0xf]
    %v3538 = vld [vmem:[%s3509 + $0x70] sm:$0xf]
    %v3539 = vld [vmem:[%s3509 + $0x74] sm:$0xf]
    %v3540 = vld [vmem:[%s3509 + $0x78] sm:$0xf]
    %v3541 = vld [vmem:[%s3509 + $0x7c] sm:$0xf]
    %v3546 = vunpack.c.l.b16 %v3453
    %v3547 = vunpack.c.h.b16 %v3453
    %v3548 = vunpack.c.l.b16 %v3454
    %v3549 = vunpack.c.h.b16 %v3454
    %v3550 = vunpack.c.l.b16 %v3455
    %v3551 = vunpack.c.h.b16 %v3455
    %v3552 = vunpack.c.l.b16 %v3456
    %v3553 = vunpack.c.h.b16 %v3456
    %v3554 = vpack.c.b16 %v3548, %v3546
    %v3555 = vpack.c.b16 %v3549, %v3547
    %v3556 = vpack.c.b16 %v3552, %v3550
    %v3557 = vpack.c.b16 %v3553, %v3551
    %v3594 = vunpack.c.l.b16 %v3510
    %v3595 = vunpack.c.l.b16 %v3511
    %v3596 = vunpack.c.l.b16 %v3512
    %v3597 = vunpack.c.l.b16 %v3513
    %v3598 = vunpack.c.l.b16 %v3514
    %v3599 = vunpack.c.l.b16 %v3515
    %v3600 = vunpack.c.l.b16 %v3516
    %v3601 = vunpack.c.l.b16 %v3517
    %v3602 = vunpack.c.l.b16 %v3518
    %v3603 = vunpack.c.l.b16 %v3519
    %v3604 = vunpack.c.l.b16 %v3520
    %v3605 = vunpack.c.l.b16 %v3521
    %v3606 = vunpack.c.l.b16 %v3522
    %v3607 = vunpack.c.l.b16 %v3523
    %v3608 = vunpack.c.l.b16 %v3524
    %v3609 = vunpack.c.l.b16 %v3525
    %v3610 = vunpack.c.l.b16 %v3526
    %v3611 = vunpack.c.l.b16 %v3527
    %v3612 = vunpack.c.l.b16 %v3528
    %v3613 = vunpack.c.l.b16 %v3529
    %v3614 = vunpack.c.l.b16 %v3530
    %v3615 = vunpack.c.l.b16 %v3531
    %v3616 = vunpack.c.l.b16 %v3532
    %v3617 = vunpack.c.l.b16 %v3533
    %v3618 = vunpack.c.l.b16 %v3534
    %v3619 = vunpack.c.l.b16 %v3535
    %v3620 = vunpack.c.l.b16 %v3536
    %v3621 = vunpack.c.l.b16 %v3537
    %v3622 = vunpack.c.l.b16 %v3538
    %v3623 = vunpack.c.l.b16 %v3539
    %v3624 = vunpack.c.l.b16 %v3540
    %v3625 = vunpack.c.l.b16 %v3541
    %v3626 = vpack.c.b16 %v3595, %v3594
    %v3627 = vpack.c.b16 %v3597, %v3596
    %v3628 = vpack.c.b16 %v3599, %v3598
    %v3629 = vpack.c.b16 %v3601, %v3600
    %v3630 = vpack.c.b16 %v3603, %v3602
    %v3631 = vpack.c.b16 %v3605, %v3604
    %v3632 = vpack.c.b16 %v3607, %v3606
    %v3633 = vpack.c.b16 %v3609, %v3608
    %v3634 = vpack.c.b16 %v3611, %v3610
    %v3635 = vpack.c.b16 %v3613, %v3612
    %v3636 = vpack.c.b16 %v3615, %v3614
    %v3637 = vpack.c.b16 %v3617, %v3616
    %v3638 = vpack.c.b16 %v3619, %v3618
    %v3639 = vpack.c.b16 %v3621, %v3620
    %v3640 = vpack.c.b16 %v3623, %v3622
    %v3641 = vpack.c.b16 %v3625, %v3624
    %3658 = vmatpush.bf16.msra.mxu0 %v3633
    %3659 = vmatpush.bf16.msra.mxu0 %v3632
    %3660 = vmatpush.bf16.msra.mxu0 %v3631
    %3661 = vmatpush.bf16.msra.mxu0 %v3630
    %3662 = vmatpush.bf16.msra.mxu0 %v3629
    %3663 = vmatpush.bf16.msra.mxu0 %v3628
    %3664 = vmatpush.bf16.msra.mxu0 %v3627
    %3665 = vmatpush.bf16.msra.mxu0 %v3626
    %3666 = vmatmul.bf16.gmra.mxu0 %v3554
    %v3667 = vpop.f32.mrf.mxu0
    %v3668 = vadd.f32 0.0, %v3667
    %v3669 = vpop.f32.mrf.mxu0
    %v3670 = vadd.f32 0.0, %v3669
    %3671 = vmatmul.bf16.gmra.mxu0 %v3556
    %v3672 = vpop.f32.mrf.mxu0
    %v3673 = vadd.f32 0.0, %v3672
    %v3674 = vpop.f32.mrf.mxu0
    %v3675 = vadd.f32 0.0, %v3674
    %3676 = vdwg.mxu0
    %3677 = vmatpush.bf16.msra.mxu0 %v3641
    %3678 = vmatpush.bf16.msra.mxu0 %v3640
    %3679 = vmatpush.bf16.msra.mxu0 %v3639
    %3680 = vmatpush.bf16.msra.mxu0 %v3638
    %3681 = vmatpush.bf16.msra.mxu0 %v3637
    %3682 = vmatpush.bf16.msra.mxu0 %v3636
    %3683 = vmatpush.bf16.msra.mxu0 %v3635
    %3684 = vmatpush.bf16.msra.mxu0 %v3634
    %3685 = vmatmul.bf16.gmra.mxu0 %v3555
    %v3686 = vpop.f32.mrf.mxu0
    %v3687 = vadd.f32 %v3668, %v3686
    %v3688 = vpop.f32.mrf.mxu0
    %v3689 = vadd.f32 %v3670, %v3688
    %3690 = vmatmul.bf16.gmra.mxu0 %v3557
    %v3691 = vpop.f32.mrf.mxu0
    %v3692 = vadd.f32 %v3673, %v3691
    %v3693 = vpop.f32.mrf.mxu0
    %v3694 = vadd.f32 %v3675, %v3693
    %3695 = vdwg.mxu0
    %v3728 = vunpack.c.l.b16 %v3477
    %v3729 = vunpack.c.l.b16 %v3478
    %v3730 = vunpack.c.l.b16 %v3479
    %v3731 = vunpack.c.l.b16 %v3480
    %v3732 = vunpack.c.l.b16 %v3481
    %v3733 = vunpack.c.l.b16 %v3482
    %v3734 = vunpack.c.l.b16 %v3483
    %v3735 = vunpack.c.l.b16 %v3484
    %v3736 = vunpack.c.l.b16 %v3485
    %v3737 = vunpack.c.l.b16 %v3486
    %v3738 = vunpack.c.l.b16 %v3487
    %v3739 = vunpack.c.l.b16 %v3488
    %v3740 = vunpack.c.l.b16 %v3489
    %v3741 = vunpack.c.l.b16 %v3490
    %v3742 = vunpack.c.l.b16 %v3491
    %v3743 = vunpack.c.l.b16 %v3492
    %v3744 = vunpack.c.l.b16 %v3493
    %v3745 = vunpack.c.l.b16 %v3494
    %v3746 = vunpack.c.l.b16 %v3495
    %v3747 = vunpack.c.l.b16 %v3496
    %v3748 = vunpack.c.l.b16 %v3497
    %v3749 = vunpack.c.l.b16 %v3498
    %v3750 = vunpack.c.l.b16 %v3499
    %v3751 = vunpack.c.l.b16 %v3500
    %v3752 = vunpack.c.l.b16 %v3501
    %v3753 = vunpack.c.l.b16 %v3502
    %v3754 = vunpack.c.l.b16 %v3503
    %v3755 = vunpack.c.l.b16 %v3504
    %v3756 = vunpack.c.l.b16 %v3505
    %v3757 = vunpack.c.l.b16 %v3506
    %v3758 = vunpack.c.l.b16 %v3507
    %v3759 = vunpack.c.l.b16 %v3508
    %v3760 = vpack.c.b16 %v3729, %v3728
    %v3761 = vpack.c.b16 %v3731, %v3730
    %v3762 = vpack.c.b16 %v3733, %v3732
    %v3763 = vpack.c.b16 %v3735, %v3734
    %v3764 = vpack.c.b16 %v3737, %v3736
    %v3765 = vpack.c.b16 %v3739, %v3738
    %v3766 = vpack.c.b16 %v3741, %v3740
    %v3767 = vpack.c.b16 %v3743, %v3742
    %v3768 = vpack.c.b16 %v3745, %v3744
    %v3769 = vpack.c.b16 %v3747, %v3746
    %v3770 = vpack.c.b16 %v3749, %v3748
    %v3771 = vpack.c.b16 %v3751, %v3750
    %v3772 = vpack.c.b16 %v3753, %v3752
    %v3773 = vpack.c.b16 %v3755, %v3754
    %v3774 = vpack.c.b16 %v3757, %v3756
    %v3775 = vpack.c.b16 %v3759, %v3758
    %3792 = vmatpush.bf16.msra.mxu0 %v3767
    %3793 = vmatpush.bf16.msra.mxu0 %v3766
    %3794 = vmatpush.bf16.msra.mxu0 %v3765
    %3795 = vmatpush.bf16.msra.mxu0 %v3764
    %3796 = vmatpush.bf16.msra.mxu0 %v3763
    %3797 = vmatpush.bf16.msra.mxu0 %v3762
    %3798 = vmatpush.bf16.msra.mxu0 %v3761
    %3799 = vmatpush.bf16.msra.mxu0 %v3760
    %3800 = vmatmul.bf16.gmra.mxu0 %v3554
    %v3801 = vpop.f32.mrf.mxu0
    %v3802 = vadd.f32 %v3687, %v3801
    %v3803 = vpop.f32.mrf.mxu0
    %v3804 = vadd.f32 %v3689, %v3803
    %3805 = vmatmul.bf16.gmra.mxu0 %v3556
    %v3806 = vpop.f32.mrf.mxu0
    %v3807 = vadd.f32 %v3692, %v3806
    %v3808 = vpop.f32.mrf.mxu0
    %v3809 = vadd.f32 %v3694, %v3808
    %3810 = vdwg.mxu0
    %3811 = vmatpush.bf16.msra.mxu0 %v3775
    %3812 = vmatpush.bf16.msra.mxu0 %v3774
    %3813 = vmatpush.bf16.msra.mxu0 %v3773
    %3814 = vmatpush.bf16.msra.mxu0 %v3772
    %3815 = vmatpush.bf16.msra.mxu0 %v3771
    %3816 = vmatpush.bf16.msra.mxu0 %v3770
    %3817 = vmatpush.bf16.msra.mxu0 %v3769
    %3818 = vmatpush.bf16.msra.mxu0 %v3768
    %3819 = vmatmul.bf16.gmra.mxu0 %v3555
    %v3820 = vpop.f32.mrf.mxu0
    %v3821 = vadd.f32 %v3802, %v3820
    %v3822 = vpop.f32.mrf.mxu0
    %v3823 = vadd.f32 %v3804, %v3822
    %3824 = vmatmul.bf16.gmra.mxu0 %v3557
    %v3825 = vpop.f32.mrf.mxu0
    %v3826 = vadd.f32 %v3807, %v3825
    %v3827 = vpop.f32.mrf.mxu0
    %v3828 = vadd.f32 %v3809, %v3827
    %3829 = vdwg.mxu0
    %3830 = vmatpush.bf16.msra.mxu0 %v3767
    %3831 = vmatpush.bf16.msra.mxu0 %v3766
    %3832 = vmatpush.bf16.msra.mxu0 %v3765
    %3833 = vmatpush.bf16.msra.mxu0 %v3764
    %3834 = vmatpush.bf16.msra.mxu0 %v3763
    %3835 = vmatpush.bf16.msra.mxu0 %v3762
    %3836 = vmatpush.bf16.msra.mxu0 %v3761
    %3837 = vmatpush.bf16.msra.mxu0 %v3760
    %3838 = vmatmul.bf16.gmra.mxu0 %v3473
    %v3839 = vpop.f32.mrf.mxu0
    %v3840 = vadd.f32 0.0, %v3839
    %v3841 = vpop.f32.mrf.mxu0
    %v3842 = vadd.f32 0.0, %v3841
    %3843 = vmatmul.bf16.gmra.mxu0 %v3475
    %v3844 = vpop.f32.mrf.mxu0
    %v3845 = vadd.f32 0.0, %v3844
    %v3846 = vpop.f32.mrf.mxu0
    %v3847 = vadd.f32 0.0, %v3846
    %3848 = vdwg.mxu0
    %3849 = vmatpush.bf16.msra.mxu0 %v3775
    %3850 = vmatpush.bf16.msra.mxu0 %v3774
    %3851 = vmatpush.bf16.msra.mxu0 %v3773
    %3852 = vmatpush.bf16.msra.mxu0 %v3772
    %3853 = vmatpush.bf16.msra.mxu0 %v3771
    %3854 = vmatpush.bf16.msra.mxu0 %v3770
    %3855 = vmatpush.bf16.msra.mxu0 %v3769
    %3856 = vmatpush.bf16.msra.mxu0 %v3768
    %3857 = vmatmul.bf16.gmra.mxu0 %v3474
    %v3858 = vpop.f32.mrf.mxu0
    %v3859 = vadd.f32 %v3840, %v3858
    %v3860 = vpop.f32.mrf.mxu0
    %v3861 = vadd.f32 %v3842, %v3860
    %3862 = vmatmul.bf16.gmra.mxu0 %v3476
    %v3863 = vpop.f32.mrf.mxu0
    %v3864 = vadd.f32 %v3845, %v3863
    %v3865 = vpop.f32.mrf.mxu0
    %v3866 = vadd.f32 %v3847, %v3865
    %3867 = vdwg.mxu0
    %v3868 = vadd.f32 %v3821, %v3859
    %v3869 = vadd.f32 %v3823, %v3861
    %v3870 = vadd.f32 %v3826, %v3864
    %v3871 = vadd.f32 %v3828, %v3866
    %v3872 = vrot.slane %v3868, 7
    %v3873 = vrot.slane %v3869, 7
    %v3874 = vrot.slane %v3870, 7
    %v3875 = vrot.slane %v3871, 7
    %v3876 = vsel %vm347, %v3874, %v3875
    %v3877 = vsel %vm347, %v3873, %v3874
    %v3878 = vsel %vm347, %v3872, %v3873
    %v3879 = vsel %vm347, %v3875, %v3872
    %v3880 = vsel %vm335, 0.0, %v3879
    %v3881 = vsel %vm336, 0.0, %v3878
    %v3882 = vsel %vm337, 0.0, %v3877
    %v3883 = vsel %vm338, 0.0, %v3876
    %s3884 = scalar_lea.vmem %s4, 128
    %v3885 = vld [vmem:[%s3884] sm:$0xf]
    %v3886 = vld [vmem:[%s3884 + $0x4] sm:$0xf]
    %v3887 = vld [vmem:[%s3884 + $0x8] sm:$0xf]
    %v3888 = vld [vmem:[%s3884 + $0xc] sm:$0xf]
    %v3889 = vld [vmem:[%s3884 + $0x10] sm:$0xf]
    %v3890 = vld [vmem:[%s3884 + $0x14] sm:$0xf]
    %v3891 = vld [vmem:[%s3884 + $0x18] sm:$0xf]
    %v3892 = vld [vmem:[%s3884 + $0x1c] sm:$0xf]
    %v3893 = vld [vmem:[%s3884 + $0x20] sm:$0xf]
    %v3894 = vld [vmem:[%s3884 + $0x24] sm:$0xf]
    %v3895 = vld [vmem:[%s3884 + $0x28] sm:$0xf]
    %v3896 = vld [vmem:[%s3884 + $0x2c] sm:$0xf]
    %v3897 = vld [vmem:[%s3884 + $0x30] sm:$0xf]
    %v3898 = vld [vmem:[%s3884 + $0x34] sm:$0xf]
    %v3899 = vld [vmem:[%s3884 + $0x38] sm:$0xf]
    %v3900 = vld [vmem:[%s3884 + $0x3c] sm:$0xf]
    %v3901 = vld [vmem:[%s3884 + $0x40] sm:$0xf]
    %v3902 = vld [vmem:[%s3884 + $0x44] sm:$0xf]
    %v3903 = vld [vmem:[%s3884 + $0x48] sm:$0xf]
    %v3904 = vld [vmem:[%s3884 + $0x4c] sm:$0xf]
    %v3905 = vld [vmem:[%s3884 + $0x50] sm:$0xf]
    %v3906 = vld [vmem:[%s3884 + $0x54] sm:$0xf]
    %v3907 = vld [vmem:[%s3884 + $0x58] sm:$0xf]
    %v3908 = vld [vmem:[%s3884 + $0x5c] sm:$0xf]
    %v3909 = vld [vmem:[%s3884 + $0x60] sm:$0xf]
    %v3910 = vld [vmem:[%s3884 + $0x64] sm:$0xf]
    %v3911 = vld [vmem:[%s3884 + $0x68] sm:$0xf]
    %v3912 = vld [vmem:[%s3884 + $0x6c] sm:$0xf]
    %v3913 = vld [vmem:[%s3884 + $0x70] sm:$0xf]
    %v3914 = vld [vmem:[%s3884 + $0x74] sm:$0xf]
    %v3915 = vld [vmem:[%s3884 + $0x78] sm:$0xf]
    %v3916 = vld [vmem:[%s3884 + $0x7c] sm:$0xf]
    %s3917 = scalar_lea.vmem %s4, 512
    %v3918 = vld [vmem:[%s3917] sm:$0xf]
    %v3919 = vld [vmem:[%s3917 + $0x4] sm:$0xf]
    %v3920 = vld [vmem:[%s3917 + $0x8] sm:$0xf]
    %v3921 = vld [vmem:[%s3917 + $0xc] sm:$0xf]
    %v3922 = vld [vmem:[%s3917 + $0x10] sm:$0xf]
    %v3923 = vld [vmem:[%s3917 + $0x14] sm:$0xf]
    %v3924 = vld [vmem:[%s3917 + $0x18] sm:$0xf]
    %v3925 = vld [vmem:[%s3917 + $0x1c] sm:$0xf]
    %v3926 = vld [vmem:[%s3917 + $0x20] sm:$0xf]
    %v3927 = vld [vmem:[%s3917 + $0x24] sm:$0xf]
    %v3928 = vld [vmem:[%s3917 + $0x28] sm:$0xf]
    %v3929 = vld [vmem:[%s3917 + $0x2c] sm:$0xf]
    %v3930 = vld [vmem:[%s3917 + $0x30] sm:$0xf]
    %v3931 = vld [vmem:[%s3917 + $0x34] sm:$0xf]
    %v3932 = vld [vmem:[%s3917 + $0x38] sm:$0xf]
    %v3933 = vld [vmem:[%s3917 + $0x3c] sm:$0xf]
    %v3934 = vld [vmem:[%s3917 + $0x40] sm:$0xf]
    %v3935 = vld [vmem:[%s3917 + $0x44] sm:$0xf]
    %v3936 = vld [vmem:[%s3917 + $0x48] sm:$0xf]
    %v3937 = vld [vmem:[%s3917 + $0x4c] sm:$0xf]
    %v3938 = vld [vmem:[%s3917 + $0x50] sm:$0xf]
    %v3939 = vld [vmem:[%s3917 + $0x54] sm:$0xf]
    %v3940 = vld [vmem:[%s3917 + $0x58] sm:$0xf]
    %v3941 = vld [vmem:[%s3917 + $0x5c] sm:$0xf]
    %v3942 = vld [vmem:[%s3917 + $0x60] sm:$0xf]
    %v3943 = vld [vmem:[%s3917 + $0x64] sm:$0xf]
    %v3944 = vld [vmem:[%s3917 + $0x68] sm:$0xf]
    %v3945 = vld [vmem:[%s3917 + $0x6c] sm:$0xf]
    %v3946 = vld [vmem:[%s3917 + $0x70] sm:$0xf]
    %v3947 = vld [vmem:[%s3917 + $0x74] sm:$0xf]
    %v3948 = vld [vmem:[%s3917 + $0x78] sm:$0xf]
    %v3949 = vld [vmem:[%s3917 + $0x7c] sm:$0xf]
    %v3982 = vunpack.c.l.b16 %v3918
    %v3983 = vunpack.c.l.b16 %v3919
    %v3984 = vunpack.c.l.b16 %v3920
    %v3985 = vunpack.c.l.b16 %v3921
    %v3986 = vunpack.c.l.b16 %v3922
    %v3987 = vunpack.c.l.b16 %v3923
    %v3988 = vunpack.c.l.b16 %v3924
    %v3989 = vunpack.c.l.b16 %v3925
    %v3990 = vunpack.c.l.b16 %v3926
    %v3991 = vunpack.c.l.b16 %v3927
    %v3992 = vunpack.c.l.b16 %v3928
    %v3993 = vunpack.c.l.b16 %v3929
    %v3994 = vunpack.c.l.b16 %v3930
    %v3995 = vunpack.c.l.b16 %v3931
    %v3996 = vunpack.c.l.b16 %v3932
    %v3997 = vunpack.c.l.b16 %v3933
    %v3998 = vunpack.c.l.b16 %v3934
    %v3999 = vunpack.c.l.b16 %v3935
    %v4000 = vunpack.c.l.b16 %v3936
    %v4001 = vunpack.c.l.b16 %v3937
    %v4002 = vunpack.c.l.b16 %v3938
    %v4003 = vunpack.c.l.b16 %v3939
    %v4004 = vunpack.c.l.b16 %v3940
    %v4005 = vunpack.c.l.b16 %v3941
    %v4006 = vunpack.c.l.b16 %v3942
    %v4007 = vunpack.c.l.b16 %v3943
    %v4008 = vunpack.c.l.b16 %v3944
    %v4009 = vunpack.c.l.b16 %v3945
    %v4010 = vunpack.c.l.b16 %v3946
    %v4011 = vunpack.c.l.b16 %v3947
    %v4012 = vunpack.c.l.b16 %v3948
    %v4013 = vunpack.c.l.b16 %v3949
    %v4014 = vpack.c.b16 %v3983, %v3982
    %v4015 = vpack.c.b16 %v3985, %v3984
    %v4016 = vpack.c.b16 %v3987, %v3986
    %v4017 = vpack.c.b16 %v3989, %v3988
    %v4018 = vpack.c.b16 %v3991, %v3990
    %v4019 = vpack.c.b16 %v3993, %v3992
    %v4020 = vpack.c.b16 %v3995, %v3994
    %v4021 = vpack.c.b16 %v3997, %v3996
    %v4022 = vpack.c.b16 %v3999, %v3998
    %v4023 = vpack.c.b16 %v4001, %v4000
    %v4024 = vpack.c.b16 %v4003, %v4002
    %v4025 = vpack.c.b16 %v4005, %v4004
    %v4026 = vpack.c.b16 %v4007, %v4006
    %v4027 = vpack.c.b16 %v4009, %v4008
    %v4028 = vpack.c.b16 %v4011, %v4010
    %v4029 = vpack.c.b16 %v4013, %v4012
    %4046 = vmatpush.bf16.msra.mxu0 %v4021
    %4047 = vmatpush.bf16.msra.mxu0 %v4020
    %4048 = vmatpush.bf16.msra.mxu0 %v4019
    %4049 = vmatpush.bf16.msra.mxu0 %v4018
    %4050 = vmatpush.bf16.msra.mxu0 %v4017
    %4051 = vmatpush.bf16.msra.mxu0 %v4016
    %4052 = vmatpush.bf16.msra.mxu0 %v4015
    %4053 = vmatpush.bf16.msra.mxu0 %v4014
    %4054 = vmatmul.bf16.gmra.mxu0 %v3554
    %v4055 = vpop.f32.mrf.mxu0
    %v4056 = vadd.f32 0.0, %v4055
    %v4057 = vpop.f32.mrf.mxu0
    %v4058 = vadd.f32 0.0, %v4057
    %4059 = vmatmul.bf16.gmra.mxu0 %v3556
    %v4060 = vpop.f32.mrf.mxu0
    %v4061 = vadd.f32 0.0, %v4060
    %v4062 = vpop.f32.mrf.mxu0
    %v4063 = vadd.f32 0.0, %v4062
    %4064 = vdwg.mxu0
    %4065 = vmatpush.bf16.msra.mxu0 %v4029
    %4066 = vmatpush.bf16.msra.mxu0 %v4028
    %4067 = vmatpush.bf16.msra.mxu0 %v4027
    %4068 = vmatpush.bf16.msra.mxu0 %v4026
    %4069 = vmatpush.bf16.msra.mxu0 %v4025
    %4070 = vmatpush.bf16.msra.mxu0 %v4024
    %4071 = vmatpush.bf16.msra.mxu0 %v4023
    %4072 = vmatpush.bf16.msra.mxu0 %v4022
    %4073 = vmatmul.bf16.gmra.mxu0 %v3555
    %v4074 = vpop.f32.mrf.mxu0
    %v4075 = vadd.f32 %v4056, %v4074
    %v4076 = vpop.f32.mrf.mxu0
    %v4077 = vadd.f32 %v4058, %v4076
    %4078 = vmatmul.bf16.gmra.mxu0 %v3557
    %v4079 = vpop.f32.mrf.mxu0
    %v4080 = vadd.f32 %v4061, %v4079
    %v4081 = vpop.f32.mrf.mxu0
    %v4082 = vadd.f32 %v4063, %v4081
    %4083 = vdwg.mxu0
    %v4116 = vunpack.c.l.b16 %v3885
    %v4117 = vunpack.c.l.b16 %v3886
    %v4118 = vunpack.c.l.b16 %v3887
    %v4119 = vunpack.c.l.b16 %v3888
    %v4120 = vunpack.c.l.b16 %v3889
    %v4121 = vunpack.c.l.b16 %v3890
    %v4122 = vunpack.c.l.b16 %v3891
    %v4123 = vunpack.c.l.b16 %v3892
    %v4124 = vunpack.c.l.b16 %v3893
    %v4125 = vunpack.c.l.b16 %v3894
    %v4126 = vunpack.c.l.b16 %v3895
    %v4127 = vunpack.c.l.b16 %v3896
    %v4128 = vunpack.c.l.b16 %v3897
    %v4129 = vunpack.c.l.b16 %v3898
    %v4130 = vunpack.c.l.b16 %v3899
    %v4131 = vunpack.c.l.b16 %v3900
    %v4132 = vunpack.c.l.b16 %v3901
    %v4133 = vunpack.c.l.b16 %v3902
    %v4134 = vunpack.c.l.b16 %v3903
    %v4135 = vunpack.c.l.b16 %v3904
    %v4136 = vunpack.c.l.b16 %v3905
    %v4137 = vunpack.c.l.b16 %v3906
    %v4138 = vunpack.c.l.b16 %v3907
    %v4139 = vunpack.c.l.b16 %v3908
    %v4140 = vunpack.c.l.b16 %v3909
    %v4141 = vunpack.c.l.b16 %v3910
    %v4142 = vunpack.c.l.b16 %v3911
    %v4143 = vunpack.c.l.b16 %v3912
    %v4144 = vunpack.c.l.b16 %v3913
    %v4145 = vunpack.c.l.b16 %v3914
    %v4146 = vunpack.c.l.b16 %v3915
    %v4147 = vunpack.c.l.b16 %v3916
    %v4148 = vpack.c.b16 %v4117, %v4116
    %v4149 = vpack.c.b16 %v4119, %v4118
    %v4150 = vpack.c.b16 %v4121, %v4120
    %v4151 = vpack.c.b16 %v4123, %v4122
    %v4152 = vpack.c.b16 %v4125, %v4124
    %v4153 = vpack.c.b16 %v4127, %v4126
    %v4154 = vpack.c.b16 %v4129, %v4128
    %v4155 = vpack.c.b16 %v4131, %v4130
    %v4156 = vpack.c.b16 %v4133, %v4132
    %v4157 = vpack.c.b16 %v4135, %v4134
    %v4158 = vpack.c.b16 %v4137, %v4136
    %v4159 = vpack.c.b16 %v4139, %v4138
    %v4160 = vpack.c.b16 %v4141, %v4140
    %v4161 = vpack.c.b16 %v4143, %v4142
    %v4162 = vpack.c.b16 %v4145, %v4144
    %v4163 = vpack.c.b16 %v4147, %v4146
    %4180 = vmatpush.bf16.msra.mxu0 %v4155
    %4181 = vmatpush.bf16.msra.mxu0 %v4154
    %4182 = vmatpush.bf16.msra.mxu0 %v4153
    %4183 = vmatpush.bf16.msra.mxu0 %v4152
    %4184 = vmatpush.bf16.msra.mxu0 %v4151
    %4185 = vmatpush.bf16.msra.mxu0 %v4150
    %4186 = vmatpush.bf16.msra.mxu0 %v4149
    %4187 = vmatpush.bf16.msra.mxu0 %v4148
    %4188 = vmatmul.bf16.gmra.mxu0 %v3554
    %v4189 = vpop.f32.mrf.mxu0
    %v4190 = vadd.f32 %v4075, %v4189
    %v4191 = vpop.f32.mrf.mxu0
    %v4192 = vadd.f32 %v4077, %v4191
    %4193 = vmatmul.bf16.gmra.mxu0 %v3556
    %v4194 = vpop.f32.mrf.mxu0
    %v4195 = vadd.f32 %v4080, %v4194
    %v4196 = vpop.f32.mrf.mxu0
    %v4197 = vadd.f32 %v4082, %v4196
    %4198 = vdwg.mxu0
    %4199 = vmatpush.bf16.msra.mxu0 %v4163
    %4200 = vmatpush.bf16.msra.mxu0 %v4162
    %4201 = vmatpush.bf16.msra.mxu0 %v4161
    %4202 = vmatpush.bf16.msra.mxu0 %v4160
    %4203 = vmatpush.bf16.msra.mxu0 %v4159
    %4204 = vmatpush.bf16.msra.mxu0 %v4158
    %4205 = vmatpush.bf16.msra.mxu0 %v4157
    %4206 = vmatpush.bf16.msra.mxu0 %v4156
    %4207 = vmatmul.bf16.gmra.mxu0 %v3555
    %v4208 = vpop.f32.mrf.mxu0
    %v4209 = vadd.f32 %v4190, %v4208
    %v4210 = vpop.f32.mrf.mxu0
    %v4211 = vadd.f32 %v4192, %v4210
    %4212 = vmatmul.bf16.gmra.mxu0 %v3557
    %v4213 = vpop.f32.mrf.mxu0
    %v4214 = vadd.f32 %v4195, %v4213
    %v4215 = vpop.f32.mrf.mxu0
    %v4216 = vadd.f32 %v4197, %v4215
    %4217 = vdwg.mxu0
    %4218 = vmatpush.bf16.msra.mxu0 %v4155
    %4219 = vmatpush.bf16.msra.mxu0 %v4154
    %4220 = vmatpush.bf16.msra.mxu0 %v4153
    %4221 = vmatpush.bf16.msra.mxu0 %v4152
    %4222 = vmatpush.bf16.msra.mxu0 %v4151
    %4223 = vmatpush.bf16.msra.mxu0 %v4150
    %4224 = vmatpush.bf16.msra.mxu0 %v4149
    %4225 = vmatpush.bf16.msra.mxu0 %v4148
    %4226 = vmatmul.bf16.gmra.mxu0 %v3473
    %v4227 = vpop.f32.mrf.mxu0
    %v4228 = vadd.f32 0.0, %v4227
    %v4229 = vpop.f32.mrf.mxu0
    %v4230 = vadd.f32 0.0, %v4229
    %4231 = vmatmul.bf16.gmra.mxu0 %v3475
    %v4232 = vpop.f32.mrf.mxu0
    %v4233 = vadd.f32 0.0, %v4232
    %v4234 = vpop.f32.mrf.mxu0
    %v4235 = vadd.f32 0.0, %v4234
    %4236 = vdwg.mxu0
    %4237 = vmatpush.bf16.msra.mxu0 %v4163
    %4238 = vmatpush.bf16.msra.mxu0 %v4162
    %4239 = vmatpush.bf16.msra.mxu0 %v4161
    %4240 = vmatpush.bf16.msra.mxu0 %v4160
    %4241 = vmatpush.bf16.msra.mxu0 %v4159
    %4242 = vmatpush.bf16.msra.mxu0 %v4158
    %4243 = vmatpush.bf16.msra.mxu0 %v4157
    %4244 = vmatpush.bf16.msra.mxu0 %v4156
    %4245 = vmatmul.bf16.gmra.mxu0 %v3474
    %v4246 = vpop.f32.mrf.mxu0
    %v4247 = vadd.f32 %v4228, %v4246
    %v4248 = vpop.f32.mrf.mxu0
    %v4249 = vadd.f32 %v4230, %v4248
    %4250 = vmatmul.bf16.gmra.mxu0 %v3476
    %v4251 = vpop.f32.mrf.mxu0
    %v4252 = vadd.f32 %v4233, %v4251
    %v4253 = vpop.f32.mrf.mxu0
    %v4254 = vadd.f32 %v4235, %v4253
    %4255 = vdwg.mxu0
    %v4256 = vadd.f32 %v4209, %v4247
    %v4257 = vadd.f32 %v4211, %v4249
    %v4258 = vadd.f32 %v4214, %v4252
    %v4259 = vadd.f32 %v4216, %v4254
    %v4260 = vadd.f32 %v3880, %v4256
    %v4261 = vadd.f32 %v3881, %v4257
    %v4262 = vadd.f32 %v3882, %v4258
    %v4263 = vadd.f32 %v3883, %v4259
    %s4264 = scalar_lea.vmem %s4, 256
    %v4265 = vld [vmem:[%s4264] sm:$0xf]
    %v4266 = vld [vmem:[%s4264 + $0x4] sm:$0xf]
    %v4267 = vld [vmem:[%s4264 + $0x8] sm:$0xf]
    %v4268 = vld [vmem:[%s4264 + $0xc] sm:$0xf]
    %v4269 = vld [vmem:[%s4264 + $0x10] sm:$0xf]
    %v4270 = vld [vmem:[%s4264 + $0x14] sm:$0xf]
    %v4271 = vld [vmem:[%s4264 + $0x18] sm:$0xf]
    %v4272 = vld [vmem:[%s4264 + $0x1c] sm:$0xf]
    %v4273 = vld [vmem:[%s4264 + $0x20] sm:$0xf]
    %v4274 = vld [vmem:[%s4264 + $0x24] sm:$0xf]
    %v4275 = vld [vmem:[%s4264 + $0x28] sm:$0xf]
    %v4276 = vld [vmem:[%s4264 + $0x2c] sm:$0xf]
    %v4277 = vld [vmem:[%s4264 + $0x30] sm:$0xf]
    %v4278 = vld [vmem:[%s4264 + $0x34] sm:$0xf]
    %v4279 = vld [vmem:[%s4264 + $0x38] sm:$0xf]
    %v4280 = vld [vmem:[%s4264 + $0x3c] sm:$0xf]
    %v4281 = vld [vmem:[%s4264 + $0x40] sm:$0xf]
    %v4282 = vld [vmem:[%s4264 + $0x44] sm:$0xf]
    %v4283 = vld [vmem:[%s4264 + $0x48] sm:$0xf]
    %v4284 = vld [vmem:[%s4264 + $0x4c] sm:$0xf]
    %v4285 = vld [vmem:[%s4264 + $0x50] sm:$0xf]
    %v4286 = vld [vmem:[%s4264 + $0x54] sm:$0xf]
    %v4287 = vld [vmem:[%s4264 + $0x58] sm:$0xf]
    %v4288 = vld [vmem:[%s4264 + $0x5c] sm:$0xf]
    %v4289 = vld [vmem:[%s4264 + $0x60] sm:$0xf]
    %v4290 = vld [vmem:[%s4264 + $0x64] sm:$0xf]
    %v4291 = vld [vmem:[%s4264 + $0x68] sm:$0xf]
    %v4292 = vld [vmem:[%s4264 + $0x6c] sm:$0xf]
    %v4293 = vld [vmem:[%s4264 + $0x70] sm:$0xf]
    %v4294 = vld [vmem:[%s4264 + $0x74] sm:$0xf]
    %v4295 = vld [vmem:[%s4264 + $0x78] sm:$0xf]
    %v4296 = vld [vmem:[%s4264 + $0x7c] sm:$0xf]
    %s4297 = scalar_lea.vmem %s4, 640
    %v4298 = vld [vmem:[%s4297] sm:$0xf]
    %v4299 = vld [vmem:[%s4297 + $0x4] sm:$0xf]
    %v4300 = vld [vmem:[%s4297 + $0x8] sm:$0xf]
    %v4301 = vld [vmem:[%s4297 + $0xc] sm:$0xf]
    %v4302 = vld [vmem:[%s4297 + $0x10] sm:$0xf]
    %v4303 = vld [vmem:[%s4297 + $0x14] sm:$0xf]
    %v4304 = vld [vmem:[%s4297 + $0x18] sm:$0xf]
    %v4305 = vld [vmem:[%s4297 + $0x1c] sm:$0xf]
    %v4306 = vld [vmem:[%s4297 + $0x20] sm:$0xf]
    %v4307 = vld [vmem:[%s4297 + $0x24] sm:$0xf]
    %v4308 = vld [vmem:[%s4297 + $0x28] sm:$0xf]
    %v4309 = vld [vmem:[%s4297 + $0x2c] sm:$0xf]
    %v4310 = vld [vmem:[%s4297 + $0x30] sm:$0xf]
    %v4311 = vld [vmem:[%s4297 + $0x34] sm:$0xf]
    %v4312 = vld [vmem:[%s4297 + $0x38] sm:$0xf]
    %v4313 = vld [vmem:[%s4297 + $0x3c] sm:$0xf]
    %v4314 = vld [vmem:[%s4297 + $0x40] sm:$0xf]
    %v4315 = vld [vmem:[%s4297 + $0x44] sm:$0xf]
    %v4316 = vld [vmem:[%s4297 + $0x48] sm:$0xf]
    %v4317 = vld [vmem:[%s4297 + $0x4c] sm:$0xf]
    %v4318 = vld [vmem:[%s4297 + $0x50] sm:$0xf]
    %v4319 = vld [vmem:[%s4297 + $0x54] sm:$0xf]
    %v4320 = vld [vmem:[%s4297 + $0x58] sm:$0xf]
    %v4321 = vld [vmem:[%s4297 + $0x5c] sm:$0xf]
    %v4322 = vld [vmem:[%s4297 + $0x60] sm:$0xf]
    %v4323 = vld [vmem:[%s4297 + $0x64] sm:$0xf]
    %v4324 = vld [vmem:[%s4297 + $0x68] sm:$0xf]
    %v4325 = vld [vmem:[%s4297 + $0x6c] sm:$0xf]
    %v4326 = vld [vmem:[%s4297 + $0x70] sm:$0xf]
    %v4327 = vld [vmem:[%s4297 + $0x74] sm:$0xf]
    %v4328 = vld [vmem:[%s4297 + $0x78] sm:$0xf]
    %v4329 = vld [vmem:[%s4297 + $0x7c] sm:$0xf]
    %v4362 = vunpack.c.l.b16 %v4298
    %v4363 = vunpack.c.l.b16 %v4299
    %v4364 = vunpack.c.l.b16 %v4300
    %v4365 = vunpack.c.l.b16 %v4301
    %v4366 = vunpack.c.l.b16 %v4302
    %v4367 = vunpack.c.l.b16 %v4303
    %v4368 = vunpack.c.l.b16 %v4304
    %v4369 = vunpack.c.l.b16 %v4305
    %v4370 = vunpack.c.l.b16 %v4306
    %v4371 = vunpack.c.l.b16 %v4307
    %v4372 = vunpack.c.l.b16 %v4308
    %v4373 = vunpack.c.l.b16 %v4309
    %v4374 = vunpack.c.l.b16 %v4310
    %v4375 = vunpack.c.l.b16 %v4311
    %v4376 = vunpack.c.l.b16 %v4312
    %v4377 = vunpack.c.l.b16 %v4313
    %v4378 = vunpack.c.l.b16 %v4314
    %v4379 = vunpack.c.l.b16 %v4315
    %v4380 = vunpack.c.l.b16 %v4316
    %v4381 = vunpack.c.l.b16 %v4317
    %v4382 = vunpack.c.l.b16 %v4318
    %v4383 = vunpack.c.l.b16 %v4319
    %v4384 = vunpack.c.l.b16 %v4320
    %v4385 = vunpack.c.l.b16 %v4321
    %v4386 = vunpack.c.l.b16 %v4322
    %v4387 = vunpack.c.l.b16 %v4323
    %v4388 = vunpack.c.l.b16 %v4324
    %v4389 = vunpack.c.l.b16 %v4325
    %v4390 = vunpack.c.l.b16 %v4326
    %v4391 = vunpack.c.l.b16 %v4327
    %v4392 = vunpack.c.l.b16 %v4328
    %v4393 = vunpack.c.l.b16 %v4329
    %v4394 = vpack.c.b16 %v4363, %v4362
    %v4395 = vpack.c.b16 %v4365, %v4364
    %v4396 = vpack.c.b16 %v4367, %v4366
    %v4397 = vpack.c.b16 %v4369, %v4368
    %v4398 = vpack.c.b16 %v4371, %v4370
    %v4399 = vpack.c.b16 %v4373, %v4372
    %v4400 = vpack.c.b16 %v4375, %v4374
    %v4401 = vpack.c.b16 %v4377, %v4376
    %v4402 = vpack.c.b16 %v4379, %v4378
    %v4403 = vpack.c.b16 %v4381, %v4380
    %v4404 = vpack.c.b16 %v4383, %v4382
    %v4405 = vpack.c.b16 %v4385, %v4384
    %v4406 = vpack.c.b16 %v4387, %v4386
    %v4407 = vpack.c.b16 %v4389, %v4388
    %v4408 = vpack.c.b16 %v4391, %v4390
    %v4409 = vpack.c.b16 %v4393, %v4392
    %4426 = vmatpush.bf16.msra.mxu0 %v4401
    %4427 = vmatpush.bf16.msra.mxu0 %v4400
    %4428 = vmatpush.bf16.msra.mxu0 %v4399
    %4429 = vmatpush.bf16.msra.mxu0 %v4398
    %4430 = vmatpush.bf16.msra.mxu0 %v4397
    %4431 = vmatpush.bf16.msra.mxu0 %v4396
    %4432 = vmatpush.bf16.msra.mxu0 %v4395
    %4433 = vmatpush.bf16.msra.mxu0 %v4394
    %4434 = vmatmul.bf16.gmra.mxu0 %v3554
    %v4435 = vpop.f32.mrf.mxu0
    %v4436 = vadd.f32 0.0, %v4435
    %v4437 = vpop.f32.mrf.mxu0
    %v4438 = vadd.f32 0.0, %v4437
    %4439 = vmatmul.bf16.gmra.mxu0 %v3556
    %v4440 = vpop.f32.mrf.mxu0
    %v4441 = vadd.f32 0.0, %v4440
    %v4442 = vpop.f32.mrf.mxu0
    %v4443 = vadd.f32 0.0, %v4442
    %4444 = vdwg.mxu0
    %4445 = vmatpush.bf16.msra.mxu0 %v4409
    %4446 = vmatpush.bf16.msra.mxu0 %v4408
    %4447 = vmatpush.bf16.msra.mxu0 %v4407
    %4448 = vmatpush.bf16.msra.mxu0 %v4406
    %4449 = vmatpush.bf16.msra.mxu0 %v4405
    %4450 = vmatpush.bf16.msra.mxu0 %v4404
    %4451 = vmatpush.bf16.msra.mxu0 %v4403
    %4452 = vmatpush.bf16.msra.mxu0 %v4402
    %4453 = vmatmul.bf16.gmra.mxu0 %v3555
    %v4454 = vpop.f32.mrf.mxu0
    %v4455 = vadd.f32 %v4436, %v4454
    %v4456 = vpop.f32.mrf.mxu0
    %v4457 = vadd.f32 %v4438, %v4456
    %4458 = vmatmul.bf16.gmra.mxu0 %v3557
    %v4459 = vpop.f32.mrf.mxu0
    %v4460 = vadd.f32 %v4441, %v4459
    %v4461 = vpop.f32.mrf.mxu0
    %v4462 = vadd.f32 %v4443, %v4461
    %4463 = vdwg.mxu0
    %v4496 = vunpack.c.l.b16 %v4265
    %v4497 = vunpack.c.l.b16 %v4266
    %v4498 = vunpack.c.l.b16 %v4267
    %v4499 = vunpack.c.l.b16 %v4268
    %v4500 = vunpack.c.l.b16 %v4269
    %v4501 = vunpack.c.l.b16 %v4270
    %v4502 = vunpack.c.l.b16 %v4271
    %v4503 = vunpack.c.l.b16 %v4272
    %v4504 = vunpack.c.l.b16 %v4273
    %v4505 = vunpack.c.l.b16 %v4274
    %v4506 = vunpack.c.l.b16 %v4275
    %v4507 = vunpack.c.l.b16 %v4276
    %v4508 = vunpack.c.l.b16 %v4277
    %v4509 = vunpack.c.l.b16 %v4278
    %v4510 = vunpack.c.l.b16 %v4279
    %v4511 = vunpack.c.l.b16 %v4280
    %v4512 = vunpack.c.l.b16 %v4281
    %v4513 = vunpack.c.l.b16 %v4282
    %v4514 = vunpack.c.l.b16 %v4283
    %v4515 = vunpack.c.l.b16 %v4284
    %v4516 = vunpack.c.l.b16 %v4285
    %v4517 = vunpack.c.l.b16 %v4286
    %v4518 = vunpack.c.l.b16 %v4287
    %v4519 = vunpack.c.l.b16 %v4288
    %v4520 = vunpack.c.l.b16 %v4289
    %v4521 = vunpack.c.l.b16 %v4290
    %v4522 = vunpack.c.l.b16 %v4291
    %v4523 = vunpack.c.l.b16 %v4292
    %v4524 = vunpack.c.l.b16 %v4293
    %v4525 = vunpack.c.l.b16 %v4294
    %v4526 = vunpack.c.l.b16 %v4295
    %v4527 = vunpack.c.l.b16 %v4296
    %v4528 = vpack.c.b16 %v4497, %v4496
    %v4529 = vpack.c.b16 %v4499, %v4498
    %v4530 = vpack.c.b16 %v4501, %v4500
    %v4531 = vpack.c.b16 %v4503, %v4502
    %v4532 = vpack.c.b16 %v4505, %v4504
    %v4533 = vpack.c.b16 %v4507, %v4506
    %v4534 = vpack.c.b16 %v4509, %v4508
    %v4535 = vpack.c.b16 %v4511, %v4510
    %v4536 = vpack.c.b16 %v4513, %v4512
    %v4537 = vpack.c.b16 %v4515, %v4514
    %v4538 = vpack.c.b16 %v4517, %v4516
    %v4539 = vpack.c.b16 %v4519, %v4518
    %v4540 = vpack.c.b16 %v4521, %v4520
    %v4541 = vpack.c.b16 %v4523, %v4522
    %v4542 = vpack.c.b16 %v4525, %v4524
    %v4543 = vpack.c.b16 %v4527, %v4526
    %4560 = vmatpush.bf16.msra.mxu0 %v4535
    %4561 = vmatpush.bf16.msra.mxu0 %v4534
    %4562 = vmatpush.bf16.msra.mxu0 %v4533
    %4563 = vmatpush.bf16.msra.mxu0 %v4532
    %4564 = vmatpush.bf16.msra.mxu0 %v4531
    %4565 = vmatpush.bf16.msra.mxu0 %v4530
    %4566 = vmatpush.bf16.msra.mxu0 %v4529
    %4567 = vmatpush.bf16.msra.mxu0 %v4528
    %4568 = vmatmul.bf16.gmra.mxu0 %v3554
    %v4569 = vpop.f32.mrf.mxu0
    %v4570 = vadd.f32 %v4455, %v4569
    %v4571 = vpop.f32.mrf.mxu0
    %v4572 = vadd.f32 %v4457, %v4571
    %4573 = vmatmul.bf16.gmra.mxu0 %v3556
    %v4574 = vpop.f32.mrf.mxu0
    %v4575 = vadd.f32 %v4460, %v4574
    %v4576 = vpop.f32.mrf.mxu0
    %v4577 = vadd.f32 %v4462, %v4576
    %4578 = vdwg.mxu0
    %4579 = vmatpush.bf16.msra.mxu0 %v4543
    %4580 = vmatpush.bf16.msra.mxu0 %v4542
    %4581 = vmatpush.bf16.msra.mxu0 %v4541
    %4582 = vmatpush.bf16.msra.mxu0 %v4540
    %4583 = vmatpush.bf16.msra.mxu0 %v4539
    %4584 = vmatpush.bf16.msra.mxu0 %v4538
    %4585 = vmatpush.bf16.msra.mxu0 %v4537
    %4586 = vmatpush.bf16.msra.mxu0 %v4536
    %4587 = vmatmul.bf16.gmra.mxu0 %v3555
    %v4588 = vpop.f32.mrf.mxu0
    %v4589 = vadd.f32 %v4570, %v4588
    %v4590 = vpop.f32.mrf.mxu0
    %v4591 = vadd.f32 %v4572, %v4590
    %4592 = vmatmul.bf16.gmra.mxu0 %v3557
    %v4593 = vpop.f32.mrf.mxu0
    %v4594 = vadd.f32 %v4575, %v4593
    %v4595 = vpop.f32.mrf.mxu0
    %v4596 = vadd.f32 %v4577, %v4595
    %4597 = vdwg.mxu0
    %4598 = vmatpush.bf16.msra.mxu0 %v4535
    %4599 = vmatpush.bf16.msra.mxu0 %v4534
    %4600 = vmatpush.bf16.msra.mxu0 %v4533
    %4601 = vmatpush.bf16.msra.mxu0 %v4532
    %4602 = vmatpush.bf16.msra.mxu0 %v4531
    %4603 = vmatpush.bf16.msra.mxu0 %v4530
    %4604 = vmatpush.bf16.msra.mxu0 %v4529
    %4605 = vmatpush.bf16.msra.mxu0 %v4528
    %4606 = vmatmul.bf16.gmra.mxu0 %v3473
    %v4607 = vpop.f32.mrf.mxu0
    %v4608 = vadd.f32 0.0, %v4607
    %v4609 = vpop.f32.mrf.mxu0
    %v4610 = vadd.f32 0.0, %v4609
    %4611 = vmatmul.bf16.gmra.mxu0 %v3475
    %v4612 = vpop.f32.mrf.mxu0
    %v4613 = vadd.f32 0.0, %v4612
    %v4614 = vpop.f32.mrf.mxu0
    %v4615 = vadd.f32 0.0, %v4614
    %4616 = vdwg.mxu0
    %4617 = vmatpush.bf16.msra.mxu0 %v4543
    %4618 = vmatpush.bf16.msra.mxu0 %v4542
    %4619 = vmatpush.bf16.msra.mxu0 %v4541
    %4620 = vmatpush.bf16.msra.mxu0 %v4540
    %4621 = vmatpush.bf16.msra.mxu0 %v4539
    %4622 = vmatpush.bf16.msra.mxu0 %v4538
    %4623 = vmatpush.bf16.msra.mxu0 %v4537
    %4624 = vmatpush.bf16.msra.mxu0 %v4536
    %4625 = vmatmul.bf16.gmra.mxu0 %v3474
    %v4626 = vpop.f32.mrf.mxu0
    %v4627 = vadd.f32 %v4608, %v4626
    %v4628 = vpop.f32.mrf.mxu0
    %v4629 = vadd.f32 %v4610, %v4628
    %4630 = vmatmul.bf16.gmra.mxu0 %v3476
    %v4631 = vpop.f32.mrf.mxu0
    %v4632 = vadd.f32 %v4613, %v4631
    %v4633 = vpop.f32.mrf.mxu0
    %v4634 = vadd.f32 %v4615, %v4633
    %4635 = vdwg.mxu0
    %v4636 = vadd.f32 %v4589, %v4627
    %v4637 = vadd.f32 %v4591, %v4629
    %v4638 = vadd.f32 %v4594, %v4632
    %v4639 = vadd.f32 %v4596, %v4634
    %v4640 = vrot.slane %v4636, 1
    %v4641 = vrot.slane %v4637, 1
    %v4642 = vrot.slane %v4638, 1
    %v4643 = vrot.slane %v4639, 1
    %v4644 = vsel %vm824, %v4642, %v4643
    %v4645 = vsel %vm824, %v4641, %v4642
    %v4646 = vsel %vm824, %v4640, %v4641
    %v4647 = vsel %vm824, %v4643, %v4640
    %v4648 = vsel %vm812, 0.0, %v4646
    %v4649 = vsel %vm813, 0.0, %v4645
    %v4650 = vsel %vm814, 0.0, %v4644
    %v4651 = vsel %vm815, 0.0, %v4647
    %v4652 = vadd.f32 %v4260, %v4648
    %v4653 = vadd.f32 %v4261, %v4649
    %v4654 = vadd.f32 %v4262, %v4650
    %v4655 = vadd.f32 %v4263, %v4651
    %v4656 = vadd.f32 %v2373, %v4652
    %v4657 = vadd.f32 %v2374, %v4653
    %v4658 = vadd.f32 %v2422, %v4654
    %v4659 = vadd.f32 %v2423, %v4655
    %v4660 = vsel %vm107, %v4656, 0.0
    %v4661 = vsel %vm107, %v4657, 0.0
    %v4662 = vadd.f32 %v4660, %v4661
    %4663 = vadd.xlane.f32.xlu0 %v4662
    %v4664 = vpop.xlane.xlu0 %4663
    %v4665 = vrot.slane %v4664, 4
    %v4666 = vadd.f32 %v4664, %v4665
    %v4667 = vrot.slane %v4666, 2
    %v4668 = vadd.f32 %v4666, %v4667
    %v4669 = vrot.slane %v4668, 1
    %v4670 = vadd.f32 %v4668, %v4669
    %s4671 = vtos %v4670
    %s4672 = smul.f32 %s4671, 0.0009765625
    %v4673 = vmul.f32 %v4656, %v4656
    %v4674 = vmul.f32 %v4657, %v4657
    %v4675 = vsel %vm107, %v4673, 0.0
    %v4676 = vsel %vm107, %v4674, 0.0
    %v4677 = vadd.f32 %v4675, %v4676
    %4678 = vadd.xlane.f32.xlu0 %v4677
    %v4679 = vpop.xlane.xlu0 %4678
    %v4680 = vrot.slane %v4679, 4
    %v4681 = vadd.f32 %v4679, %v4680
    %v4682 = vrot.slane %v4681, 2
    %v4683 = vadd.f32 %v4681, %v4682
    %v4684 = vrot.slane %v4683, 1
    %v4685 = vadd.f32 %v4683, %v4684
    %s4686 = vtos %v4685
    %s4687 = smul.f32 %s4686, 0.0009765625
    %s4688 = smul.f32 %s4672, %s4672
    %s4689 = ssub.f32 %s4687, %s4688
    %v4690 = vstv %s4672
    %v4691 = vsub.f32 %v4656, %v4690
    %v4692 = vsub.f32 %v4657, %v4690
    %s4693 = sadd.f32 %s4689, 1e-05
    %v4694 = vstv %s4693
    %v4695 = vrsqrt.pop %v4694
    %v4696 = vmul.f32 %v4695, %v4694
    %v4697 = vmul.f32 %v4696, %v4695
    %v4698 = vmul.f32 0.5, %v4697
    %v4699 = vsub.f32 1.5, %v4698
    %v4700 = vmul.f32 %v4695, %v4699
    %vm4701 = vweird.f32 %v4694
    %vm4702 = vweird.f32 %v4695
    %vm4703 = vmor %vm4701, %vm4702
    %v4704 = vsel %vm4703, %v4695, %v4700
    %s4705 = vtos %v4704
    %v4706 = vstv %s4705
    %v4707 = vmul.f32 %v4691, %v4706
    %v4708 = vmul.f32 %v4692, %v4706
    %v4709 = vsel %vm107, %v4658, 0.0
    %v4710 = vsel %vm107, %v4659, 0.0
    %v4711 = vadd.f32 %v4709, %v4710
    %4712 = vadd.xlane.f32.xlu0 %v4711
    %v4713 = vpop.xlane.xlu0 %4712
    %v4714 = vrot.slane %v4713, 4
    %v4715 = vadd.f32 %v4713, %v4714
    %v4716 = vrot.slane %v4715, 2
    %v4717 = vadd.f32 %v4715, %v4716
    %v4718 = vrot.slane %v4717, 1
    %v4719 = vadd.f32 %v4717, %v4718
    %s4720 = vtos %v4719
    %s4721 = smul.f32 %s4720, 0.0009765625
    %v4722 = vmul.f32 %v4658, %v4658
    %v4723 = vmul.f32 %v4659, %v4659
    %v4724 = vsel %vm107, %v4722, 0.0
    %v4725 = vsel %vm107, %v4723, 0.0
    %v4726 = vadd.f32 %v4724, %v4725
    %4727 = vadd.xlane.f32.xlu0 %v4726
    %v4728 = vpop.xlane.xlu0 %4727
    %v4729 = vrot.slane %v4728, 4
    %v4730 = vadd.f32 %v4728, %v4729
    %v4731 = vrot.slane %v4730, 2
    %v4732 = vadd.f32 %v4730, %v4731
    %v4733 = vrot.slane %v4732, 1
    %v4734 = vadd.f32 %v4732, %v4733
    %s4735 = vtos %v4734
    %s4736 = smul.f32 %s4735, 0.0009765625
    %s4737 = smul.f32 %s4721, %s4721
    %s4738 = ssub.f32 %s4736, %s4737
    %v4739 = vstv %s4721
    %v4740 = vsub.f32 %v4658, %v4739
    %v4741 = vsub.f32 %v4659, %v4739
    %s4742 = sadd.f32 %s4738, 1e-05
    %v4743 = vstv %s4742
    %v4744 = vrsqrt.pop %v4743
    %v4745 = vmul.f32 %v4744, %v4743
    %v4746 = vmul.f32 %v4745, %v4744
    %v4747 = vmul.f32 0.5, %v4746
    %v4748 = vsub.f32 1.5, %v4747
    %v4749 = vmul.f32 %v4744, %v4748
    %vm4750 = vweird.f32 %v4743
    %vm4751 = vweird.f32 %v4744
    %vm4752 = vmor %vm4750, %vm4751
    %v4753 = vsel %vm4752, %v4744, %v4749
    %s4754 = vtos %v4753
    %v4755 = vstv %s4754
    %v4756 = vmul.f32 %v4740, %v4755
    %v4757 = vmul.f32 %v4741, %v4755
    %4758 = vst.msk [vmem:[#allocation2] sm:$0xff] %vm107, %v4707
    %4759 = vst.msk [vmem:[#allocation2 + $0x8] sm:$0xff] %vm107, %v4708
    %4760 = vst.msk [vmem:[#allocation2 + $0x10] sm:$0xff] %vm107, %v4756
    %4761 = vst.msk [vmem:[#allocation2 + $0x18] sm:$0xff] %vm107, %v4757
    // Predicated region
    $region22: #{tpu_custom_call.1} parent=1 // pred_check
      _
    $region23: #{tpu_custom_call.1} parent=1 // pred_check_branch
      %4763 = sbr.rel (0) target = $region25
    $region24: #{tpu_custom_call.1} parent=1 // pred_region
      %4765 = vsyncadd [#allocation3], 0
      %s4766 = sshll.u32 [#allocation2], 4
      %s4767 = int_to_ptr.vmem [resolvable:$true] %s4766
      %s4768 = sshll.u32 %s5, 4
      %s4769 = int_to_ptr.hbm [resolvable:$true] %s4768
      %4774 = dma.vmem_to_hbm [thread:$0]  %s4767, 512, %s4769, [#allocation3], 128, 128, 8
    $region25: #{tpu_custom_call.1} parent=1 // pred_fallthru
      _
    // Predicated region
    $region26: #{tpu_custom_call.1} parent=1 // pred_check
      _
    $region27: #{tpu_custom_call.1} parent=1 // pred_check_branch
      %4776 = sbr.rel (0) target = $region29
    $region28: #{tpu_custom_call.1} parent=1 // pred_region
      %4778 = dma.done [#allocation3], 512
    $region29: #{tpu_custom_call.1} parent=1 // pred_fallthru
      _
    %4779 = vsyncpa [#allocation3], 1

</llo_original>
